<compile_context>
chip_gen: v7x
topology: tpu7x:2x2x1
jax: 0.10.0
libtpu: 0.0.40
codegen_flags: <defaults>
</compile_context>

<pallas_src>
from functools import partial

import numpy as np
import jax
import jax.numpy as jnp
from jax import lax
from jax.experimental import pallas as pl
from jax.experimental.pallas import tpu as pltpu

ALPHA = 0.2        # SE3() default distance weighting in lie_transformer_pytorch
_UNROLL_MAX = 64   # statically unroll in-kernel loops up to this trip count


def _loop(n_iters, body, init):
    """Python-unroll short loops (gives the scheduler full visibility), fori_loop otherwise."""
    if n_iters <= _UNROLL_MAX:
        carry = init
        for i in range(n_iters):
            carry = body(i, carry)
        return carry
    return lax.fori_loop(0, n_iters, body, init)


def _fps_kernel(start_ref, mask_ref,          # scalar prefetch (SMEM): (B,) i32, (B,N) i32
                *refs, n, m, has_edges):
    if has_edges:
        (dists_ref, abq_ref, vals_ref, edg_ref,
         out_abq_ref, out_vals_ref, out_mask_ref, out_qidx_ref, out_edg_ref,
         idx_scr, msk_scr, h_abq, ht_abq, h_edg, ht_edg) = refs
    else:
        (dists_ref, abq_ref, vals_ref,
         out_abq_ref, out_vals_ref, out_mask_ref, out_qidx_ref,
         idx_scr, msk_scr, h_abq, ht_abq) = refs
        edg_ref = out_edg_ref = h_edg = ht_edg = None

    b = pl.program_id(0)
    lane_n = lax.broadcasted_iota(jnp.int32, (1, n), 1)
    lane_m = lax.broadcasted_iota(jnp.int32, (1, m), 1)

    # ---------------- farthest point sampling: slim latency-bound loop ----------------
    def fps_body(i, carry):
        far, dist = carry
        idx_scr[i] = far                                  # SMEM scalar record
        msk_scr[i] = mask_ref[b, far]                     # mask[farthest] as SMEM scalar read
        row = dists_ref[0, pl.ds(far, 1), :]              # (1, n); -100 mask fill precomputed
        dist = jnp.minimum(dist, row)
        mx = jnp.max(dist, axis=-1, keepdims=True)
        cand = jnp.where(dist >= mx, lane_n, jnp.int32(n))
        far = jnp.min(cand).astype(jnp.int32)             # first index attaining the max
        return far, dist

    dist0 = jnp.full((1, n), 1e8, dtype=jnp.float32)
    _loop(m, fps_body, (start_ref[b], dist0))

    # ---------------- gather phase (off the FPS critical path) ----------------
    # stage 1: row gather A[q[i], :, :] into channel-separated, lane-dense scratch
    def gather_rows(i, carry):
        qvec, mvec = carry
        r = idx_scr[i]
        qvec = jnp.where(lane_m == i, r, qvec)
        mvec = jnp.where(lane_m == i, msk_scr[i], mvec)
        out_vals_ref[0, pl.ds(i, 1), :] = vals_ref[0, pl.ds(r, 1), :]
        h_abq[:, pl.ds(i, 1), :] = abq_ref[0, :, pl.ds(r, 1), :]       # (d, 1, N)
        if has_edges:
            h_edg[:, pl.ds(i, 1), :] = edg_ref[0, :, pl.ds(r, 1), :]   # (e, 1, N)
        return qvec, mvec

    qvec, mvec = _loop(m, gather_rows,
                       (jnp.zeros((1, m), jnp.int32), jnp.zeros((1, m), jnp.int32)))
    out_qidx_ref[0] = qvec
    out_mask_ref[0] = mvec

    # per-channel 2-D transposes (XLU) so the remaining gather index is a sublane axis
    for ch in range(h_abq.shape[0]):
        ht_abq[ch, :, :] = jnp.transpose(h_abq[ch, :, :], (1, 0))
    if has_edges:
        for ch in range(h_edg.shape[0]):
            ht_edg[ch, :, :] = jnp.transpose(h_edg[ch, :, :], (1, 0))

    # stage 2: column gather via dynamic sublane slices of the transposed scratch
    def gather_cols(y, carry):
        r = idx_scr[y]
        out_abq_ref[0, :, pl.ds(y, 1), :] = ht_abq[:, pl.ds(r, 1), :]      # (d, 1, m)
        if has_edges:
            out_edg_ref[0, :, pl.ds(y, 1), :] = ht_edg[:, pl.ds(r, 1), :]  # (e, 1, m)
        return carry

    _loop(m, gather_cols, 0)


def initial_farthest(key, mask, n):
    """Replicates the torch.randint start-index selection of FPSindices (host glue)."""
    bs = mask.shape[0]
    a = jax.random.randint(key, (bs,), 0, n)
    num_valid = jnp.sum(mask.astype(jnp.int32), axis=-1)
    k = a % num_valid
    cum = jnp.cumsum(mask.astype(jnp.int32), axis=-1)
    return jnp.argmax((cum == (k[:, None] + 1)) & mask, axis=-1).astype(jnp.int32)


def fps_subsample(abq_pairs, vals, mask, edges, ds_frac, start_idx):
    """Pallas implementation of FPSsubsample.forward (withquery=True)."""
    if ds_frac == 1:
        return abq_pairs, vals, mask, edges, None

    bs, n = mask.shape
    m = int(round(ds_frac * n))
    d = abq_pairs.shape[-1]
    c = vals.shape[-1]
    has_edges = edges is not None

    # --- host-side (XLA) prep: SE3 distance + column mask fill, computed once in f32 ---
    abq32 = abq_pairs.astype(jnp.float32)
    d_rot = jnp.sqrt(jnp.sum(abq32[..., 0:3] * abq32[..., 0:3], axis=-1))
    d_trn = jnp.sqrt(jnp.sum(abq32[..., 3:] * abq32[..., 3:], axis=-1))
    dists = ALPHA * d_rot + (1.0 - ALPHA) * d_trn
    dists = jnp.where(mask[:, None, :], dists, jnp.float32(-100.0))     # (B, N, N) f32

    # channel-separated, lane-dense layouts; keep original dtype for the gather path
    abq_k = jnp.transpose(abq_pairs, (0, 3, 1, 2))                       # (B, d, Ni, Nj)
    mask_i = mask.astype(jnp.int32)                                      # (B, N) scalar prefetch
    start_i = start_idx.astype(jnp.int32)                                # (B,)  scalar prefetch

    inputs = [dists, abq_k, vals]
    in_specs = [
        pl.BlockSpec((1, n, n), lambda b, s, mk: (b, 0, 0)),
        pl.BlockSpec((1, d, n, n), lambda b, s, mk: (b, 0, 0, 0)),
        pl.BlockSpec((1, n, c), lambda b, s, mk: (b, 0, 0)),
    ]
    out_shape = [
        jax.ShapeDtypeStruct((bs, d, m, m), abq_pairs.dtype),
        jax.ShapeDtypeStruct((bs, m, c), vals.dtype),
        jax.ShapeDtypeStruct((bs, 1, m), jnp.int32),
        jax.ShapeDtypeStruct((bs, 1, m), jnp.int32),
    ]
    out_specs = [
        pl.BlockSpec((1, d, m, m), lambda b, s, mk: (b, 0, 0, 0)),
        pl.BlockSpec((1, m, c), lambda b, s, mk: (b, 0, 0)),
        pl.BlockSpec((1, 1, m), lambda b, s, mk: (b, 0, 0)),
        pl.BlockSpec((1, 1, m), lambda b, s, mk: (b, 0, 0)),
    ]
    scratch_shapes = [
        pltpu.SMEM((m,), jnp.int32),                 # chosen indices
        pltpu.SMEM((m,), jnp.int32),                 # mask[chosen]
        pltpu.VMEM((d, m, n), abq_pairs.dtype),      # row-gathered abq (lane = N)
        pltpu.VMEM((d, n, m), abq_pairs.dtype),      # transposed      (lane = M)
    ]
    if has_edges:
        e = edges.shape[-1]
        edges_k = jnp.transpose(edges, (0, 3, 1, 2))                     # (B, e, Ni, Nj)
        inputs.append(edges_k)
        in_specs.append(pl.BlockSpec((1, e, n, n), lambda b, s, mk: (b, 0, 0, 0)))
        out_shape.append(jax.ShapeDtypeStruct((bs, e, m, m), edges.dtype))
        out_specs.append(pl.BlockSpec((1, e, m, m), lambda b, s, mk: (b, 0, 0, 0)))
        scratch_shapes += [pltpu.VMEM((e, m, n), edges.dtype),
                           pltpu.VMEM((e, n, m), edges.dtype)]

    kernel = partial(_fps_kernel, n=n, m=m, has_edges=has_edges)
    outs = pl.pallas_call(
        kernel,
        out_shape=tuple(out_shape),
        grid_spec=pltpu.PrefetchScalarGridSpec(
            num_scalar_prefetch=2,
            grid=(bs,),
            in_specs=in_specs,
            out_specs=tuple(out_specs),
            scratch_shapes=scratch_shapes),
        compiler_params=pltpu.CompilerParams(
            dimension_semantics=("parallel",),          # batch steps independent -> megacore
            vmem_limit_bytes=64 * 1024 * 1024),
    )(start_i, mask_i, *inputs)

    if has_edges:
        out_abq_k, sub_vals, sub_mask, qidx, out_edg_k = outs
        sub_edges = jnp.transpose(out_edg_k, (0, 2, 3, 1))
    else:
        out_abq_k, sub_vals, sub_mask, qidx = outs
        sub_edges = None

    sub_abq = jnp.transpose(out_abq_k, (0, 2, 3, 1))
    sub_mask = sub_mask.reshape(bs, m).astype(bool)
    qidx = qidx.reshape(bs, m)
    return sub_abq, sub_vals, sub_mask, sub_edges, qidx


# ------------------------- pure NumPy reference (PyTorch semantics) ------------------------- #
def reference_forward(abq, vals, mask, edges, start, ds_frac, alpha=ALPHA):
    bs, n = mask.shape
    m = int(round(ds_frac * n))
    d_rot = np.sqrt(np.sum(abq[..., :3] * abq[..., :3], axis=-1))
    d_trn = np.sqrt(np.sum(abq[..., 3:] * abq[..., 3:], axis=-1))
    dists = np.float32(alpha) * d_rot + np.float32(1.0 - alpha) * d_trn
    chosen = np.zeros((bs, m), dtype=np.int64)
    distances = np.full((bs, n), 1e8, dtype=np.float32)
    farthest = start.astype(np.int64)
    B = np.arange(bs)
    for i in range(m):
        chosen[:, i] = farthest
        dist = dists[B, farthest].copy()
        dist[~mask] = -100.0
        closer = dist < distances
        distances[closer] = dist[closer]
        farthest = distances.argmax(-1)
    Bc = B[:, None]
    sub_abq = abq[Bc, chosen][Bc, :, chosen]
    sub_vals = vals[Bc, chosen]
    sub_mask = mask[Bc, chosen]
    sub_edges = edges[Bc, chosen][Bc, :, chosen]
    return sub_abq, sub_vals, sub_mask, sub_edges, chosen


if __name__ == "__main__":
    key = jax.random.PRNGKey(0)
    k1, k2, k3, k4 = jax.random.split(key, 4)

    bs, n, c, e = 2, 16, 8, 4
    ds_frac = 0.5

    abq = jax.random.normal(k1, (bs, n, n, 6), jnp.float32)
    vals = jax.random.normal(k2, (bs, n, c), jnp.float32)
    edges = jax.random.normal(k3, (bs, n, n, e), jnp.float32)
    mask = jnp.ones((bs, n), dtype=bool).at[1, -2:].set(False)

    # TODO(synk): the `cache=True` index-caching branch is host-side state, not kernel work.
    start = initial_farthest(k4, mask, n)   # host glue replicating torch.randint start pick

    outs = jax.block_until_ready(fps_subsample(abq, vals, mask, edges, ds_frac, start))
    sub_abq, sub_vals, sub_mask, sub_edges, qidx = outs

    r_abq, r_vals, r_mask, r_edges, r_idx = reference_forward(
        np.asarray(abq), np.asarray(vals), np.asarray(mask),
        np.asarray(edges), np.asarray(start), ds_frac)

    assert np.array_equal(np.asarray(qidx), r_idx), "query indices mismatch"
    assert np.array_equal(np.asarray(sub_mask), r_mask), "mask mismatch"
    assert np.allclose(np.asarray(sub_abq), r_abq, atol=1e-6), "abq mismatch"
    assert np.allclose(np.asarray(sub_vals), r_vals, atol=1e-6), "vals mismatch"
    assert np.allclose(np.asarray(sub_edges), r_edges, atol=1e-6), "edges mismatch"

    # edges=None variant exercises the kernel compiled without the edges path
    outs2 = jax.block_until_ready(fps_subsample(abq, vals, mask, None, ds_frac, start))
    sub_abq2, sub_vals2, sub_mask2, sub_edges2, qidx2 = outs2
    assert sub_edges2 is None
    assert np.array_equal(np.asarray(qidx2), r_idx), "query indices mismatch (no edges)"
    assert np.array_equal(np.asarray(sub_mask2), r_mask), "mask mismatch (no edges)"
    assert np.allclose(np.asarray(sub_abq2), r_abq, atol=1e-6), "abq mismatch (no edges)"
    assert np.allclose(np.asarray(sub_vals2), r_vals, atol=1e-6), "vals mismatch (no edges)"

    print("KERNEL_OK")
</pallas_src>

<mosaic_0001>
module attributes {stable_mosaic.version = 11 : i64} {
  func.func @_fps_kernel(%arg0: i32, %arg1: memref<2xi32, #tpu.memory_space<smem>>, %arg2: memref<2x16xi32, #tpu.memory_space<smem>>, %arg3: memref<1x16x16xf32, #tpu.memory_space<vmem>>, %arg4: memref<1x6x16x16xf32, #tpu.memory_space<vmem>>, %arg5: memref<1x16x8xf32, #tpu.memory_space<vmem>>, %arg6: memref<1x4x16x16xf32, #tpu.memory_space<vmem>>, %arg7: memref<1x6x8x8xf32, #tpu.memory_space<vmem>>, %arg8: memref<1x8x8xf32, #tpu.memory_space<vmem>>, %arg9: memref<1x1x8xi32, #tpu.memory_space<vmem>>, %arg10: memref<1x1x8xi32, #tpu.memory_space<vmem>>, %arg11: memref<1x4x8x8xf32, #tpu.memory_space<vmem>>, %arg12: memref<8xi32, #tpu.memory_space<smem>>, %arg13: memref<8xi32, #tpu.memory_space<smem>>, %arg14: memref<6x8x16xf32, #tpu.memory_space<vmem>>, %arg15: memref<6x16x8xf32, #tpu.memory_space<vmem>>, %arg16: memref<4x8x16xf32, #tpu.memory_space<vmem>>, %arg17: memref<4x16x8xf32, #tpu.memory_space<vmem>>) attributes {dimension_semantics = [#tpu.dimension_semantics<parallel>], iteration_bounds = array<i64: 2>, scalar_prefetch = 2 : i64, scratch_operands = 6 : i64, tpu.core_type = #tpu.core_type<tc>, window_params = [{transform_indices = @transform_0, window_bounds = array<i64: 1, 16, 16>}, {transform_indices = @transform_1, window_bounds = array<i64: 1, 6, 16, 16>}, {transform_indices = @transform_2, window_bounds = array<i64: 1, 16, 8>}, {transform_indices = @transform_3, window_bounds = array<i64: 1, 4, 16, 16>}, {transform_indices = @transform_4, window_bounds = array<i64: 1, 6, 8, 8>}, {transform_indices = @transform_5, window_bounds = array<i64: 1, 8, 8>}, {transform_indices = @transform_6, window_bounds = array<i64: 1, 1, 8>}, {transform_indices = @transform_7, window_bounds = array<i64: 1, 1, 8>}, {transform_indices = @transform_8, window_bounds = array<i64: 1, 4, 8, 8>}]} {
    %0 = tpu.iota {dimensions = array<i32: 1>} : vector<1x16xi32>
    %1 = tpu.iota {dimensions = array<i32: 1>} : vector<1x8xi32>
    %cst = arith.constant 1.000000e+08 : f32
    %2 = vector.broadcast %cst : f32 to vector<1x16xf32>
    %3 = arith.index_cast %arg0 : i32 to index
    %4 = memref.load %arg1[%3] : memref<2xi32, #tpu.memory_space<smem>>
    %c0 = arith.constant 0 : index
    %5 = memref.load %arg12[%c0] : memref<8xi32, #tpu.memory_space<smem>>
    memref.store %4, %arg12[%c0] : memref<8xi32, #tpu.memory_space<smem>>
    %6 = arith.index_cast %arg0 : i32 to index
    %7 = arith.index_cast %4 : i32 to index
    %8 = memref.load %arg2[%6, %7] : memref<2x16xi32, #tpu.memory_space<smem>>
    %c0_0 = arith.constant 0 : index
    %9 = memref.load %arg13[%c0_0] : memref<8xi32, #tpu.memory_space<smem>>
    memref.store %8, %arg13[%c0_0] : memref<8xi32, #tpu.memory_space<smem>>
    %c0_1 = arith.constant 0 : index
    %10 = arith.index_cast %4 : i32 to index
    %c0_2 = arith.constant 0 : index
    %11 = vector.load %arg3[%c0_1, %10, %c0_2] : memref<1x16x16xf32, #tpu.memory_space<vmem>>, vector<1x1x16xf32>
    %12 = vector.shape_cast %11 : vector<1x1x16xf32> to vector<1x16xf32>
    %13 = arith.minimumf %2, %12 : vector<1x16xf32>
    %cst_3 = arith.constant dense<0xFF800000> : vector<1xf32>
    %14 = vector.multi_reduction <maximumf>, %13, %cst_3 [1] : vector<1x16xf32> to vector<1xf32>
    %15 = vector.shape_cast %14 : vector<1xf32> to vector<1x1xf32>
    %16 = vector.broadcast %15 : vector<1x1xf32> to vector<1x16xf32>
    %17 = arith.cmpf oge, %13, %16 : vector<1x16xf32>
    %c16_i32 = arith.constant 16 : i32
    %18 = vector.broadcast %c16_i32 : i32 to vector<1x16xi32>
    %19 = arith.select %17, %0, %18 : vector<1x16xi1>, vector<1x16xi32>
    %20 = vector.shape_cast %19 : vector<1x16xi32> to vector<1x1x16xi32>
    %cst_4 = arith.constant dense<2147483647> : vector<1xi32>
    %21 = vector.multi_reduction <minsi>, %20, %cst_4 [1, 2] : vector<1x1x16xi32> to vector<1xi32>
    %22 = vector.shape_cast %21 : vector<1xi32> to vector<1x1x1xi32>
    %23 = vector.extract %22[0, 0, 0] : i32 from vector<1x1x1xi32>
    %c1 = arith.constant 1 : index
    %24 = memref.load %arg12[%c1] : memref<8xi32, #tpu.memory_space<smem>>
    memref.store %23, %arg12[%c1] : memref<8xi32, #tpu.memory_space<smem>>
    %25 = arith.index_cast %arg0 : i32 to index
    %26 = arith.index_cast %23 : i32 to index
    %27 = memref.load %arg2[%25, %26] : memref<2x16xi32, #tpu.memory_space<smem>>
    %c1_5 = arith.constant 1 : index
    %28 = memref.load %arg13[%c1_5] : memref<8xi32, #tpu.memory_space<smem>>
    memref.store %27, %arg13[%c1_5] : memref<8xi32, #tpu.memory_space<smem>>
    %c0_6 = arith.constant 0 : index
    %29 = arith.index_cast %23 : i32 to index
    %c0_7 = arith.constant 0 : index
    %30 = vector.load %arg3[%c0_6, %29, %c0_7] : memref<1x16x16xf32, #tpu.memory_space<vmem>>, vector<1x1x16xf32>
    %31 = vector.shape_cast %30 : vector<1x1x16xf32> to vector<1x16xf32>
    %32 = arith.minimumf %13, %31 : vector<1x16xf32>
    %cst_8 = arith.constant dense<0xFF800000> : vector<1xf32>
    %33 = vector.multi_reduction <maximumf>, %32, %cst_8 [1] : vector<1x16xf32> to vector<1xf32>
    %34 = vector.shape_cast %33 : vector<1xf32> to vector<1x1xf32>
    %35 = vector.broadcast %34 : vector<1x1xf32> to vector<1x16xf32>
    %36 = arith.cmpf oge, %32, %35 : vector<1x16xf32>
    %c16_i32_9 = arith.constant 16 : i32
    %37 = vector.broadcast %c16_i32_9 : i32 to vector<1x16xi32>
    %38 = arith.select %36, %0, %37 : vector<1x16xi1>, vector<1x16xi32>
    %39 = vector.shape_cast %38 : vector<1x16xi32> to vector<1x1x16xi32>
    %cst_10 = arith.constant dense<2147483647> : vector<1xi32>
    %40 = vector.multi_reduction <minsi>, %39, %cst_10 [1, 2] : vector<1x1x16xi32> to vector<1xi32>
    %41 = vector.shape_cast %40 : vector<1xi32> to vector<1x1x1xi32>
    %42 = vector.extract %41[0, 0, 0] : i32 from vector<1x1x1xi32>
    %c2 = arith.constant 2 : index
    %43 = memref.load %arg12[%c2] : memref<8xi32, #tpu.memory_space<smem>>
    memref.store %42, %arg12[%c2] : memref<8xi32, #tpu.memory_space<smem>>
    %44 = arith.index_cast %arg0 : i32 to index
    %45 = arith.index_cast %42 : i32 to index
    %46 = memref.load %arg2[%44, %45] : memref<2x16xi32, #tpu.memory_space<smem>>
    %c2_11 = arith.constant 2 : index
    %47 = memref.load %arg13[%c2_11] : memref<8xi32, #tpu.memory_space<smem>>
    memref.store %46, %arg13[%c2_11] : memref<8xi32, #tpu.memory_space<smem>>
    %c0_12 = arith.constant 0 : index
    %48 = arith.index_cast %42 : i32 to index
    %c0_13 = arith.constant 0 : index
    %49 = vector.load %arg3[%c0_12, %48, %c0_13] : memref<1x16x16xf32, #tpu.memory_space<vmem>>, vector<1x1x16xf32>
    %50 = vector.shape_cast %49 : vector<1x1x16xf32> to vector<1x16xf32>
    %51 = arith.minimumf %32, %50 : vector<1x16xf32>
    %cst_14 = arith.constant dense<0xFF800000> : vector<1xf32>
    %52 = vector.multi_reduction <maximumf>, %51, %cst_14 [1] : vector<1x16xf32> to vector<1xf32>
    %53 = vector.shape_cast %52 : vector<1xf32> to vector<1x1xf32>
    %54 = vector.broadcast %53 : vector<1x1xf32> to vector<1x16xf32>
    %55 = arith.cmpf oge, %51, %54 : vector<1x16xf32>
    %c16_i32_15 = arith.constant 16 : i32
    %56 = vector.broadcast %c16_i32_15 : i32 to vector<1x16xi32>
    %57 = arith.select %55, %0, %56 : vector<1x16xi1>, vector<1x16xi32>
    %58 = vector.shape_cast %57 : vector<1x16xi32> to vector<1x1x16xi32>
    %cst_16 = arith.constant dense<2147483647> : vector<1xi32>
    %59 = vector.multi_reduction <minsi>, %58, %cst_16 [1, 2] : vector<1x1x16xi32> to vector<1xi32>
    %60 = vector.shape_cast %59 : vector<1xi32> to vector<1x1x1xi32>
    %61 = vector.extract %60[0, 0, 0] : i32 from vector<1x1x1xi32>
    %c3 = arith.constant 3 : index
    %62 = memref.load %arg12[%c3] : memref<8xi32, #tpu.memory_space<smem>>
    memref.store %61, %arg12[%c3] : memref<8xi32, #tpu.memory_space<smem>>
    %63 = arith.index_cast %arg0 : i32 to index
    %64 = arith.index_cast %61 : i32 to index
    %65 = memref.load %arg2[%63, %64] : memref<2x16xi32, #tpu.memory_space<smem>>
    %c3_17 = arith.constant 3 : index
    %66 = memref.load %arg13[%c3_17] : memref<8xi32, #tpu.memory_space<smem>>
    memref.store %65, %arg13[%c3_17] : memref<8xi32, #tpu.memory_space<smem>>
    %c0_18 = arith.constant 0 : index
    %67 = arith.index_cast %61 : i32 to index
    %c0_19 = arith.constant 0 : index
    %68 = vector.load %arg3[%c0_18, %67, %c0_19] : memref<1x16x16xf32, #tpu.memory_space<vmem>>, vector<1x1x16xf32>
    %69 = vector.shape_cast %68 : vector<1x1x16xf32> to vector<1x16xf32>
    %70 = arith.minimumf %51, %69 : vector<1x16xf32>
    %cst_20 = arith.constant dense<0xFF800000> : vector<1xf32>
    %71 = vector.multi_reduction <maximumf>, %70, %cst_20 [1] : vector<1x16xf32> to vector<1xf32>
    %72 = vector.shape_cast %71 : vector<1xf32> to vector<1x1xf32>
    %73 = vector.broadcast %72 : vector<1x1xf32> to vector<1x16xf32>
    %74 = arith.cmpf oge, %70, %73 : vector<1x16xf32>
    %c16_i32_21 = arith.constant 16 : i32
    %75 = vector.broadcast %c16_i32_21 : i32 to vector<1x16xi32>
    %76 = arith.select %74, %0, %75 : vector<1x16xi1>, vector<1x16xi32>
    %77 = vector.shape_cast %76 : vector<1x16xi32> to vector<1x1x16xi32>
    %cst_22 = arith.constant dense<2147483647> : vector<1xi32>
    %78 = vector.multi_reduction <minsi>, %77, %cst_22 [1, 2] : vector<1x1x16xi32> to vector<1xi32>
    %79 = vector.shape_cast %78 : vector<1xi32> to vector<1x1x1xi32>
    %80 = vector.extract %79[0, 0, 0] : i32 from vector<1x1x1xi32>
    %c4 = arith.constant 4 : index
    %81 = memref.load %arg12[%c4] : memref<8xi32, #tpu.memory_space<smem>>
    memref.store %80, %arg12[%c4] : memref<8xi32, #tpu.memory_space<smem>>
    %82 = arith.index_cast %arg0 : i32 to index
    %83 = arith.index_cast %80 : i32 to index
    %84 = memref.load %arg2[%82, %83] : memref<2x16xi32, #tpu.memory_space<smem>>
    %c4_23 = arith.constant 4 : index
    %85 = memref.load %arg13[%c4_23] : memref<8xi32, #tpu.memory_space<smem>>
    memref.store %84, %arg13[%c4_23] : memref<8xi32, #tpu.memory_space<smem>>
    %c0_24 = arith.constant 0 : index
    %86 = arith.index_cast %80 : i32 to index
    %c0_25 = arith.constant 0 : index
    %87 = vector.load %arg3[%c0_24, %86, %c0_25] : memref<1x16x16xf32, #tpu.memory_space<vmem>>, vector<1x1x16xf32>
    %88 = vector.shape_cast %87 : vector<1x1x16xf32> to vector<1x16xf32>
    %89 = arith.minimumf %70, %88 : vector<1x16xf32>
    %cst_26 = arith.constant dense<0xFF800000> : vector<1xf32>
    %90 = vector.multi_reduction <maximumf>, %89, %cst_26 [1] : vector<1x16xf32> to vector<1xf32>
    %91 = vector.shape_cast %90 : vector<1xf32> to vector<1x1xf32>
    %92 = vector.broadcast %91 : vector<1x1xf32> to vector<1x16xf32>
    %93 = arith.cmpf oge, %89, %92 : vector<1x16xf32>
    %c16_i32_27 = arith.constant 16 : i32
    %94 = vector.broadcast %c16_i32_27 : i32 to vector<1x16xi32>
    %95 = arith.select %93, %0, %94 : vector<1x16xi1>, vector<1x16xi32>
    %96 = vector.shape_cast %95 : vector<1x16xi32> to vector<1x1x16xi32>
    %cst_28 = arith.constant dense<2147483647> : vector<1xi32>
    %97 = vector.multi_reduction <minsi>, %96, %cst_28 [1, 2] : vector<1x1x16xi32> to vector<1xi32>
    %98 = vector.shape_cast %97 : vector<1xi32> to vector<1x1x1xi32>
    %99 = vector.extract %98[0, 0, 0] : i32 from vector<1x1x1xi32>
    %c5 = arith.constant 5 : index
    %100 = memref.load %arg12[%c5] : memref<8xi32, #tpu.memory_space<smem>>
    memref.store %99, %arg12[%c5] : memref<8xi32, #tpu.memory_space<smem>>
    %101 = arith.index_cast %arg0 : i32 to index
    %102 = arith.index_cast %99 : i32 to index
    %103 = memref.load %arg2[%101, %102] : memref<2x16xi32, #tpu.memory_space<smem>>
    %c5_29 = arith.constant 5 : index
    %104 = memref.load %arg13[%c5_29] : memref<8xi32, #tpu.memory_space<smem>>
    memref.store %103, %arg13[%c5_29] : memref<8xi32, #tpu.memory_space<smem>>
    %c0_30 = arith.constant 0 : index
    %105 = arith.index_cast %99 : i32 to index
    %c0_31 = arith.constant 0 : index
    %106 = vector.load %arg3[%c0_30, %105, %c0_31] : memref<1x16x16xf32, #tpu.memory_space<vmem>>, vector<1x1x16xf32>
    %107 = vector.shape_cast %106 : vector<1x1x16xf32> to vector<1x16xf32>
    %108 = arith.minimumf %89, %107 : vector<1x16xf32>
    %cst_32 = arith.constant dense<0xFF800000> : vector<1xf32>
    %109 = vector.multi_reduction <maximumf>, %108, %cst_32 [1] : vector<1x16xf32> to vector<1xf32>
    %110 = vector.shape_cast %109 : vector<1xf32> to vector<1x1xf32>
    %111 = vector.broadcast %110 : vector<1x1xf32> to vector<1x16xf32>
    %112 = arith.cmpf oge, %108, %111 : vector<1x16xf32>
    %c16_i32_33 = arith.constant 16 : i32
    %113 = vector.broadcast %c16_i32_33 : i32 to vector<1x16xi32>
    %114 = arith.select %112, %0, %113 : vector<1x16xi1>, vector<1x16xi32>
    %115 = vector.shape_cast %114 : vector<1x16xi32> to vector<1x1x16xi32>
    %cst_34 = arith.constant dense<2147483647> : vector<1xi32>
    %116 = vector.multi_reduction <minsi>, %115, %cst_34 [1, 2] : vector<1x1x16xi32> to vector<1xi32>
    %117 = vector.shape_cast %116 : vector<1xi32> to vector<1x1x1xi32>
    %118 = vector.extract %117[0, 0, 0] : i32 from vector<1x1x1xi32>
    %c6 = arith.constant 6 : index
    %119 = memref.load %arg12[%c6] : memref<8xi32, #tpu.memory_space<smem>>
    memref.store %118, %arg12[%c6] : memref<8xi32, #tpu.memory_space<smem>>
    %120 = arith.index_cast %arg0 : i32 to index
    %121 = arith.index_cast %118 : i32 to index
    %122 = memref.load %arg2[%120, %121] : memref<2x16xi32, #tpu.memory_space<smem>>
    %c6_35 = arith.constant 6 : index
    %123 = memref.load %arg13[%c6_35] : memref<8xi32, #tpu.memory_space<smem>>
    memref.store %122, %arg13[%c6_35] : memref<8xi32, #tpu.memory_space<smem>>
    %c0_36 = arith.constant 0 : index
    %124 = arith.index_cast %118 : i32 to index
    %c0_37 = arith.constant 0 : index
    %125 = vector.load %arg3[%c0_36, %124, %c0_37] : memref<1x16x16xf32, #tpu.memory_space<vmem>>, vector<1x1x16xf32>
    %126 = vector.shape_cast %125 : vector<1x1x16xf32> to vector<1x16xf32>
    %127 = arith.minimumf %108, %126 : vector<1x16xf32>
    %cst_38 = arith.constant dense<0xFF800000> : vector<1xf32>
    %128 = vector.multi_reduction <maximumf>, %127, %cst_38 [1] : vector<1x16xf32> to vector<1xf32>
    %129 = vector.shape_cast %128 : vector<1xf32> to vector<1x1xf32>
    %130 = vector.broadcast %129 : vector<1x1xf32> to vector<1x16xf32>
    %131 = arith.cmpf oge, %127, %130 : vector<1x16xf32>
    %c16_i32_39 = arith.constant 16 : i32
    %132 = vector.broadcast %c16_i32_39 : i32 to vector<1x16xi32>
    %133 = arith.select %131, %0, %132 : vector<1x16xi1>, vector<1x16xi32>
    %134 = vector.shape_cast %133 : vector<1x16xi32> to vector<1x1x16xi32>
    %cst_40 = arith.constant dense<2147483647> : vector<1xi32>
    %135 = vector.multi_reduction <minsi>, %134, %cst_40 [1, 2] : vector<1x1x16xi32> to vector<1xi32>
    %136 = vector.shape_cast %135 : vector<1xi32> to vector<1x1x1xi32>
    %137 = vector.extract %136[0, 0, 0] : i32 from vector<1x1x1xi32>
    %c7 = arith.constant 7 : index
    %138 = memref.load %arg12[%c7] : memref<8xi32, #tpu.memory_space<smem>>
    memref.store %137, %arg12[%c7] : memref<8xi32, #tpu.memory_space<smem>>
    %139 = arith.index_cast %arg0 : i32 to index
    %140 = arith.index_cast %137 : i32 to index
    %141 = memref.load %arg2[%139, %140] : memref<2x16xi32, #tpu.memory_space<smem>>
    %c7_41 = arith.constant 7 : index
    %142 = memref.load %arg13[%c7_41] : memref<8xi32, #tpu.memory_space<smem>>
    memref.store %141, %arg13[%c7_41] : memref<8xi32, #tpu.memory_space<smem>>
    %c0_i32 = arith.constant 0 : i32
    %143 = vector.broadcast %c0_i32 : i32 to vector<1x8xi32>
    %c0_i32_42 = arith.constant 0 : i32
    %144 = vector.broadcast %c0_i32_42 : i32 to vector<1x8xi32>
    %c0_43 = arith.constant 0 : index
    %145 = memref.load %arg12[%c0_43] : memref<8xi32, #tpu.memory_space<smem>>
    %c0_i32_44 = arith.constant 0 : i32
    %146 = vector.broadcast %c0_i32_44 : i32 to vector<1x8xi32>
    %147 = arith.cmpi eq, %1, %146 : vector<1x8xi32>
    %148 = vector.broadcast %145 : i32 to vector<1x8xi32>
    %149 = arith.select %147, %148, %143 : vector<1x8xi1>, vector<1x8xi32>
    %c0_i32_45 = arith.constant 0 : i32
    %150 = vector.broadcast %c0_i32_45 : i32 to vector<1x8xi32>
    %151 = arith.cmpi eq, %1, %150 : vector<1x8xi32>
    %c0_46 = arith.constant 0 : index
    %152 = memref.load %arg13[%c0_46] : memref<8xi32, #tpu.memory_space<smem>>
    %153 = vector.broadcast %152 : i32 to vector<1x8xi32>
    %154 = arith.select %151, %153, %144 : vector<1x8xi1>, vector<1x8xi32>
    %c0_47 = arith.constant 0 : index
    %155 = arith.index_cast %145 : i32 to index
    %c0_48 = arith.constant 0 : index
    %156 = vector.load %arg5[%c0_47, %155, %c0_48] : memref<1x16x8xf32, #tpu.memory_space<vmem>>, vector<1x1x8xf32>
    %157 = vector.shape_cast %156 : vector<1x1x8xf32> to vector<1x8xf32>
    %c0_49 = arith.constant 0 : index
    %c0_50 = arith.constant 0 : index
    %c0_51 = arith.constant 0 : index
    %158 = vector.load %arg8[%c0_49, %c0_50, %c0_51] : memref<1x8x8xf32, #tpu.memory_space<vmem>>, vector<1x1x8xf32>
    %159 = vector.shape_cast %158 : vector<1x1x8xf32> to vector<1x8xf32>
    %160 = vector.shape_cast %157 : vector<1x8xf32> to vector<1x1x8xf32>
    tpu.vector_store %arg8[%c0_49, %c0_50, %c0_51], %160 {strides = array<i32>} : memref<1x8x8xf32, #tpu.memory_space<vmem>>, vector<1x1x8xf32>,
    %c0_52 = arith.constant 0 : index
    %c0_53 = arith.constant 0 : index
    %161 = arith.index_cast %145 : i32 to index
    %c0_54 = arith.constant 0 : index
    %162 = vector.load %arg4[%c0_52, %c0_53, %161, %c0_54] : memref<1x6x16x16xf32, #tpu.memory_space<vmem>>, vector<1x6x1x16xf32>
    %163 = vector.shape_cast %162 : vector<1x6x1x16xf32> to vector<6x1x16xf32>
    %c0_55 = arith.constant 0 : index
    %c0_56 = arith.constant 0 : index
    %c0_57 = arith.constant 0 : index
    %164 = vector.load %arg14[%c0_55, %c0_56, %c0_57] : memref<6x8x16xf32, #tpu.memory_space<vmem>>, vector<6x1x16xf32>
    tpu.vector_store %arg14[%c0_55, %c0_56, %c0_57], %163 {strides = array<i32>} : memref<6x8x16xf32, #tpu.memory_space<vmem>>, vector<6x1x16xf32>,
    %c0_58 = arith.constant 0 : index
    %c0_59 = arith.constant 0 : index
    %165 = arith.index_cast %145 : i32 to index
    %c0_60 = arith.constant 0 : index
    %166 = vector.load %arg6[%c0_58, %c0_59, %165, %c0_60] : memref<1x4x16x16xf32, #tpu.memory_space<vmem>>, vector<1x4x1x16xf32>
    %167 = vector.shape_cast %166 : vector<1x4x1x16xf32> to vector<4x1x16xf32>
    %c0_61 = arith.constant 0 : index
    %c0_62 = arith.constant 0 : index
    %c0_63 = arith.constant 0 : index
    %168 = vector.load %arg16[%c0_61, %c0_62, %c0_63] : memref<4x8x16xf32, #tpu.memory_space<vmem>>, vector<4x1x16xf32>
    tpu.vector_store %arg16[%c0_61, %c0_62, %c0_63], %167 {strides = array<i32>} : memref<4x8x16xf32, #tpu.memory_space<vmem>>, vector<4x1x16xf32>,
    %c1_64 = arith.constant 1 : index
    %169 = memref.load %arg12[%c1_64] : memref<8xi32, #tpu.memory_space<smem>>
    %c1_i32 = arith.constant 1 : i32
    %170 = vector.broadcast %c1_i32 : i32 to vector<1x8xi32>
    %171 = arith.cmpi eq, %1, %170 : vector<1x8xi32>
    %172 = vector.broadcast %169 : i32 to vector<1x8xi32>
    %173 = arith.select %171, %172, %149 : vector<1x8xi1>, vector<1x8xi32>
    %c1_i32_65 = arith.constant 1 : i32
    %174 = vector.broadcast %c1_i32_65 : i32 to vector<1x8xi32>
    %175 = arith.cmpi eq, %1, %174 : vector<1x8xi32>
    %c1_66 = arith.constant 1 : index
    %176 = memref.load %arg13[%c1_66] : memref<8xi32, #tpu.memory_space<smem>>
    %177 = vector.broadcast %176 : i32 to vector<1x8xi32>
    %178 = arith.select %175, %177, %154 : vector<1x8xi1>, vector<1x8xi32>
    %c0_67 = arith.constant 0 : index
    %179 = arith.index_cast %169 : i32 to index
    %c0_68 = arith.constant 0 : index
    %180 = vector.load %arg5[%c0_67, %179, %c0_68] : memref<1x16x8xf32, #tpu.memory_space<vmem>>, vector<1x1x8xf32>
    %181 = vector.shape_cast %180 : vector<1x1x8xf32> to vector<1x8xf32>
    %c0_69 = arith.constant 0 : index
    %c1_70 = arith.constant 1 : index
    %c0_71 = arith.constant 0 : index
    %182 = vector.load %arg8[%c0_69, %c1_70, %c0_71] : memref<1x8x8xf32, #tpu.memory_space<vmem>>, vector<1x1x8xf32>
    %183 = vector.shape_cast %182 : vector<1x1x8xf32> to vector<1x8xf32>
    %184 = vector.shape_cast %181 : vector<1x8xf32> to vector<1x1x8xf32>
    tpu.vector_store %arg8[%c0_69, %c1_70, %c0_71], %184 {strides = array<i32>} : memref<1x8x8xf32, #tpu.memory_space<vmem>>, vector<1x1x8xf32>,
    %c0_72 = arith.constant 0 : index
    %c0_73 = arith.constant 0 : index
    %185 = arith.index_cast %169 : i32 to index
    %c0_74 = arith.constant 0 : index
    %186 = vector.load %arg4[%c0_72, %c0_73, %185, %c0_74] : memref<1x6x16x16xf32, #tpu.memory_space<vmem>>, vector<1x6x1x16xf32>
    %187 = vector.shape_cast %186 : vector<1x6x1x16xf32> to vector<6x1x16xf32>
    %c0_75 = arith.constant 0 : index
    %c1_76 = arith.constant 1 : index
    %c0_77 = arith.constant 0 : index
    %188 = vector.load %arg14[%c0_75, %c1_76, %c0_77] : memref<6x8x16xf32, #tpu.memory_space<vmem>>, vector<6x1x16xf32>
    tpu.vector_store %arg14[%c0_75, %c1_76, %c0_77], %187 {strides = array<i32>} : memref<6x8x16xf32, #tpu.memory_space<vmem>>, vector<6x1x16xf32>,
    %c0_78 = arith.constant 0 : index
    %c0_79 = arith.constant 0 : index
    %189 = arith.index_cast %169 : i32 to index
    %c0_80 = arith.constant 0 : index
    %190 = vector.load %arg6[%c0_78, %c0_79, %189, %c0_80] : memref<1x4x16x16xf32, #tpu.memory_space<vmem>>, vector<1x4x1x16xf32>
    %191 = vector.shape_cast %190 : vector<1x4x1x16xf32> to vector<4x1x16xf32>
    %c0_81 = arith.constant 0 : index
    %c1_82 = arith.constant 1 : index
    %c0_83 = arith.constant 0 : index
    %192 = vector.load %arg16[%c0_81, %c1_82, %c0_83] : memref<4x8x16xf32, #tpu.memory_space<vmem>>, vector<4x1x16xf32>
    tpu.vector_store %arg16[%c0_81, %c1_82, %c0_83], %191 {strides = array<i32>} : memref<4x8x16xf32, #tpu.memory_space<vmem>>, vector<4x1x16xf32>,
    %c2_84 = arith.constant 2 : index
    %193 = memref.load %arg12[%c2_84] : memref<8xi32, #tpu.memory_space<smem>>
    %c2_i32 = arith.constant 2 : i32
    %194 = vector.broadcast %c2_i32 : i32 to vector<1x8xi32>
    %195 = arith.cmpi eq, %1, %194 : vector<1x8xi32>
    %196 = vector.broadcast %193 : i32 to vector<1x8xi32>
    %197 = arith.select %195, %196, %173 : vector<1x8xi1>, vector<1x8xi32>
    %c2_i32_85 = arith.constant 2 : i32
    %198 = vector.broadcast %c2_i32_85 : i32 to vector<1x8xi32>
    %199 = arith.cmpi eq, %1, %198 : vector<1x8xi32>
    %c2_86 = arith.constant 2 : index
    %200 = memref.load %arg13[%c2_86] : memref<8xi32, #tpu.memory_space<smem>>
    %201 = vector.broadcast %200 : i32 to vector<1x8xi32>
    %202 = arith.select %199, %201, %178 : vector<1x8xi1>, vector<1x8xi32>
    %c0_87 = arith.constant 0 : index
    %203 = arith.index_cast %193 : i32 to index
    %c0_88 = arith.constant 0 : index
    %204 = vector.load %arg5[%c0_87, %203, %c0_88] : memref<1x16x8xf32, #tpu.memory_space<vmem>>, vector<1x1x8xf32>
    %205 = vector.shape_cast %204 : vector<1x1x8xf32> to vector<1x8xf32>
    %c0_89 = arith.constant 0 : index
    %c2_90 = arith.constant 2 : index
    %c0_91 = arith.constant 0 : index
    %206 = vector.load %arg8[%c0_89, %c2_90, %c0_91] : memref<1x8x8xf32, #tpu.memory_space<vmem>>, vector<1x1x8xf32>
    %207 = vector.shape_cast %206 : vector<1x1x8xf32> to vector<1x8xf32>
    %208 = vector.shape_cast %205 : vector<1x8xf32> to vector<1x1x8xf32>
    tpu.vector_store %arg8[%c0_89, %c2_90, %c0_91], %208 {strides = array<i32>} : memref<1x8x8xf32, #tpu.memory_space<vmem>>, vector<1x1x8xf32>,
    %c0_92 = arith.constant 0 : index
    %c0_93 = arith.constant 0 : index
    %209 = arith.index_cast %193 : i32 to index
    %c0_94 = arith.constant 0 : index
    %210 = vector.load %arg4[%c0_92, %c0_93, %209, %c0_94] : memref<1x6x16x16xf32, #tpu.memory_space<vmem>>, vector<1x6x1x16xf32>
    %211 = vector.shape_cast %210 : vector<1x6x1x16xf32> to vector<6x1x16xf32>
    %c0_95 = arith.constant 0 : index
    %c2_96 = arith.constant 2 : index
    %c0_97 = arith.constant 0 : index
    %212 = vector.load %arg14[%c0_95, %c2_96, %c0_97] : memref<6x8x16xf32, #tpu.memory_space<vmem>>, vector<6x1x16xf32>
    tpu.vector_store %arg14[%c0_95, %c2_96, %c0_97], %211 {strides = array<i32>} : memref<6x8x16xf32, #tpu.memory_space<vmem>>, vector<6x1x16xf32>,
    %c0_98 = arith.constant 0 : index
    %c0_99 = arith.constant 0 : index
    %213 = arith.index_cast %193 : i32 to index
    %c0_100 = arith.constant 0 : index
    %214 = vector.load %arg6[%c0_98, %c0_99, %213, %c0_100] : memref<1x4x16x16xf32, #tpu.memory_space<vmem>>, vector<1x4x1x16xf32>
    %215 = vector.shape_cast %214 : vector<1x4x1x16xf32> to vector<4x1x16xf32>
    %c0_101 = arith.constant 0 : index
    %c2_102 = arith.constant 2 : index
    %c0_103 = arith.constant 0 : index
    %216 = vector.load %arg16[%c0_101, %c2_102, %c0_103] : memref<4x8x16xf32, #tpu.memory_space<vmem>>, vector<4x1x16xf32>
    tpu.vector_store %arg16[%c0_101, %c2_102, %c0_103], %215 {strides = array<i32>} : memref<4x8x16xf32, #tpu.memory_space<vmem>>, vector<4x1x16xf32>,
    %c3_104 = arith.constant 3 : index
    %217 = memref.load %arg12[%c3_104] : memref<8xi32, #tpu.memory_space<smem>>
    %c3_i32 = arith.constant 3 : i32
    %218 = vector.broadcast %c3_i32 : i32 to vector<1x8xi32>
    %219 = arith.cmpi eq, %1, %218 : vector<1x8xi32>
    %220 = vector.broadcast %217 : i32 to vector<1x8xi32>
    %221 = arith.select %219, %220, %197 : vector<1x8xi1>, vector<1x8xi32>
    %c3_i32_105 = arith.constant 3 : i32
    %222 = vector.broadcast %c3_i32_105 : i32 to vector<1x8xi32>
    %223 = arith.cmpi eq, %1, %222 : vector<1x8xi32>
    %c3_106 = arith.constant 3 : index
    %224 = memref.load %arg13[%c3_106] : memref<8xi32, #tpu.memory_space<smem>>
    %225 = vector.broadcast %224 : i32 to vector<1x8xi32>
    %226 = arith.select %223, %225, %202 : vector<1x8xi1>, vector<1x8xi32>
    %c0_107 = arith.constant 0 : index
    %227 = arith.index_cast %217 : i32 to index
    %c0_108 = arith.constant 0 : index
    %228 = vector.load %arg5[%c0_107, %227, %c0_108] : memref<1x16x8xf32, #tpu.memory_space<vmem>>, vector<1x1x8xf32>
    %229 = vector.shape_cast %228 : vector<1x1x8xf32> to vector<1x8xf32>
    %c0_109 = arith.constant 0 : index
    %c3_110 = arith.constant 3 : index
    %c0_111 = arith.constant 0 : index
    %230 = vector.load %arg8[%c0_109, %c3_110, %c0_111] : memref<1x8x8xf32, #tpu.memory_space<vmem>>, vector<1x1x8xf32>
    %231 = vector.shape_cast %230 : vector<1x1x8xf32> to vector<1x8xf32>
    %232 = vector.shape_cast %229 : vector<1x8xf32> to vector<1x1x8xf32>
    tpu.vector_store %arg8[%c0_109, %c3_110, %c0_111], %232 {strides = array<i32>} : memref<1x8x8xf32, #tpu.memory_space<vmem>>, vector<1x1x8xf32>,
    %c0_112 = arith.constant 0 : index
    %c0_113 = arith.constant 0 : index
    %233 = arith.index_cast %217 : i32 to index
    %c0_114 = arith.constant 0 : index
    %234 = vector.load %arg4[%c0_112, %c0_113, %233, %c0_114] : memref<1x6x16x16xf32, #tpu.memory_space<vmem>>, vector<1x6x1x16xf32>
    %235 = vector.shape_cast %234 : vector<1x6x1x16xf32> to vector<6x1x16xf32>
    %c0_115 = arith.constant 0 : index
    %c3_116 = arith.constant 3 : index
    %c0_117 = arith.constant 0 : index
    %236 = vector.load %arg14[%c0_115, %c3_116, %c0_117] : memref<6x8x16xf32, #tpu.memory_space<vmem>>, vector<6x1x16xf32>
    tpu.vector_store %arg14[%c0_115, %c3_116, %c0_117], %235 {strides = array<i32>} : memref<6x8x16xf32, #tpu.memory_space<vmem>>, vector<6x1x16xf32>,
    %c0_118 = arith.constant 0 : index
    %c0_119 = arith.constant 0 : index
    %237 = arith.index_cast %217 : i32 to index
    %c0_120 = arith.constant 0 : index
    %238 = vector.load %arg6[%c0_118, %c0_119, %237, %c0_120] : memref<1x4x16x16xf32, #tpu.memory_space<vmem>>, vector<1x4x1x16xf32>
    %239 = vector.shape_cast %238 : vector<1x4x1x16xf32> to vector<4x1x16xf32>
    %c0_121 = arith.constant 0 : index
    %c3_122 = arith.constant 3 : index
    %c0_123 = arith.constant 0 : index
    %240 = vector.load %arg16[%c0_121, %c3_122, %c0_123] : memref<4x8x16xf32, #tpu.memory_space<vmem>>, vector<4x1x16xf32>
    tpu.vector_store %arg16[%c0_121, %c3_122, %c0_123], %239 {strides = array<i32>} : memref<4x8x16xf32, #tpu.memory_space<vmem>>, vector<4x1x16xf32>,
    %c4_124 = arith.constant 4 : index
    %241 = memref.load %arg12[%c4_124] : memref<8xi32, #tpu.memory_space<smem>>
    %c4_i32 = arith.constant 4 : i32
    %242 = vector.broadcast %c4_i32 : i32 to vector<1x8xi32>
    %243 = arith.cmpi eq, %1, %242 : vector<1x8xi32>
    %244 = vector.broadcast %241 : i32 to vector<1x8xi32>
    %245 = arith.select %243, %244, %221 : vector<1x8xi1>, vector<1x8xi32>
    %c4_i32_125 = arith.constant 4 : i32
    %246 = vector.broadcast %c4_i32_125 : i32 to vector<1x8xi32>
    %247 = arith.cmpi eq, %1, %246 : vector<1x8xi32>
    %c4_126 = arith.constant 4 : index
    %248 = memref.load %arg13[%c4_126] : memref<8xi32, #tpu.memory_space<smem>>
    %249 = vector.broadcast %248 : i32 to vector<1x8xi32>
    %250 = arith.select %247, %249, %226 : vector<1x8xi1>, vector<1x8xi32>
    %c0_127 = arith.constant 0 : index
    %251 = arith.index_cast %241 : i32 to index
    %c0_128 = arith.constant 0 : index
    %252 = vector.load %arg5[%c0_127, %251, %c0_128] : memref<1x16x8xf32, #tpu.memory_space<vmem>>, vector<1x1x8xf32>
    %253 = vector.shape_cast %252 : vector<1x1x8xf32> to vector<1x8xf32>
    %c0_129 = arith.constant 0 : index
    %c4_130 = arith.constant 4 : index
    %c0_131 = arith.constant 0 : index
    %254 = vector.load %arg8[%c0_129, %c4_130, %c0_131] : memref<1x8x8xf32, #tpu.memory_space<vmem>>, vector<1x1x8xf32>
    %255 = vector.shape_cast %254 : vector<1x1x8xf32> to vector<1x8xf32>
    %256 = vector.shape_cast %253 : vector<1x8xf32> to vector<1x1x8xf32>
    tpu.vector_store %arg8[%c0_129, %c4_130, %c0_131], %256 {strides = array<i32>} : memref<1x8x8xf32, #tpu.memory_space<vmem>>, vector<1x1x8xf32>,
    %c0_132 = arith.constant 0 : index
    %c0_133 = arith.constant 0 : index
    %257 = arith.index_cast %241 : i32 to index
    %c0_134 = arith.constant 0 : index
    %258 = vector.load %arg4[%c0_132, %c0_133, %257, %c0_134] : memref<1x6x16x16xf32, #tpu.memory_space<vmem>>, vector<1x6x1x16xf32>
    %259 = vector.shape_cast %258 : vector<1x6x1x16xf32> to vector<6x1x16xf32>
    %c0_135 = arith.constant 0 : index
    %c4_136 = arith.constant 4 : index
    %c0_137 = arith.constant 0 : index
    %260 = vector.load %arg14[%c0_135, %c4_136, %c0_137] : memref<6x8x16xf32, #tpu.memory_space<vmem>>, vector<6x1x16xf32>
    tpu.vector_store %arg14[%c0_135, %c4_136, %c0_137], %259 {strides = array<i32>} : memref<6x8x16xf32, #tpu.memory_space<vmem>>, vector<6x1x16xf32>,
    %c0_138 = arith.constant 0 : index
    %c0_139 = arith.constant 0 : index
    %261 = arith.index_cast %241 : i32 to index
    %c0_140 = arith.constant 0 : index
    %262 = vector.load %arg6[%c0_138, %c0_139, %261, %c0_140] : memref<1x4x16x16xf32, #tpu.memory_space<vmem>>, vector<1x4x1x16xf32>
    %263 = vector.shape_cast %262 : vector<1x4x1x16xf32> to vector<4x1x16xf32>
    %c0_141 = arith.constant 0 : index
    %c4_142 = arith.constant 4 : index
    %c0_143 = arith.constant 0 : index
    %264 = vector.load %arg16[%c0_141, %c4_142, %c0_143] : memref<4x8x16xf32, #tpu.memory_space<vmem>>, vector<4x1x16xf32>
    tpu.vector_store %arg16[%c0_141, %c4_142, %c0_143], %263 {strides = array<i32>} : memref<4x8x16xf32, #tpu.memory_space<vmem>>, vector<4x1x16xf32>,
    %c5_144 = arith.constant 5 : index
    %265 = memref.load %arg12[%c5_144] : memref<8xi32, #tpu.memory_space<smem>>
    %c5_i32 = arith.constant 5 : i32
    %266 = vector.broadcast %c5_i32 : i32 to vector<1x8xi32>
    %267 = arith.cmpi eq, %1, %266 : vector<1x8xi32>
    %268 = vector.broadcast %265 : i32 to vector<1x8xi32>
    %269 = arith.select %267, %268, %245 : vector<1x8xi1>, vector<1x8xi32>
    %c5_i32_145 = arith.constant 5 : i32
    %270 = vector.broadcast %c5_i32_145 : i32 to vector<1x8xi32>
    %271 = arith.cmpi eq, %1, %270 : vector<1x8xi32>
    %c5_146 = arith.constant 5 : index
    %272 = memref.load %arg13[%c5_146] : memref<8xi32, #tpu.memory_space<smem>>
    %273 = vector.broadcast %272 : i32 to vector<1x8xi32>
    %274 = arith.select %271, %273, %250 : vector<1x8xi1>, vector<1x8xi32>
    %c0_147 = arith.constant 0 : index
    %275 = arith.index_cast %265 : i32 to index
    %c0_148 = arith.constant 0 : index
    %276 = vector.load %arg5[%c0_147, %275, %c0_148] : memref<1x16x8xf32, #tpu.memory_space<vmem>>, vector<1x1x8xf32>
    %277 = vector.shape_cast %276 : vector<1x1x8xf32> to vector<1x8xf32>
    %c0_149 = arith.constant 0 : index
    %c5_150 = arith.constant 5 : index
    %c0_151 = arith.constant 0 : index
    %278 = vector.load %arg8[%c0_149, %c5_150, %c0_151] : memref<1x8x8xf32, #tpu.memory_space<vmem>>, vector<1x1x8xf32>
    %279 = vector.shape_cast %278 : vector<1x1x8xf32> to vector<1x8xf32>
    %280 = vector.shape_cast %277 : vector<1x8xf32> to vector<1x1x8xf32>
    tpu.vector_store %arg8[%c0_149, %c5_150, %c0_151], %280 {strides = array<i32>} : memref<1x8x8xf32, #tpu.memory_space<vmem>>, vector<1x1x8xf32>,
    %c0_152 = arith.constant 0 : index
    %c0_153 = arith.constant 0 : index
    %281 = arith.index_cast %265 : i32 to index
    %c0_154 = arith.constant 0 : index
    %282 = vector.load %arg4[%c0_152, %c0_153, %281, %c0_154] : memref<1x6x16x16xf32, #tpu.memory_space<vmem>>, vector<1x6x1x16xf32>
    %283 = vector.shape_cast %282 : vector<1x6x1x16xf32> to vector<6x1x16xf32>
    %c0_155 = arith.constant 0 : index
    %c5_156 = arith.constant 5 : index
    %c0_157 = arith.constant 0 : index
    %284 = vector.load %arg14[%c0_155, %c5_156, %c0_157] : memref<6x8x16xf32, #tpu.memory_space<vmem>>, vector<6x1x16xf32>
    tpu.vector_store %arg14[%c0_155, %c5_156, %c0_157], %283 {strides = array<i32>} : memref<6x8x16xf32, #tpu.memory_space<vmem>>, vector<6x1x16xf32>,
    %c0_158 = arith.constant 0 : index
    %c0_159 = arith.constant 0 : index
    %285 = arith.index_cast %265 : i32 to index
    %c0_160 = arith.constant 0 : index
    %286 = vector.load %arg6[%c0_158, %c0_159, %285, %c0_160] : memref<1x4x16x16xf32, #tpu.memory_space<vmem>>, vector<1x4x1x16xf32>
    %287 = vector.shape_cast %286 : vector<1x4x1x16xf32> to vector<4x1x16xf32>
    %c0_161 = arith.constant 0 : index
    %c5_162 = arith.constant 5 : index
    %c0_163 = arith.constant 0 : index
    %288 = vector.load %arg16[%c0_161, %c5_162, %c0_163] : memref<4x8x16xf32, #tpu.memory_space<vmem>>, vector<4x1x16xf32>
    tpu.vector_store %arg16[%c0_161, %c5_162, %c0_163], %287 {strides = array<i32>} : memref<4x8x16xf32, #tpu.memory_space<vmem>>, vector<4x1x16xf32>,
    %c6_164 = arith.constant 6 : index
    %289 = memref.load %arg12[%c6_164] : memref<8xi32, #tpu.memory_space<smem>>
    %c6_i32 = arith.constant 6 : i32
    %290 = vector.broadcast %c6_i32 : i32 to vector<1x8xi32>
    %291 = arith.cmpi eq, %1, %290 : vector<1x8xi32>
    %292 = vector.broadcast %289 : i32 to vector<1x8xi32>
    %293 = arith.select %291, %292, %269 : vector<1x8xi1>, vector<1x8xi32>
    %c6_i32_165 = arith.constant 6 : i32
    %294 = vector.broadcast %c6_i32_165 : i32 to vector<1x8xi32>
    %295 = arith.cmpi eq, %1, %294 : vector<1x8xi32>
    %c6_166 = arith.constant 6 : index
    %296 = memref.load %arg13[%c6_166] : memref<8xi32, #tpu.memory_space<smem>>
    %297 = vector.broadcast %296 : i32 to vector<1x8xi32>
    %298 = arith.select %295, %297, %274 : vector<1x8xi1>, vector<1x8xi32>
    %c0_167 = arith.constant 0 : index
    %299 = arith.index_cast %289 : i32 to index
    %c0_168 = arith.constant 0 : index
    %300 = vector.load %arg5[%c0_167, %299, %c0_168] : memref<1x16x8xf32, #tpu.memory_space<vmem>>, vector<1x1x8xf32>
    %301 = vector.shape_cast %300 : vector<1x1x8xf32> to vector<1x8xf32>
    %c0_169 = arith.constant 0 : index
    %c6_170 = arith.constant 6 : index
    %c0_171 = arith.constant 0 : index
    %302 = vector.load %arg8[%c0_169, %c6_170, %c0_171] : memref<1x8x8xf32, #tpu.memory_space<vmem>>, vector<1x1x8xf32>
    %303 = vector.shape_cast %302 : vector<1x1x8xf32> to vector<1x8xf32>
    %304 = vector.shape_cast %301 : vector<1x8xf32> to vector<1x1x8xf32>
    tpu.vector_store %arg8[%c0_169, %c6_170, %c0_171], %304 {strides = array<i32>} : memref<1x8x8xf32, #tpu.memory_space<vmem>>, vector<1x1x8xf32>,
    %c0_172 = arith.constant 0 : index
    %c0_173 = arith.constant 0 : index
    %305 = arith.index_cast %289 : i32 to index
    %c0_174 = arith.constant 0 : index
    %306 = vector.load %arg4[%c0_172, %c0_173, %305, %c0_174] : memref<1x6x16x16xf32, #tpu.memory_space<vmem>>, vector<1x6x1x16xf32>
    %307 = vector.shape_cast %306 : vector<1x6x1x16xf32> to vector<6x1x16xf32>
    %c0_175 = arith.constant 0 : index
    %c6_176 = arith.constant 6 : index
    %c0_177 = arith.constant 0 : index
    %308 = vector.load %arg14[%c0_175, %c6_176, %c0_177] : memref<6x8x16xf32, #tpu.memory_space<vmem>>, vector<6x1x16xf32>
    tpu.vector_store %arg14[%c0_175, %c6_176, %c0_177], %307 {strides = array<i32>} : memref<6x8x16xf32, #tpu.memory_space<vmem>>, vector<6x1x16xf32>,
    %c0_178 = arith.constant 0 : index
    %c0_179 = arith.constant 0 : index
    %309 = arith.index_cast %289 : i32 to index
    %c0_180 = arith.constant 0 : index
    %310 = vector.load %arg6[%c0_178, %c0_179, %309, %c0_180] : memref<1x4x16x16xf32, #tpu.memory_space<vmem>>, vector<1x4x1x16xf32>
    %311 = vector.shape_cast %310 : vector<1x4x1x16xf32> to vector<4x1x16xf32>
    %c0_181 = arith.constant 0 : index
    %c6_182 = arith.constant 6 : index
    %c0_183 = arith.constant 0 : index
    %312 = vector.load %arg16[%c0_181, %c6_182, %c0_183] : memref<4x8x16xf32, #tpu.memory_space<vmem>>, vector<4x1x16xf32>
    tpu.vector_store %arg16[%c0_181, %c6_182, %c0_183], %311 {strides = array<i32>} : memref<4x8x16xf32, #tpu.memory_space<vmem>>, vector<4x1x16xf32>,
    %c7_184 = arith.constant 7 : index
    %313 = memref.load %arg12[%c7_184] : memref<8xi32, #tpu.memory_space<smem>>
    %c7_i32 = arith.constant 7 : i32
    %314 = vector.broadcast %c7_i32 : i32 to vector<1x8xi32>
    %315 = arith.cmpi eq, %1, %314 : vector<1x8xi32>
    %316 = vector.broadcast %313 : i32 to vector<1x8xi32>
    %317 = arith.select %315, %316, %293 : vector<1x8xi1>, vector<1x8xi32>
    %c7_i32_185 = arith.constant 7 : i32
    %318 = vector.broadcast %c7_i32_185 : i32 to vector<1x8xi32>
    %319 = arith.cmpi eq, %1, %318 : vector<1x8xi32>
    %c7_186 = arith.constant 7 : index
    %320 = memref.load %arg13[%c7_186] : memref<8xi32, #tpu.memory_space<smem>>
    %321 = vector.broadcast %320 : i32 to vector<1x8xi32>
    %322 = arith.select %319, %321, %298 : vector<1x8xi1>, vector<1x8xi32>
    %c0_187 = arith.constant 0 : index
    %323 = arith.index_cast %313 : i32 to index
    %c0_188 = arith.constant 0 : index
    %324 = vector.load %arg5[%c0_187, %323, %c0_188] : memref<1x16x8xf32, #tpu.memory_space<vmem>>, vector<1x1x8xf32>
    %325 = vector.shape_cast %324 : vector<1x1x8xf32> to vector<1x8xf32>
    %c0_189 = arith.constant 0 : index
    %c7_190 = arith.constant 7 : index
    %c0_191 = arith.constant 0 : index
    %326 = vector.load %arg8[%c0_189, %c7_190, %c0_191] : memref<1x8x8xf32, #tpu.memory_space<vmem>>, vector<1x1x8xf32>
    %327 = vector.shape_cast %326 : vector<1x1x8xf32> to vector<1x8xf32>
    %328 = vector.shape_cast %325 : vector<1x8xf32> to vector<1x1x8xf32>
    tpu.vector_store %arg8[%c0_189, %c7_190, %c0_191], %328 {strides = array<i32>} : memref<1x8x8xf32, #tpu.memory_space<vmem>>, vector<1x1x8xf32>,
    %c0_192 = arith.constant 0 : index
    %c0_193 = arith.constant 0 : index
    %329 = arith.index_cast %313 : i32 to index
    %c0_194 = arith.constant 0 : index
    %330 = vector.load %arg4[%c0_192, %c0_193, %329, %c0_194] : memref<1x6x16x16xf32, #tpu.memory_space<vmem>>, vector<1x6x1x16xf32>
    %331 = vector.shape_cast %330 : vector<1x6x1x16xf32> to vector<6x1x16xf32>
    %c0_195 = arith.constant 0 : index
    %c7_196 = arith.constant 7 : index
    %c0_197 = arith.constant 0 : index
    %332 = vector.load %arg14[%c0_195, %c7_196, %c0_197] : memref<6x8x16xf32, #tpu.memory_space<vmem>>, vector<6x1x16xf32>
    tpu.vector_store %arg14[%c0_195, %c7_196, %c0_197], %331 {strides = array<i32>} : memref<6x8x16xf32, #tpu.memory_space<vmem>>, vector<6x1x16xf32>,
    %c0_198 = arith.constant 0 : index
    %c0_199 = arith.constant 0 : index
    %333 = arith.index_cast %313 : i32 to index
    %c0_200 = arith.constant 0 : index
    %334 = vector.load %arg6[%c0_198, %c0_199, %333, %c0_200] : memref<1x4x16x16xf32, #tpu.memory_space<vmem>>, vector<1x4x1x16xf32>
    %335 = vector.shape_cast %334 : vector<1x4x1x16xf32> to vector<4x1x16xf32>
    %c0_201 = arith.constant 0 : index
    %c7_202 = arith.constant 7 : index
    %c0_203 = arith.constant 0 : index
    %336 = vector.load %arg16[%c0_201, %c7_202, %c0_203] : memref<4x8x16xf32, #tpu.memory_space<vmem>>, vector<4x1x16xf32>
    tpu.vector_store %arg16[%c0_201, %c7_202, %c0_203], %335 {strides = array<i32>} : memref<4x8x16xf32, #tpu.memory_space<vmem>>, vector<4x1x16xf32>,
    %c0_204 = arith.constant 0 : index
    %c0_205 = arith.constant 0 : index
    %c0_206 = arith.constant 0 : index
    %337 = vector.load %arg10[%c0_204, %c0_205, %c0_206] : memref<1x1x8xi32, #tpu.memory_space<vmem>>, vector<1x1x8xi32>
    %338 = vector.shape_cast %337 : vector<1x1x8xi32> to vector<1x8xi32>
    %339 = vector.shape_cast %317 : vector<1x8xi32> to vector<1x1x8xi32>
    tpu.vector_store %arg10[%c0_204, %c0_205, %c0_206], %339 {strides = array<i32>} : memref<1x1x8xi32, #tpu.memory_space<vmem>>, vector<1x1x8xi32>,
    %c0_207 = arith.constant 0 : index
    %c0_208 = arith.constant 0 : index
    %c0_209 = arith.constant 0 : index
    %340 = vector.load %arg9[%c0_207, %c0_208, %c0_209] : memref<1x1x8xi32, #tpu.memory_space<vmem>>, vector<1x1x8xi32>
    %341 = vector.shape_cast %340 : vector<1x1x8xi32> to vector<1x8xi32>
    %342 = vector.shape_cast %322 : vector<1x8xi32> to vector<1x1x8xi32>
    tpu.vector_store %arg9[%c0_207, %c0_208, %c0_209], %342 {strides = array<i32>} : memref<1x1x8xi32, #tpu.memory_space<vmem>>, vector<1x1x8xi32>,
    %c0_210 = arith.constant 0 : index
    %c0_211 = arith.constant 0 : index
    %c0_212 = arith.constant 0 : index
    %343 = vector.load %arg14[%c0_210, %c0_211, %c0_212] : memref<6x8x16xf32, #tpu.memory_space<vmem>>, vector<1x8x16xf32>
    %344 = vector.shape_cast %343 : vector<1x8x16xf32> to vector<8x16xf32>
    %345 = tpu.transpose %344, [1, 0] : vector<8x16xf32> -> vector<16x8xf32>
    %c0_213 = arith.constant 0 : index
    %c0_214 = arith.constant 0 : index
    %c0_215 = arith.constant 0 : index
    %346 = vector.load %arg15[%c0_213, %c0_214, %c0_215] : memref<6x16x8xf32, #tpu.memory_space<vmem>>, vector<1x16x8xf32>
    %347 = vector.shape_cast %346 : vector<1x16x8xf32> to vector<16x8xf32>
    %348 = vector.shape_cast %345 : vector<16x8xf32> to vector<1x16x8xf32>
    tpu.vector_store %arg15[%c0_213, %c0_214, %c0_215], %348 {strides = array<i32>} : memref<6x16x8xf32, #tpu.memory_space<vmem>>, vector<1x16x8xf32>,
    %c1_216 = arith.constant 1 : index
    %c0_217 = arith.constant 0 : index
    %c0_218 = arith.constant 0 : index
    %349 = vector.load %arg14[%c1_216, %c0_217, %c0_218] : memref<6x8x16xf32, #tpu.memory_space<vmem>>, vector<1x8x16xf32>
    %350 = vector.shape_cast %349 : vector<1x8x16xf32> to vector<8x16xf32>
    %351 = tpu.transpose %350, [1, 0] : vector<8x16xf32> -> vector<16x8xf32>
    %c1_219 = arith.constant 1 : index
    %c0_220 = arith.constant 0 : index
    %c0_221 = arith.constant 0 : index
    %352 = vector.load %arg15[%c1_219, %c0_220, %c0_221] : memref<6x16x8xf32, #tpu.memory_space<vmem>>, vector<1x16x8xf32>
    %353 = vector.shape_cast %352 : vector<1x16x8xf32> to vector<16x8xf32>
    %354 = vector.shape_cast %351 : vector<16x8xf32> to vector<1x16x8xf32>
    tpu.vector_store %arg15[%c1_219, %c0_220, %c0_221], %354 {strides = array<i32>} : memref<6x16x8xf32, #tpu.memory_space<vmem>>, vector<1x16x8xf32>,
    %c2_222 = arith.constant 2 : index
    %c0_223 = arith.constant 0 : index
    %c0_224 = arith.constant 0 : index
    %355 = vector.load %arg14[%c2_222, %c0_223, %c0_224] : memref<6x8x16xf32, #tpu.memory_space<vmem>>, vector<1x8x16xf32>
    %356 = vector.shape_cast %355 : vector<1x8x16xf32> to vector<8x16xf32>
    %357 = tpu.transpose %356, [1, 0] : vector<8x16xf32> -> vector<16x8xf32>
    %c2_225 = arith.constant 2 : index
    %c0_226 = arith.constant 0 : index
    %c0_227 = arith.constant 0 : index
    %358 = vector.load %arg15[%c2_225, %c0_226, %c0_227] : memref<6x16x8xf32, #tpu.memory_space<vmem>>, vector<1x16x8xf32>
    %359 = vector.shape_cast %358 : vector<1x16x8xf32> to vector<16x8xf32>
    %360 = vector.shape_cast %357 : vector<16x8xf32> to vector<1x16x8xf32>
    tpu.vector_store %arg15[%c2_225, %c0_226, %c0_227], %360 {strides = array<i32>} : memref<6x16x8xf32, #tpu.memory_space<vmem>>, vector<1x16x8xf32>,
    %c3_228 = arith.constant 3 : index
    %c0_229 = arith.constant 0 : index
    %c0_230 = arith.constant 0 : index
    %361 = vector.load %arg14[%c3_228, %c0_229, %c0_230] : memref<6x8x16xf32, #tpu.memory_space<vmem>>, vector<1x8x16xf32>
    %362 = vector.shape_cast %361 : vector<1x8x16xf32> to vector<8x16xf32>
    %363 = tpu.transpose %362, [1, 0] : vector<8x16xf32> -> vector<16x8xf32>
    %c3_231 = arith.constant 3 : index
    %c0_232 = arith.constant 0 : index
    %c0_233 = arith.constant 0 : index
    %364 = vector.load %arg15[%c3_231, %c0_232, %c0_233] : memref<6x16x8xf32, #tpu.memory_space<vmem>>, vector<1x16x8xf32>
    %365 = vector.shape_cast %364 : vector<1x16x8xf32> to vector<16x8xf32>
    %366 = vector.shape_cast %363 : vector<16x8xf32> to vector<1x16x8xf32>
    tpu.vector_store %arg15[%c3_231, %c0_232, %c0_233], %366 {strides = array<i32>} : memref<6x16x8xf32, #tpu.memory_space<vmem>>, vector<1x16x8xf32>,
    %c4_234 = arith.constant 4 : index
    %c0_235 = arith.constant 0 : index
    %c0_236 = arith.constant 0 : index
    %367 = vector.load %arg14[%c4_234, %c0_235, %c0_236] : memref<6x8x16xf32, #tpu.memory_space<vmem>>, vector<1x8x16xf32>
    %368 = vector.shape_cast %367 : vector<1x8x16xf32> to vector<8x16xf32>
    %369 = tpu.transpose %368, [1, 0] : vector<8x16xf32> -> vector<16x8xf32>
    %c4_237 = arith.constant 4 : index
    %c0_238 = arith.constant 0 : index
    %c0_239 = arith.constant 0 : index
    %370 = vector.load %arg15[%c4_237, %c0_238, %c0_239] : memref<6x16x8xf32, #tpu.memory_space<vmem>>, vector<1x16x8xf32>
    %371 = vector.shape_cast %370 : vector<1x16x8xf32> to vector<16x8xf32>
    %372 = vector.shape_cast %369 : vector<16x8xf32> to vector<1x16x8xf32>
    tpu.vector_store %arg15[%c4_237, %c0_238, %c0_239], %372 {strides = array<i32>} : memref<6x16x8xf32, #tpu.memory_space<vmem>>, vector<1x16x8xf32>,
    %c5_240 = arith.constant 5 : index
    %c0_241 = arith.constant 0 : index
    %c0_242 = arith.constant 0 : index
    %373 = vector.load %arg14[%c5_240, %c0_241, %c0_242] : memref<6x8x16xf32, #tpu.memory_space<vmem>>, vector<1x8x16xf32>
    %374 = vector.shape_cast %373 : vector<1x8x16xf32> to vector<8x16xf32>
    %375 = tpu.transpose %374, [1, 0] : vector<8x16xf32> -> vector<16x8xf32>
    %c5_243 = arith.constant 5 : index
    %c0_244 = arith.constant 0 : index
    %c0_245 = arith.constant 0 : index
    %376 = vector.load %arg15[%c5_243, %c0_244, %c0_245] : memref<6x16x8xf32, #tpu.memory_space<vmem>>, vector<1x16x8xf32>
    %377 = vector.shape_cast %376 : vector<1x16x8xf32> to vector<16x8xf32>
    %378 = vector.shape_cast %375 : vector<16x8xf32> to vector<1x16x8xf32>
    tpu.vector_store %arg15[%c5_243, %c0_244, %c0_245], %378 {strides = array<i32>} : memref<6x16x8xf32, #tpu.memory_space<vmem>>, vector<1x16x8xf32>,
    %c0_246 = arith.constant 0 : index
    %c0_247 = arith.constant 0 : index
    %c0_248 = arith.constant 0 : index
    %379 = vector.load %arg16[%c0_246, %c0_247, %c0_248] : memref<4x8x16xf32, #tpu.memory_space<vmem>>, vector<1x8x16xf32>
    %380 = vector.shape_cast %379 : vector<1x8x16xf32> to vector<8x16xf32>
    %381 = tpu.transpose %380, [1, 0] : vector<8x16xf32> -> vector<16x8xf32>
    %c0_249 = arith.constant 0 : index
    %c0_250 = arith.constant 0 : index
    %c0_251 = arith.constant 0 : index
    %382 = vector.load %arg17[%c0_249, %c0_250, %c0_251] : memref<4x16x8xf32, #tpu.memory_space<vmem>>, vector<1x16x8xf32>
    %383 = vector.shape_cast %382 : vector<1x16x8xf32> to vector<16x8xf32>
    %384 = vector.shape_cast %381 : vector<16x8xf32> to vector<1x16x8xf32>
    tpu.vector_store %arg17[%c0_249, %c0_250, %c0_251], %384 {strides = array<i32>} : memref<4x16x8xf32, #tpu.memory_space<vmem>>, vector<1x16x8xf32>,
    %c1_252 = arith.constant 1 : index
    %c0_253 = arith.constant 0 : index
    %c0_254 = arith.constant 0 : index
    %385 = vector.load %arg16[%c1_252, %c0_253, %c0_254] : memref<4x8x16xf32, #tpu.memory_space<vmem>>, vector<1x8x16xf32>
    %386 = vector.shape_cast %385 : vector<1x8x16xf32> to vector<8x16xf32>
    %387 = tpu.transpose %386, [1, 0] : vector<8x16xf32> -> vector<16x8xf32>
    %c1_255 = arith.constant 1 : index
    %c0_256 = arith.constant 0 : index
    %c0_257 = arith.constant 0 : index
    %388 = vector.load %arg17[%c1_255, %c0_256, %c0_257] : memref<4x16x8xf32, #tpu.memory_space<vmem>>, vector<1x16x8xf32>
    %389 = vector.shape_cast %388 : vector<1x16x8xf32> to vector<16x8xf32>
    %390 = vector.shape_cast %387 : vector<16x8xf32> to vector<1x16x8xf32>
    tpu.vector_store %arg17[%c1_255, %c0_256, %c0_257], %390 {strides = array<i32>} : memref<4x16x8xf32, #tpu.memory_space<vmem>>, vector<1x16x8xf32>,
    %c2_258 = arith.constant 2 : index
    %c0_259 = arith.constant 0 : index
    %c0_260 = arith.constant 0 : index
    %391 = vector.load %arg16[%c2_258, %c0_259, %c0_260] : memref<4x8x16xf32, #tpu.memory_space<vmem>>, vector<1x8x16xf32>
    %392 = vector.shape_cast %391 : vector<1x8x16xf32> to vector<8x16xf32>
    %393 = tpu.transpose %392, [1, 0] : vector<8x16xf32> -> vector<16x8xf32>
    %c2_261 = arith.constant 2 : index
    %c0_262 = arith.constant 0 : index
    %c0_263 = arith.constant 0 : index
    %394 = vector.load %arg17[%c2_261, %c0_262, %c0_263] : memref<4x16x8xf32, #tpu.memory_space<vmem>>, vector<1x16x8xf32>
    %395 = vector.shape_cast %394 : vector<1x16x8xf32> to vector<16x8xf32>
    %396 = vector.shape_cast %393 : vector<16x8xf32> to vector<1x16x8xf32>
    tpu.vector_store %arg17[%c2_261, %c0_262, %c0_263], %396 {strides = array<i32>} : memref<4x16x8xf32, #tpu.memory_space<vmem>>, vector<1x16x8xf32>,
    %c3_264 = arith.constant 3 : index
    %c0_265 = arith.constant 0 : index
    %c0_266 = arith.constant 0 : index
    %397 = vector.load %arg16[%c3_264, %c0_265, %c0_266] : memref<4x8x16xf32, #tpu.memory_space<vmem>>, vector<1x8x16xf32>
    %398 = vector.shape_cast %397 : vector<1x8x16xf32> to vector<8x16xf32>
    %399 = tpu.transpose %398, [1, 0] : vector<8x16xf32> -> vector<16x8xf32>
    %c3_267 = arith.constant 3 : index
    %c0_268 = arith.constant 0 : index
    %c0_269 = arith.constant 0 : index
    %400 = vector.load %arg17[%c3_267, %c0_268, %c0_269] : memref<4x16x8xf32, #tpu.memory_space<vmem>>, vector<1x16x8xf32>
    %401 = vector.shape_cast %400 : vector<1x16x8xf32> to vector<16x8xf32>
    %402 = vector.shape_cast %399 : vector<16x8xf32> to vector<1x16x8xf32>
    tpu.vector_store %arg17[%c3_267, %c0_268, %c0_269], %402 {strides = array<i32>} : memref<4x16x8xf32, #tpu.memory_space<vmem>>, vector<1x16x8xf32>,
    %c0_270 = arith.constant 0 : index
    %403 = memref.load %arg12[%c0_270] : memref<8xi32, #tpu.memory_space<smem>>
    %c0_271 = arith.constant 0 : index
    %404 = arith.index_cast %403 : i32 to index
    %c0_272 = arith.constant 0 : index
    %405 = vector.load %arg15[%c0_271, %404, %c0_272] : memref<6x16x8xf32, #tpu.memory_space<vmem>>, vector<6x1x8xf32>
    %c0_273 = arith.constant 0 : index
    %c0_274 = arith.constant 0 : index
    %c0_275 = arith.constant 0 : index
    %c0_276 = arith.constant 0 : index
    %406 = vector.load %arg7[%c0_273, %c0_274, %c0_275, %c0_276] : memref<1x6x8x8xf32, #tpu.memory_space<vmem>>, vector<1x6x1x8xf32>
    %407 = vector.shape_cast %406 : vector<1x6x1x8xf32> to vector<6x1x8xf32>
    %408 = vector.shape_cast %405 : vector<6x1x8xf32> to vector<1x6x1x8xf32>
    tpu.vector_store %arg7[%c0_273, %c0_274, %c0_275, %c0_276], %408 {strides = array<i32>} : memref<1x6x8x8xf32, #tpu.memory_space<vmem>>, vector<1x6x1x8xf32>,
    %c0_277 = arith.constant 0 : index
    %409 = arith.index_cast %403 : i32 to index
    %c0_278 = arith.constant 0 : index
    %410 = vector.load %arg17[%c0_277, %409, %c0_278] : memref<4x16x8xf32, #tpu.memory_space<vmem>>, vector<4x1x8xf32>
    %c0_279 = arith.constant 0 : index
    %c0_280 = arith.constant 0 : index
    %c0_281 = arith.constant 0 : index
    %c0_282 = arith.constant 0 : index
    %411 = vector.load %arg11[%c0_279, %c0_280, %c0_281, %c0_282] : memref<1x4x8x8xf32, #tpu.memory_space<vmem>>, vector<1x4x1x8xf32>
    %412 = vector.shape_cast %411 : vector<1x4x1x8xf32> to vector<4x1x8xf32>
    %413 = vector.shape_cast %410 : vector<4x1x8xf32> to vector<1x4x1x8xf32>
    tpu.vector_store %arg11[%c0_279, %c0_280, %c0_281, %c0_282], %413 {strides = array<i32>} : memref<1x4x8x8xf32, #tpu.memory_space<vmem>>, vector<1x4x1x8xf32>,
    %c1_283 = arith.constant 1 : index
    %414 = memref.load %arg12[%c1_283] : memref<8xi32, #tpu.memory_space<smem>>
    %c0_284 = arith.constant 0 : index
    %415 = arith.index_cast %414 : i32 to index
    %c0_285 = arith.constant 0 : index
    %416 = vector.load %arg15[%c0_284, %415, %c0_285] : memref<6x16x8xf32, #tpu.memory_space<vmem>>, vector<6x1x8xf32>
    %c0_286 = arith.constant 0 : index
    %c0_287 = arith.constant 0 : index
    %c1_288 = arith.constant 1 : index
    %c0_289 = arith.constant 0 : index
    %417 = vector.load %arg7[%c0_286, %c0_287, %c1_288, %c0_289] : memref<1x6x8x8xf32, #tpu.memory_space<vmem>>, vector<1x6x1x8xf32>
    %418 = vector.shape_cast %417 : vector<1x6x1x8xf32> to vector<6x1x8xf32>
    %419 = vector.shape_cast %416 : vector<6x1x8xf32> to vector<1x6x1x8xf32>
    tpu.vector_store %arg7[%c0_286, %c0_287, %c1_288, %c0_289], %419 {strides = array<i32>} : memref<1x6x8x8xf32, #tpu.memory_space<vmem>>, vector<1x6x1x8xf32>,
    %c0_290 = arith.constant 0 : index
    %420 = arith.index_cast %414 : i32 to index
    %c0_291 = arith.constant 0 : index
    %421 = vector.load %arg17[%c0_290, %420, %c0_291] : memref<4x16x8xf32, #tpu.memory_space<vmem>>, vector<4x1x8xf32>
    %c0_292 = arith.constant 0 : index
    %c0_293 = arith.constant 0 : index
    %c1_294 = arith.constant 1 : index
    %c0_295 = arith.constant 0 : index
    %422 = vector.load %arg11[%c0_292, %c0_293, %c1_294, %c0_295] : memref<1x4x8x8xf32, #tpu.memory_space<vmem>>, vector<1x4x1x8xf32>
    %423 = vector.shape_cast %422 : vector<1x4x1x8xf32> to vector<4x1x8xf32>
    %424 = vector.shape_cast %421 : vector<4x1x8xf32> to vector<1x4x1x8xf32>
    tpu.vector_store %arg11[%c0_292, %c0_293, %c1_294, %c0_295], %424 {strides = array<i32>} : memref<1x4x8x8xf32, #tpu.memory_space<vmem>>, vector<1x4x1x8xf32>,
    %c2_296 = arith.constant 2 : index
    %425 = memref.load %arg12[%c2_296] : memref<8xi32, #tpu.memory_space<smem>>
    %c0_297 = arith.constant 0 : index
    %426 = arith.index_cast %425 : i32 to index
    %c0_298 = arith.constant 0 : index
    %427 = vector.load %arg15[%c0_297, %426, %c0_298] : memref<6x16x8xf32, #tpu.memory_space<vmem>>, vector<6x1x8xf32>
    %c0_299 = arith.constant 0 : index
    %c0_300 = arith.constant 0 : index
    %c2_301 = arith.constant 2 : index
    %c0_302 = arith.constant 0 : index
    %428 = vector.load %arg7[%c0_299, %c0_300, %c2_301, %c0_302] : memref<1x6x8x8xf32, #tpu.memory_space<vmem>>, vector<1x6x1x8xf32>
    %429 = vector.shape_cast %428 : vector<1x6x1x8xf32> to vector<6x1x8xf32>
    %430 = vector.shape_cast %427 : vector<6x1x8xf32> to vector<1x6x1x8xf32>
    tpu.vector_store %arg7[%c0_299, %c0_300, %c2_301, %c0_302], %430 {strides = array<i32>} : memref<1x6x8x8xf32, #tpu.memory_space<vmem>>, vector<1x6x1x8xf32>,
    %c0_303 = arith.constant 0 : index
    %431 = arith.index_cast %425 : i32 to index
    %c0_304 = arith.constant 0 : index
    %432 = vector.load %arg17[%c0_303, %431, %c0_304] : memref<4x16x8xf32, #tpu.memory_space<vmem>>, vector<4x1x8xf32>
    %c0_305 = arith.constant 0 : index
    %c0_306 = arith.constant 0 : index
    %c2_307 = arith.constant 2 : index
    %c0_308 = arith.constant 0 : index
    %433 = vector.load %arg11[%c0_305, %c0_306, %c2_307, %c0_308] : memref<1x4x8x8xf32, #tpu.memory_space<vmem>>, vector<1x4x1x8xf32>
    %434 = vector.shape_cast %433 : vector<1x4x1x8xf32> to vector<4x1x8xf32>
    %435 = vector.shape_cast %432 : vector<4x1x8xf32> to vector<1x4x1x8xf32>
    tpu.vector_store %arg11[%c0_305, %c0_306, %c2_307, %c0_308], %435 {strides = array<i32>} : memref<1x4x8x8xf32, #tpu.memory_space<vmem>>, vector<1x4x1x8xf32>,
    %c3_309 = arith.constant 3 : index
    %436 = memref.load %arg12[%c3_309] : memref<8xi32, #tpu.memory_space<smem>>
    %c0_310 = arith.constant 0 : index
    %437 = arith.index_cast %436 : i32 to index
    %c0_311 = arith.constant 0 : index
    %438 = vector.load %arg15[%c0_310, %437, %c0_311] : memref<6x16x8xf32, #tpu.memory_space<vmem>>, vector<6x1x8xf32>
    %c0_312 = arith.constant 0 : index
    %c0_313 = arith.constant 0 : index
    %c3_314 = arith.constant 3 : index
    %c0_315 = arith.constant 0 : index
    %439 = vector.load %arg7[%c0_312, %c0_313, %c3_314, %c0_315] : memref<1x6x8x8xf32, #tpu.memory_space<vmem>>, vector<1x6x1x8xf32>
    %440 = vector.shape_cast %439 : vector<1x6x1x8xf32> to vector<6x1x8xf32>
    %441 = vector.shape_cast %438 : vector<6x1x8xf32> to vector<1x6x1x8xf32>
    tpu.vector_store %arg7[%c0_312, %c0_313, %c3_314, %c0_315], %441 {strides = array<i32>} : memref<1x6x8x8xf32, #tpu.memory_space<vmem>>, vector<1x6x1x8xf32>,
    %c0_316 = arith.constant 0 : index
    %442 = arith.index_cast %436 : i32 to index
    %c0_317 = arith.constant 0 : index
    %443 = vector.load %arg17[%c0_316, %442, %c0_317] : memref<4x16x8xf32, #tpu.memory_space<vmem>>, vector<4x1x8xf32>
    %c0_318 = arith.constant 0 : index
    %c0_319 = arith.constant 0 : index
    %c3_320 = arith.constant 3 : index
    %c0_321 = arith.constant 0 : index
    %444 = vector.load %arg11[%c0_318, %c0_319, %c3_320, %c0_321] : memref<1x4x8x8xf32, #tpu.memory_space<vmem>>, vector<1x4x1x8xf32>
    %445 = vector.shape_cast %444 : vector<1x4x1x8xf32> to vector<4x1x8xf32>
    %446 = vector.shape_cast %443 : vector<4x1x8xf32> to vector<1x4x1x8xf32>
    tpu.vector_store %arg11[%c0_318, %c0_319, %c3_320, %c0_321], %446 {strides = array<i32>} : memref<1x4x8x8xf32, #tpu.memory_space<vmem>>, vector<1x4x1x8xf32>,
    %c4_322 = arith.constant 4 : index
    %447 = memref.load %arg12[%c4_322] : memref<8xi32, #tpu.memory_space<smem>>
    %c0_323 = arith.constant 0 : index
    %448 = arith.index_cast %447 : i32 to index
    %c0_324 = arith.constant 0 : index
    %449 = vector.load %arg15[%c0_323, %448, %c0_324] : memref<6x16x8xf32, #tpu.memory_space<vmem>>, vector<6x1x8xf32>
    %c0_325 = arith.constant 0 : index
    %c0_326 = arith.constant 0 : index
    %c4_327 = arith.constant 4 : index
    %c0_328 = arith.constant 0 : index
    %450 = vector.load %arg7[%c0_325, %c0_326, %c4_327, %c0_328] : memref<1x6x8x8xf32, #tpu.memory_space<vmem>>, vector<1x6x1x8xf32>
    %451 = vector.shape_cast %450 : vector<1x6x1x8xf32> to vector<6x1x8xf32>
    %452 = vector.shape_cast %449 : vector<6x1x8xf32> to vector<1x6x1x8xf32>
    tpu.vector_store %arg7[%c0_325, %c0_326, %c4_327, %c0_328], %452 {strides = array<i32>} : memref<1x6x8x8xf32, #tpu.memory_space<vmem>>, vector<1x6x1x8xf32>,
    %c0_329 = arith.constant 0 : index
    %453 = arith.index_cast %447 : i32 to index
    %c0_330 = arith.constant 0 : index
    %454 = vector.load %arg17[%c0_329, %453, %c0_330] : memref<4x16x8xf32, #tpu.memory_space<vmem>>, vector<4x1x8xf32>
    %c0_331 = arith.constant 0 : index
    %c0_332 = arith.constant 0 : index
    %c4_333 = arith.constant 4 : index
    %c0_334 = arith.constant 0 : index
    %455 = vector.load %arg11[%c0_331, %c0_332, %c4_333, %c0_334] : memref<1x4x8x8xf32, #tpu.memory_space<vmem>>, vector<1x4x1x8xf32>
    %456 = vector.shape_cast %455 : vector<1x4x1x8xf32> to vector<4x1x8xf32>
    %457 = vector.shape_cast %454 : vector<4x1x8xf32> to vector<1x4x1x8xf32>
    tpu.vector_store %arg11[%c0_331, %c0_332, %c4_333, %c0_334], %457 {strides = array<i32>} : memref<1x4x8x8xf32, #tpu.memory_space<vmem>>, vector<1x4x1x8xf32>,
    %c5_335 = arith.constant 5 : index
    %458 = memref.load %arg12[%c5_335] : memref<8xi32, #tpu.memory_space<smem>>
    %c0_336 = arith.constant 0 : index
    %459 = arith.index_cast %458 : i32 to index
    %c0_337 = arith.constant 0 : index
    %460 = vector.load %arg15[%c0_336, %459, %c0_337] : memref<6x16x8xf32, #tpu.memory_space<vmem>>, vector<6x1x8xf32>
    %c0_338 = arith.constant 0 : index
    %c0_339 = arith.constant 0 : index
    %c5_340 = arith.constant 5 : index
    %c0_341 = arith.constant 0 : index
    %461 = vector.load %arg7[%c0_338, %c0_339, %c5_340, %c0_341] : memref<1x6x8x8xf32, #tpu.memory_space<vmem>>, vector<1x6x1x8xf32>
    %462 = vector.shape_cast %461 : vector<1x6x1x8xf32> to vector<6x1x8xf32>
    %463 = vector.shape_cast %460 : vector<6x1x8xf32> to vector<1x6x1x8xf32>
    tpu.vector_store %arg7[%c0_338, %c0_339, %c5_340, %c0_341], %463 {strides = array<i32>} : memref<1x6x8x8xf32, #tpu.memory_space<vmem>>, vector<1x6x1x8xf32>,
    %c0_342 = arith.constant 0 : index
    %464 = arith.index_cast %458 : i32 to index
    %c0_343 = arith.constant 0 : index
    %465 = vector.load %arg17[%c0_342, %464, %c0_343] : memref<4x16x8xf32, #tpu.memory_space<vmem>>, vector<4x1x8xf32>
    %c0_344 = arith.constant 0 : index
    %c0_345 = arith.constant 0 : index
    %c5_346 = arith.constant 5 : index
    %c0_347 = arith.constant 0 : index
    %466 = vector.load %arg11[%c0_344, %c0_345, %c5_346, %c0_347] : memref<1x4x8x8xf32, #tpu.memory_space<vmem>>, vector<1x4x1x8xf32>
    %467 = vector.shape_cast %466 : vector<1x4x1x8xf32> to vector<4x1x8xf32>
    %468 = vector.shape_cast %465 : vector<4x1x8xf32> to vector<1x4x1x8xf32>
    tpu.vector_store %arg11[%c0_344, %c0_345, %c5_346, %c0_347], %468 {strides = array<i32>} : memref<1x4x8x8xf32, #tpu.memory_space<vmem>>, vector<1x4x1x8xf32>,
    %c6_348 = arith.constant 6 : index
    %469 = memref.load %arg12[%c6_348] : memref<8xi32, #tpu.memory_space<smem>>
    %c0_349 = arith.constant 0 : index
    %470 = arith.index_cast %469 : i32 to index
    %c0_350 = arith.constant 0 : index
    %471 = vector.load %arg15[%c0_349, %470, %c0_350] : memref<6x16x8xf32, #tpu.memory_space<vmem>>, vector<6x1x8xf32>
    %c0_351 = arith.constant 0 : index
    %c0_352 = arith.constant 0 : index
    %c6_353 = arith.constant 6 : index
    %c0_354 = arith.constant 0 : index
    %472 = vector.load %arg7[%c0_351, %c0_352, %c6_353, %c0_354] : memref<1x6x8x8xf32, #tpu.memory_space<vmem>>, vector<1x6x1x8xf32>
    %473 = vector.shape_cast %472 : vector<1x6x1x8xf32> to vector<6x1x8xf32>
    %474 = vector.shape_cast %471 : vector<6x1x8xf32> to vector<1x6x1x8xf32>
    tpu.vector_store %arg7[%c0_351, %c0_352, %c6_353, %c0_354], %474 {strides = array<i32>} : memref<1x6x8x8xf32, #tpu.memory_space<vmem>>, vector<1x6x1x8xf32>,
    %c0_355 = arith.constant 0 : index
    %475 = arith.index_cast %469 : i32 to index
    %c0_356 = arith.constant 0 : index
    %476 = vector.load %arg17[%c0_355, %475, %c0_356] : memref<4x16x8xf32, #tpu.memory_space<vmem>>, vector<4x1x8xf32>
    %c0_357 = arith.constant 0 : index
    %c0_358 = arith.constant 0 : index
    %c6_359 = arith.constant 6 : index
    %c0_360 = arith.constant 0 : index
    %477 = vector.load %arg11[%c0_357, %c0_358, %c6_359, %c0_360] : memref<1x4x8x8xf32, #tpu.memory_space<vmem>>, vector<1x4x1x8xf32>
    %478 = vector.shape_cast %477 : vector<1x4x1x8xf32> to vector<4x1x8xf32>
    %479 = vector.shape_cast %476 : vector<4x1x8xf32> to vector<1x4x1x8xf32>
    tpu.vector_store %arg11[%c0_357, %c0_358, %c6_359, %c0_360], %479 {strides = array<i32>} : memref<1x4x8x8xf32, #tpu.memory_space<vmem>>, vector<1x4x1x8xf32>,
    %c7_361 = arith.constant 7 : index
    %480 = memref.load %arg12[%c7_361] : memref<8xi32, #tpu.memory_space<smem>>
    %c0_362 = arith.constant 0 : index
    %481 = arith.index_cast %480 : i32 to index
    %c0_363 = arith.constant 0 : index
    %482 = vector.load %arg15[%c0_362, %481, %c0_363] : memref<6x16x8xf32, #tpu.memory_space<vmem>>, vector<6x1x8xf32>
    %c0_364 = arith.constant 0 : index
    %c0_365 = arith.constant 0 : index
    %c7_366 = arith.constant 7 : index
    %c0_367 = arith.constant 0 : index
    %483 = vector.load %arg7[%c0_364, %c0_365, %c7_366, %c0_367] : memref<1x6x8x8xf32, #tpu.memory_space<vmem>>, vector<1x6x1x8xf32>
    %484 = vector.shape_cast %483 : vector<1x6x1x8xf32> to vector<6x1x8xf32>
    %485 = vector.shape_cast %482 : vector<6x1x8xf32> to vector<1x6x1x8xf32>
    tpu.vector_store %arg7[%c0_364, %c0_365, %c7_366, %c0_367], %485 {strides = array<i32>} : memref<1x6x8x8xf32, #tpu.memory_space<vmem>>, vector<1x6x1x8xf32>,
    %c0_368 = arith.constant 0 : index
    %486 = arith.index_cast %480 : i32 to index
    %c0_369 = arith.constant 0 : index
    %487 = vector.load %arg17[%c0_368, %486, %c0_369] : memref<4x16x8xf32, #tpu.memory_space<vmem>>, vector<4x1x8xf32>
    %c0_370 = arith.constant 0 : index
    %c0_371 = arith.constant 0 : index
    %c7_372 = arith.constant 7 : index
    %c0_373 = arith.constant 0 : index
    %488 = vector.load %arg11[%c0_370, %c0_371, %c7_372, %c0_373] : memref<1x4x8x8xf32, #tpu.memory_space<vmem>>, vector<1x4x1x8xf32>
    %489 = vector.shape_cast %488 : vector<1x4x1x8xf32> to vector<4x1x8xf32>
    %490 = vector.shape_cast %487 : vector<4x1x8xf32> to vector<1x4x1x8xf32>
    tpu.vector_store %arg11[%c0_370, %c0_371, %c7_372, %c0_373], %490 {strides = array<i32>} : memref<1x4x8x8xf32, #tpu.memory_space<vmem>>, vector<1x4x1x8xf32>,
    return
  }
  func.func @transform_0(%arg0: i32, %arg1: memref<2xi32, #tpu.memory_space<smem>>, %arg2: memref<2x16xi32, #tpu.memory_space<smem>>) -> (i32, i32, i32) {
    %c0_i32 = arith.constant 0 : i32
    %c0_i32_0 = arith.constant 0 : i32
    %c0_i32_1 = arith.constant 0 : i32
    return %arg0, %c0_i32, %c0_i32_0 : i32, i32, i32
  }
  func.func @transform_1(%arg0: i32, %arg1: memref<2xi32, #tpu.memory_space<smem>>, %arg2: memref<2x16xi32, #tpu.memory_space<smem>>) -> (i32, i32, i32, i32) {
    %c0_i32 = arith.constant 0 : i32
    %c0_i32_0 = arith.constant 0 : i32
    %c0_i32_1 = arith.constant 0 : i32
    %c0_i32_2 = arith.constant 0 : i32
    return %arg0, %c0_i32, %c0_i32_0, %c0_i32_1 : i32, i32, i32, i32
  }
  func.func @transform_2(%arg0: i32, %arg1: memref<2xi32, #tpu.memory_space<smem>>, %arg2: memref<2x16xi32, #tpu.memory_space<smem>>) -> (i32, i32, i32) {
    %c0_i32 = arith.constant 0 : i32
    %c0_i32_0 = arith.constant 0 : i32
    %c0_i32_1 = arith.constant 0 : i32
    return %arg0, %c0_i32, %c0_i32_0 : i32, i32, i32
  }
  func.func @transform_3(%arg0: i32, %arg1: memref<2xi32, #tpu.memory_space<smem>>, %arg2: memref<2x16xi32, #tpu.memory_space<smem>>) -> (i32, i32, i32, i32) {
    %c0_i32 = arith.constant 0 : i32
    %c0_i32_0 = arith.constant 0 : i32
    %c0_i32_1 = arith.constant 0 : i32
    %c0_i32_2 = arith.constant 0 : i32
    return %arg0, %c0_i32, %c0_i32_0, %c0_i32_1 : i32, i32, i32, i32
  }
  func.func @transform_4(%arg0: i32, %arg1: memref<2xi32, #tpu.memory_space<smem>>, %arg2: memref<2x16xi32, #tpu.memory_space<smem>>) -> (i32, i32, i32, i32) {
    %c0_i32 = arith.constant 0 : i32
    %c0_i32_0 = arith.constant 0 : i32
    %c0_i32_1 = arith.constant 0 : i32
    %c0_i32_2 = arith.constant 0 : i32
    return %arg0, %c0_i32, %c0_i32_0, %c0_i32_1 : i32, i32, i32, i32
  }
  func.func @transform_5(%arg0: i32, %arg1: memref<2xi32, #tpu.memory_space<smem>>, %arg2: memref<2x16xi32, #tpu.memory_space<smem>>) -> (i32, i32, i32) {
    %c0_i32 = arith.constant 0 : i32
    %c0_i32_0 = arith.constant 0 : i32
    %c0_i32_1 = arith.constant 0 : i32
    return %arg0, %c0_i32, %c0_i32_0 : i32, i32, i32
  }
  func.func @transform_6(%arg0: i32, %arg1: memref<2xi32, #tpu.memory_space<smem>>, %arg2: memref<2x16xi32, #tpu.memory_space<smem>>) -> (i32, i32, i32) {
    %c0_i32 = arith.constant 0 : i32
    %c0_i32_0 = arith.constant 0 : i32
    %c0_i32_1 = arith.constant 0 : i32
    return %arg0, %c0_i32, %c0_i32_0 : i32, i32, i32
  }
  func.func @transform_7(%arg0: i32, %arg1: memref<2xi32, #tpu.memory_space<smem>>, %arg2: memref<2x16xi32, #tpu.memory_space<smem>>) -> (i32, i32, i32) {
    %c0_i32 = arith.constant 0 : i32
    %c0_i32_0 = arith.constant 0 : i32
    %c0_i32_1 = arith.constant 0 : i32
    return %arg0, %c0_i32, %c0_i32_0 : i32, i32, i32
  }
  func.func @transform_8(%arg0: i32, %arg1: memref<2xi32, #tpu.memory_space<smem>>, %arg2: memref<2x16xi32, #tpu.memory_space<smem>>) -> (i32, i32, i32, i32) {
    %c0_i32 = arith.constant 0 : i32
    %c0_i32_0 = arith.constant 0 : i32
    %c0_i32_1 = arith.constant 0 : i32
    %c0_i32_2 = arith.constant 0 : i32
    return %arg0, %c0_i32, %c0_i32_0, %c0_i32_1 : i32, i32, i32, i32
  }
}

</mosaic_0001>

<llo_original>
// kernel: tpu_custom_call.1
$region0: #{tpu_custom_call.1}
  #allocation0 [shape = 'u32[]', space=smem, size = 0x4, offset = 0x4, fixed_abs, tag = 'smem constant byte address 0x4 - core index']
  #allocation1 [shape = 'u32[144,128]{1,0:T(1,128)}', space=vmem, size = 0x12000, scoped, tag = 'internal scratch']
  #allocation2 [shape = 's32[8]{0:T(128)}', space=smem, size = 0x200, scoped, tag = 'scratch operand']
  #allocation3 [shape = 's32[8]{0:T(128)}', space=smem, size = 0x200, scoped, tag = 'scratch operand']
  #allocation4 [shape = 'f32[6,8,16]{2,1,0:T(8,128)}', space=vmem, size = 0x6000, scoped, tag = 'scratch operand']
  #allocation5 [shape = 'f32[6,16,8]{2,1,0:T(8,128)}', space=vmem, size = 0xc000, scoped, tag = 'scratch operand']
  #allocation6 [shape = 'f32[4,8,16]{2,1,0:T(8,128)}', space=vmem, size = 0x4000, scoped, tag = 'scratch operand']
  #allocation7 [shape = 'f32[4,16,8]{2,1,0:T(8,128)}', space=vmem, size = 0x8000, scoped, tag = 'scratch operand']
  #allocation8 [shape = 's32[1]{0}', space=sflag, size = 0x4, scoped, tag = 'scoped memory for tpu_custom_call.1']
  #allocation9 [shape = 'u8[512]{0}', space=smem, size = 0x200, scoped, tag = 'prefetched SMEM operand 0']
  #allocation10 [shape = 'u8[1024]{0}', space=smem, size = 0x400, scoped, tag = 'prefetched SMEM operand 1']
  %s0 = inlined_call_operand.hbm [shape: s32[2], index: 0, kind: input, shape index: {}]
  %s1 = inlined_call_operand.hbm [shape: s32[2,16], index: 1, kind: input, shape index: {}]
  %s2 = inlined_call_operand.hbm [shape: f32[2,16,16], index: 2, kind: input, shape index: {}]
  %s3 = inlined_call_operand.hbm [shape: f32[2,6,16,16], index: 3, kind: input, shape index: {}]
  %s4 = inlined_call_operand.hbm [shape: f32[2,16,8], index: 4, kind: input, shape index: {}]
  %s5 = inlined_call_operand.hbm [shape: f32[2,4,16,16], index: 5, kind: input, shape index: {}]
  %s6 = inlined_call_operand.hbm [shape: f32[2,6,8,8], index: 6, kind: output, shape index: {0}]
  %s7 = inlined_call_operand.hbm [shape: f32[2,8,8], index: 7, kind: output, shape index: {1}]
  %s8 = inlined_call_operand.hbm [shape: s32[2,1,8], index: 8, kind: output, shape index: {2}]
  %s9 = inlined_call_operand.hbm [shape: s32[2,1,8], index: 9, kind: output, shape index: {3}]
  %s10 = inlined_call_operand.hbm [shape: f32[2,4,8,8], index: 10, kind: output, shape index: {4}]
  %11 = xla_tuple %s6, %s7, %s8, %s9, %s10
  %s12 = sld [smem:[#allocation0]]
  $region97: #{tpu_custom_call.1} parent=0
    _
  %s14 = ssub.s32 1, %s12
  %s15 = scalar_select 0, %s14, %s12
  %17 = dma.hbm_to_smem %s0, 16, [#allocation9], [#allocation8]
  %19 = dma.hbm_to_smem %s1, 32, [#allocation10], [#allocation8]
  %20 = dma.done [#allocation8], 48
  %21 = sfence
  $region1: #{tpu_custom_call.1} parent=0
    #allocation11 [shape = 'u8[16384]{0}', space=vmem, size = 0x4000, scoped, tag = 'input window, operand 2']
    #allocation12 [shape = 's32[2]{0}', space=sflag, size = 0x8, scoped, tag = 'scoped memory for tpu_custom_call.1']
    #allocation13 [shape = 's32[2]{0}', space=sflag, size = 0x8, scoped, tag = 'scoped memory for tpu_custom_call.1']
    #allocation14 [shape = 'u8[98304]{0}', space=vmem, size = 0x18000, scoped, tag = 'input window, operand 3']
    #allocation15 [shape = 's32[2]{0}', space=sflag, size = 0x8, scoped, tag = 'scoped memory for tpu_custom_call.1']
    #allocation16 [shape = 'u8[16384]{0}', space=vmem, size = 0x4000, scoped, tag = 'input window, operand 4']
    #allocation17 [shape = 'u8[65536]{0}', space=vmem, size = 0x10000, scoped, tag = 'input window, operand 5']
    #allocation18 [shape = 's32[2]{0}', space=sflag, size = 0x8, scoped, tag = 'scoped memory for tpu_custom_call.1']
    #allocation19 [shape = 'u8[49152]{0}', space=vmem, size = 0xc000, scoped, tag = 'output window, operand 0']
    #allocation20 [shape = 'u8[8192]{0}', space=vmem, size = 0x2000, scoped, tag = 'output window, operand 1']
    #allocation21 [shape = 's32[2]{0}', space=sflag, size = 0x8, scoped, tag = 'scoped memory for tpu_custom_call.1']
    #allocation22 [shape = 'u8[1024]{0}', space=vmem, size = 0x400, scoped, tag = 'output window, operand 2']
    #allocation23 [shape = 'u8[1024]{0}', space=vmem, size = 0x400, scoped, tag = 'output window, operand 3']
    #allocation24 [shape = 's32[2]{0}', space=sflag, size = 0x8, scoped, tag = 'scoped memory for tpu_custom_call.1']
    #allocation25 [shape = 'u8[32768]{0}', space=vmem, size = 0x8000, scoped, tag = 'output window, operand 4']
    %22 = vsyncpa [#allocation12], 0
    %s23 = scalar_lea.sflag [#allocation12], 1
    %24 = vsyncpa %s23, 0
    %25 = vsyncpa [#allocation15], 0
    %s26 = scalar_lea.sflag [#allocation15], 1
    %27 = vsyncpa %s26, 0
    %28 = vsyncpa [#allocation18], 0
    %s29 = scalar_lea.sflag [#allocation18], 1
    %30 = vsyncpa %s29, 0
    %31 = vsyncpa [#allocation13], 0
    %s32 = scalar_lea.sflag [#allocation13], 1
    %33 = vsyncpa %s32, 0
    %34 = vsyncpa [#allocation21], 0
    %s35 = scalar_lea.sflag [#allocation21], 1
    %36 = vsyncpa %s35, 0
    %37 = vsyncpa [#allocation24], 0
    %s38 = scalar_lea.sflag [#allocation24], 1
    %39 = vsyncpa %s38, 0
    loop: start=0, step=1, limit=4
    $region2: #{tpu_custom_call.1} parent=1 // loop_pre_header
      _
    $region3: #{tpu_custom_call.1} parent=1 // loop_header
      %s41 = sphi 0, %s45
      %p42 = scmp.ge.s32.totalorder %s41, 4
      %s51 = sphi 0, %s53
      %s54 = sphi 0, %s51
      %s55 = sphi 0, %s54
      %s71 = sphi 0, %s55
      %s77 = sphi 0, %s79
      %s80 = sphi 0, %s77
      %s81 = sphi 0, %s80
      %s97 = sphi 0, %s81
      %s103 = sphi 0, %s105
      %s106 = sphi 0, %s103
      %s107 = sphi 0, %s106
      %s123 = sphi 0, %s107
      %s129 = sphi 0, %s131
      %s132 = sphi 0, %s129
      %s133 = sphi 0, %s132
      %s149 = sphi 0, %s133
      %s155 = sphi 0, %s157
      %s158 = sphi 0, %s155
      %s159 = sphi 0, %s158
      %s175 = sphi 0, %s159
      %s181 = sphi 0, %s183
      %s184 = sphi 0, %s181
      %s185 = sphi 0, %s184
      %s201 = sphi 0, %s185
      %s207 = sphi 0, %s209
      %s210 = sphi 0, %s207
      %s211 = sphi 0, %s210
      %s227 = sphi 0, %s211
      %s233 = sphi 0, %s235
      %s236 = sphi 0, %s233
      %s237 = sphi 0, %s236
      %s253 = sphi 0, %s237
      %s259 = sphi 0, %s261
      %s262 = sphi 0, %s259
      %s263 = sphi 0, %s262
      %s279 = sphi 0, %s263
    $region4: #{tpu_custom_call.1} parent=1 // loop_header_branch
      %44 = sbr.rel (%p42) target = $region8
    $region5: #{tpu_custom_call.1} parent=1 // loop_body
      %s46 = ssub.s32 %s41, 1
      %s47 = ssub.s32 %s41, 2
      %s48 = sadd.s32 %s41, 1
      %s49 = ssub.s32 %s41, %s48
      %p50 = scmp.eq.s32.totalorder %s49, 0
      %s52 = sadd.s32 %s51, 1
      %s53 = scalar_select %p50, %s51, %s52
      %p56 = pneg %p50
      %p57 = scmp.eq.s32.totalorder %s41, 1
      %p58 = por %p56, %p57
      %p59 = scmp.ne.s32.totalorder %s51, %s54
      %p60 = scmp.eq.s32.totalorder %s41, 0
      %p61 = por %p59, %p60
      %p62 = scmp.ne.s32.totalorder %s51, %s54
      %p63 = scmp.eq.s32.totalorder %s46, 1
      %p64 = por %p62, %p63
      %p65 = scmp.ne.s32.totalorder %s54, %s55
      %p66 = scmp.eq.s32.totalorder %s46, 0
      %p67 = por %p65, %p66
      %p68 = scmp.ne.s32.totalorder %s54, %s55
      %p69 = scmp.eq.s32.totalorder %s47, 1
      %p70 = por %p68, %p69
      %p72 = scmp.ne.s32.totalorder %s55, %s71
      %p73 = scmp.eq.s32.totalorder %s47, 0
      %p74 = por %p72, %p73
      %s75 = ssub.s32 %s41, %s48
      %p76 = scmp.eq.s32.totalorder %s75, 0
      %s78 = sadd.s32 %s77, 1
      %s79 = scalar_select %p76, %s77, %s78
      %p82 = pneg %p76
      %p83 = scmp.eq.s32.totalorder %s41, 1
      %p84 = por %p82, %p83
      %p85 = scmp.ne.s32.totalorder %s77, %s80
      %p86 = scmp.eq.s32.totalorder %s41, 0
      %p87 = por %p85, %p86
      %p88 = scmp.ne.s32.totalorder %s77, %s80
      %p89 = scmp.eq.s32.totalorder %s46, 1
      %p90 = por %p88, %p89
      %p91 = scmp.ne.s32.totalorder %s80, %s81
      %p92 = scmp.eq.s32.totalorder %s46, 0
      %p93 = por %p91, %p92
      %p94 = scmp.ne.s32.totalorder %s80, %s81
      %p95 = scmp.eq.s32.totalorder %s47, 1
      %p96 = por %p94, %p95
      %p98 = scmp.ne.s32.totalorder %s81, %s97
      %p99 = scmp.eq.s32.totalorder %s47, 0
      %p100 = por %p98, %p99
      %s101 = ssub.s32 %s41, %s48
      %p102 = scmp.eq.s32.totalorder %s101, 0
      %s104 = sadd.s32 %s103, 1
      %s105 = scalar_select %p102, %s103, %s104
      %p108 = pneg %p102
      %p109 = scmp.eq.s32.totalorder %s41, 1
      %p110 = por %p108, %p109
      %p111 = scmp.ne.s32.totalorder %s103, %s106
      %p112 = scmp.eq.s32.totalorder %s41, 0
      %p113 = por %p111, %p112
      %p114 = scmp.ne.s32.totalorder %s103, %s106
      %p115 = scmp.eq.s32.totalorder %s46, 1
      %p116 = por %p114, %p115
      %p117 = scmp.ne.s32.totalorder %s106, %s107
      %p118 = scmp.eq.s32.totalorder %s46, 0
      %p119 = por %p117, %p118
      %p120 = scmp.ne.s32.totalorder %s106, %s107
      %p121 = scmp.eq.s32.totalorder %s47, 1
      %p122 = por %p120, %p121
      %p124 = scmp.ne.s32.totalorder %s107, %s123
      %p125 = scmp.eq.s32.totalorder %s47, 0
      %p126 = por %p124, %p125
      %s127 = ssub.s32 %s41, %s48
      %p128 = scmp.eq.s32.totalorder %s127, 0
      %s130 = sadd.s32 %s129, 1
      %s131 = scalar_select %p128, %s129, %s130
      %p134 = pneg %p128
      %p135 = scmp.eq.s32.totalorder %s41, 1
      %p136 = por %p134, %p135
      %p137 = scmp.ne.s32.totalorder %s129, %s132
      %p138 = scmp.eq.s32.totalorder %s41, 0
      %p139 = por %p137, %p138
      %p140 = scmp.ne.s32.totalorder %s129, %s132
      %p141 = scmp.eq.s32.totalorder %s46, 1
      %p142 = por %p140, %p141
      %p143 = scmp.ne.s32.totalorder %s132, %s133
      %p144 = scmp.eq.s32.totalorder %s46, 0
      %p145 = por %p143, %p144
      %p146 = scmp.ne.s32.totalorder %s132, %s133
      %p147 = scmp.eq.s32.totalorder %s47, 1
      %p148 = por %p146, %p147
      %p150 = scmp.ne.s32.totalorder %s133, %s149
      %p151 = scmp.eq.s32.totalorder %s47, 0
      %p152 = por %p150, %p151
      %s153 = ssub.s32 %s41, %s48
      %p154 = scmp.eq.s32.totalorder %s153, 0
      %s156 = sadd.s32 %s155, 1
      %s157 = scalar_select %p154, %s155, %s156
      %p160 = pneg %p154
      %p161 = scmp.eq.s32.totalorder %s41, 1
      %p162 = por %p160, %p161
      %p163 = scmp.ne.s32.totalorder %s155, %s158
      %p164 = scmp.eq.s32.totalorder %s41, 0
      %p165 = por %p163, %p164
      %p166 = scmp.ne.s32.totalorder %s155, %s158
      %p167 = scmp.eq.s32.totalorder %s46, 1
      %p168 = por %p166, %p167
      %p169 = scmp.ne.s32.totalorder %s158, %s159
      %p170 = scmp.eq.s32.totalorder %s46, 0
      %p171 = por %p169, %p170
      %p172 = scmp.ne.s32.totalorder %s158, %s159
      %p173 = scmp.eq.s32.totalorder %s47, 1
      %p174 = por %p172, %p173
      %p176 = scmp.ne.s32.totalorder %s159, %s175
      %p177 = scmp.eq.s32.totalorder %s47, 0
      %p178 = por %p176, %p177
      %s179 = ssub.s32 %s41, %s48
      %p180 = scmp.eq.s32.totalorder %s179, 0
      %s182 = sadd.s32 %s181, 1
      %s183 = scalar_select %p180, %s181, %s182
      %p186 = pneg %p180
      %p187 = scmp.eq.s32.totalorder %s41, 1
      %p188 = por %p186, %p187
      %p189 = scmp.ne.s32.totalorder %s181, %s184
      %p190 = scmp.eq.s32.totalorder %s41, 0
      %p191 = por %p189, %p190
      %p192 = scmp.ne.s32.totalorder %s181, %s184
      %p193 = scmp.eq.s32.totalorder %s46, 1
      %p194 = por %p192, %p193
      %p195 = scmp.ne.s32.totalorder %s184, %s185
      %p196 = scmp.eq.s32.totalorder %s46, 0
      %p197 = por %p195, %p196
      %p198 = scmp.ne.s32.totalorder %s184, %s185
      %p199 = scmp.eq.s32.totalorder %s47, 1
      %p200 = por %p198, %p199
      %p202 = scmp.ne.s32.totalorder %s185, %s201
      %p203 = scmp.eq.s32.totalorder %s47, 0
      %p204 = por %p202, %p203
      %s205 = ssub.s32 %s41, %s48
      %p206 = scmp.eq.s32.totalorder %s205, 0
      %s208 = sadd.s32 %s207, 1
      %s209 = scalar_select %p206, %s207, %s208
      %p212 = pneg %p206
      %p213 = scmp.eq.s32.totalorder %s41, 1
      %p214 = por %p212, %p213
      %p215 = scmp.ne.s32.totalorder %s207, %s210
      %p216 = scmp.eq.s32.totalorder %s41, 0
      %p217 = por %p215, %p216
      %p218 = scmp.ne.s32.totalorder %s207, %s210
      %p219 = scmp.eq.s32.totalorder %s46, 1
      %p220 = por %p218, %p219
      %p221 = scmp.ne.s32.totalorder %s210, %s211
      %p222 = scmp.eq.s32.totalorder %s46, 0
      %p223 = por %p221, %p222
      %p224 = scmp.ne.s32.totalorder %s210, %s211
      %p225 = scmp.eq.s32.totalorder %s47, 1
      %p226 = por %p224, %p225
      %p228 = scmp.ne.s32.totalorder %s211, %s227
      %p229 = scmp.eq.s32.totalorder %s47, 0
      %p230 = por %p228, %p229
      %s231 = ssub.s32 %s41, %s48
      %p232 = scmp.eq.s32.totalorder %s231, 0
      %s234 = sadd.s32 %s233, 1
      %s235 = scalar_select %p232, %s233, %s234
      %p238 = pneg %p232
      %p239 = scmp.eq.s32.totalorder %s41, 1
      %p240 = por %p238, %p239
      %p241 = scmp.ne.s32.totalorder %s233, %s236
      %p242 = scmp.eq.s32.totalorder %s41, 0
      %p243 = por %p241, %p242
      %p244 = scmp.ne.s32.totalorder %s233, %s236
      %p245 = scmp.eq.s32.totalorder %s46, 1
      %p246 = por %p244, %p245
      %p247 = scmp.ne.s32.totalorder %s236, %s237
      %p248 = scmp.eq.s32.totalorder %s46, 0
      %p249 = por %p247, %p248
      %p250 = scmp.ne.s32.totalorder %s236, %s237
      %p251 = scmp.eq.s32.totalorder %s47, 1
      %p252 = por %p250, %p251
      %p254 = scmp.ne.s32.totalorder %s237, %s253
      %p255 = scmp.eq.s32.totalorder %s47, 0
      %p256 = por %p254, %p255
      %s257 = ssub.s32 %s41, %s48
      %p258 = scmp.eq.s32.totalorder %s257, 0
      %s260 = sadd.s32 %s259, 1
      %s261 = scalar_select %p258, %s259, %s260
      %p264 = pneg %p258
      %p265 = scmp.eq.s32.totalorder %s41, 1
      %p266 = por %p264, %p265
      %p267 = scmp.ne.s32.totalorder %s259, %s262
      %p268 = scmp.eq.s32.totalorder %s41, 0
      %p269 = por %p267, %p268
      %p270 = scmp.ne.s32.totalorder %s259, %s262
      %p271 = scmp.eq.s32.totalorder %s46, 1
      %p272 = por %p270, %p271
      %p273 = scmp.ne.s32.totalorder %s262, %s263
      %p274 = scmp.eq.s32.totalorder %s46, 0
      %p275 = por %p273, %p274
      %p276 = scmp.ne.s32.totalorder %s262, %s263
      %p277 = scmp.eq.s32.totalorder %s47, 1
      %p278 = por %p276, %p277
      %p280 = scmp.ne.s32.totalorder %s263, %s279
      %p281 = scmp.eq.s32.totalorder %s47, 0
      %p282 = por %p280, %p281
      %p283 = scmp.le.s32.totalorder 1, %s41
      %p284 = scmp.lt.s32.totalorder %s41, 3
      %p285 = pnand %p283, %p284
      %p286 = pneg %p285
      // Predicated region
      $region9: #{tpu_custom_call.1} parent=5 // pred_check
        _
      $region10: #{tpu_custom_call.1} parent=5 // pred_check_branch
        %288 = sbr.rel (%p285) target = $region12
      $region11: #{tpu_custom_call.1} parent=5 // pred_region
        %s289 = ssub.s32 %s41, 1
      $region12: #{tpu_custom_call.1} parent=5 // pred_fallthru
        _
      %p290 = scmp.lt.s32.totalorder %s41, 2
      // Predicated region
      $region13: #{tpu_custom_call.1} parent=5 // pred_check
        %p291 = pneg %p290
      $region14: #{tpu_custom_call.1} parent=5 // pred_check_branch
        %293 = sbr.rel (%p291) target = $region16
      $region15: #{tpu_custom_call.1} parent=5 // pred_region
        // Predicated region
        $region17: #{tpu_custom_call.1} parent=15 // pred_check
          %p294 = pneg %p61
        $region18: #{tpu_custom_call.1} parent=15 // pred_check_branch
          %296 = sbr.rel (%p294) target = $region20
        $region19: #{tpu_custom_call.1} parent=15 // pred_region
          %s297 = sand.u32 %s51, 1
          %s298 = scalar_lea.sflag [#allocation12], %s297
          %s299 = sand.u32 %s51, 1
          %s300 = smul.addr %s299, 16
          %s301 = scalar_lea.vmem [#allocation11], %s300
          %s303 = ssub.s32 256, 256
          %304 = vsyncadd %s298, %s303
          %s305 = smul.addr %s41, 2
          %s306 = smul.addr %s305, 128
          %s307 = scalar_lea.hbm %s2, %s306
          %s308 = sshll.u32 %s301, 4
          %s309 = int_to_ptr.vmem [resolvable:$true] %s308
          %314 = dma.hbm_to_vmem [thread:$0]  %s307, 256, %s309, %s298, 128, 128, 8
        $region20: #{tpu_custom_call.1} parent=15 // pred_fallthru
          _
        // Predicated region
        $region21: #{tpu_custom_call.1} parent=15 // pred_check
          %p315 = pneg %p87
        $region22: #{tpu_custom_call.1} parent=15 // pred_check_branch
          %317 = sbr.rel (%p315) target = $region24
        $region23: #{tpu_custom_call.1} parent=15 // pred_region
          %s318 = sand.u32 %s41, 1
          %s319 = scalar_lea.sflag [#allocation15], %s318
          %s320 = sand.u32 %s77, 1
          %s321 = smul.addr %s320, 96
          %s322 = scalar_lea.vmem [#allocation14], %s321
          %s324 = ssub.s32 1536, 1536
          %325 = vsyncadd %s319, %s324
          %s326 = smul.addr %s41, 12
          %s327 = smul.addr %s326, 128
          %s328 = scalar_lea.hbm %s3, %s327
          %s329 = sshll.u32 %s322, 4
          %s330 = int_to_ptr.vmem [resolvable:$true] %s329
          %335 = dma.hbm_to_vmem [thread:$0]  %s328, 1536, %s330, %s319, 128, 128, 8
        $region24: #{tpu_custom_call.1} parent=15 // pred_fallthru
          _
        // Predicated region
        $region25: #{tpu_custom_call.1} parent=15 // pred_check
          %p336 = pneg %p113
        $region26: #{tpu_custom_call.1} parent=15 // pred_check_branch
          %338 = sbr.rel (%p336) target = $region28
        $region27: #{tpu_custom_call.1} parent=15 // pred_region
          %s339 = sand.u32 %s41, 1
          %s340 = scalar_lea.sflag [#allocation15], %s339
          %s341 = sand.u32 %s103, 1
          %s342 = smul.addr %s341, 16
          %s343 = scalar_lea.vmem [#allocation16], %s342
          %s345 = ssub.s32 256, 256
          %346 = vsyncadd %s340, %s345
          %s347 = smul.addr %s41, 2
          %s348 = smul.addr %s347, 128
          %s349 = scalar_lea.hbm %s4, %s348
          %s350 = sshll.u32 %s343, 4
          %s351 = int_to_ptr.vmem [resolvable:$true] %s350
          %356 = dma.hbm_to_vmem [thread:$0]  %s349, 256, %s351, %s340, 128, 128, 8
        $region28: #{tpu_custom_call.1} parent=15 // pred_fallthru
          _
        // Predicated region
        $region29: #{tpu_custom_call.1} parent=15 // pred_check
          %p357 = pneg %p139
        $region30: #{tpu_custom_call.1} parent=15 // pred_check_branch
          %359 = sbr.rel (%p357) target = $region32
        $region31: #{tpu_custom_call.1} parent=15 // pred_region
          %s360 = sand.u32 %s129, 1
          %s361 = scalar_lea.sflag [#allocation18], %s360
          %s362 = sand.u32 %s129, 1
          %s363 = smul.addr %s362, 64
          %s364 = scalar_lea.vmem [#allocation17], %s363
          %s366 = ssub.s32 1024, 1024
          %367 = vsyncadd %s361, %s366
          %s368 = smul.addr %s41, 8
          %s369 = smul.addr %s368, 128
          %s370 = scalar_lea.hbm %s5, %s369
          %s371 = sshll.u32 %s364, 4
          %s372 = int_to_ptr.vmem [resolvable:$true] %s371
          %377 = dma.hbm_to_vmem [thread:$0]  %s370, 1024, %s372, %s361, 128, 128, 8
        $region32: #{tpu_custom_call.1} parent=15 // pred_fallthru
          _
      $region16: #{tpu_custom_call.1} parent=5 // pred_fallthru
        _
      %p378 = scmp.le.s32.totalorder 1, %s41
      %p379 = scmp.lt.s32.totalorder %s41, 3
      %p380 = pnand %p378, %p379
      %p381 = pneg %p380
      // Predicated region
      $region33: #{tpu_custom_call.1} parent=5 // pred_check
        _
      $region34: #{tpu_custom_call.1} parent=5 // pred_check_branch
        %383 = sbr.rel (%p380) target = $region36
      $region35: #{tpu_custom_call.1} parent=5 // pred_region
        %s384 = ssub.s32 %s41, 1
        %s385 = sand.u32 %s54, 1
        %s386 = scalar_lea.sflag [#allocation12], %s385
        %s387 = sand.u32 %s54, 1
        %s388 = smul.addr %s387, 16
        %s389 = scalar_lea.vmem [#allocation11], %s388
        // Predicated region
        $region37: #{tpu_custom_call.1} parent=35 // pred_check
          %p390 = pneg %p67
        $region38: #{tpu_custom_call.1} parent=35 // pred_check_branch
          %392 = sbr.rel (%p390) target = $region40
        $region39: #{tpu_custom_call.1} parent=35 // pred_region
          %393 = dma.done %s386, 256
        $region40: #{tpu_custom_call.1} parent=35 // pred_fallthru
          _
        %s394 = sand.u32 %s46, 1
        %s395 = scalar_lea.sflag [#allocation15], %s394
        %s396 = sand.u32 %s80, 1
        %s397 = smul.addr %s396, 96
        %s398 = scalar_lea.vmem [#allocation14], %s397
        // Predicated region
        $region41: #{tpu_custom_call.1} parent=35 // pred_check
          %p399 = pneg %p93
        $region42: #{tpu_custom_call.1} parent=35 // pred_check_branch
          %401 = sbr.rel (%p399) target = $region44
        $region43: #{tpu_custom_call.1} parent=35 // pred_region
          %402 = dma.done %s395, 1536
        $region44: #{tpu_custom_call.1} parent=35 // pred_fallthru
          _
        %s403 = sand.u32 %s46, 1
        %s404 = scalar_lea.sflag [#allocation15], %s403
        %s405 = sand.u32 %s106, 1
        %s406 = smul.addr %s405, 16
        %s407 = scalar_lea.vmem [#allocation16], %s406
        // Predicated region
        $region45: #{tpu_custom_call.1} parent=35 // pred_check
          %p408 = pneg %p119
        $region46: #{tpu_custom_call.1} parent=35 // pred_check_branch
          %410 = sbr.rel (%p408) target = $region48
        $region47: #{tpu_custom_call.1} parent=35 // pred_region
          %411 = dma.done %s404, 256
        $region48: #{tpu_custom_call.1} parent=35 // pred_fallthru
          _
        %s412 = sand.u32 %s132, 1
        %s413 = scalar_lea.sflag [#allocation18], %s412
        %s414 = sand.u32 %s132, 1
        %s415 = smul.addr %s414, 64
        %s416 = scalar_lea.vmem [#allocation17], %s415
        // Predicated region
        $region49: #{tpu_custom_call.1} parent=35 // pred_check
          %p417 = pneg %p145
        $region50: #{tpu_custom_call.1} parent=35 // pred_check_branch
          %419 = sbr.rel (%p417) target = $region52
        $region51: #{tpu_custom_call.1} parent=35 // pred_region
          %420 = dma.done %s413, 1024
        $region52: #{tpu_custom_call.1} parent=35 // pred_fallthru
          _
        %s421 = sand.u32 %s54, 1
        %s422 = scalar_lea.sflag [#allocation12], %s421
        %s423 = sand.u32 %s54, 1
        %s424 = smul.addr %s423, 16
        %s425 = scalar_lea.vmem [#allocation11], %s424
        %p426 = pneg %p67
        %p427 = pneg %p64
        %s428 = sand.u32 %s46, 1
        %s429 = scalar_lea.sflag [#allocation15], %s428
        %s430 = sand.u32 %s80, 1
        %s431 = smul.addr %s430, 96
        %s432 = scalar_lea.vmem [#allocation14], %s431
        %p433 = pneg %p93
        %p434 = pneg %p90
        %s435 = sand.u32 %s46, 1
        %s436 = scalar_lea.sflag [#allocation15], %s435
        %s437 = sand.u32 %s106, 1
        %s438 = smul.addr %s437, 16
        %s439 = scalar_lea.vmem [#allocation16], %s438
        %p440 = pneg %p119
        %p441 = pneg %p116
        %s442 = sand.u32 %s132, 1
        %s443 = scalar_lea.sflag [#allocation18], %s442
        %s444 = sand.u32 %s132, 1
        %s445 = smul.addr %s444, 64
        %s446 = scalar_lea.vmem [#allocation17], %s445
        %p447 = pneg %p145
        %p448 = pneg %p142
        %p449 = pneg %p171
        %p450 = pneg %p168
        %s451 = sand.u32 %s158, 1
        %s452 = scalar_lea.sflag [#allocation13], %s451
        %s453 = sand.u32 %s158, 1
        %s454 = smul.addr %s453, 48
        %s455 = scalar_lea.vmem [#allocation19], %s454
        %p456 = pneg %p197
        %p457 = pneg %p194
        %s458 = sand.u32 %s46, 1
        %s459 = scalar_lea.sflag [#allocation21], %s458
        %s460 = sand.u32 %s184, 1
        %s461 = smul.addr %s460, 8
        %s462 = scalar_lea.vmem [#allocation20], %s461
        %p463 = pneg %p223
        %p464 = pneg %p220
        %s465 = sand.u32 %s46, 1
        %s466 = scalar_lea.sflag [#allocation21], %s465
        %s467 = sand.u32 %s210, 1
        %s468 = scalar_lea.vmem [#allocation22], %s467
        %p469 = pneg %p249
        %p470 = pneg %p246
        %s471 = sand.u32 %s46, 1
        %s472 = scalar_lea.sflag [#allocation24], %s471
        %s473 = sand.u32 %s236, 1
        %s474 = scalar_lea.vmem [#allocation23], %s473
        %p475 = pneg %p275
        %p476 = pneg %p272
        %s477 = sand.u32 %s46, 1
        %s478 = scalar_lea.sflag [#allocation24], %s477
        %s479 = sand.u32 %s262, 1
        %s480 = smul.addr %s479, 32
        %s481 = scalar_lea.vmem [#allocation25], %s480
        %v482 = vlaneseq
        %v483 = vand.u32 %v482, 127
        %s484 = sld [smem:[#allocation9 + %s46]]
        %s485 = scalar_lea.smem [#allocation2], 0
        %486 = sst [smem:[%s485]] %s484
        %s487 = sshra.s32 %s484, 7
        %s488 = sand.u32 %s484, 127
        %s489 = sadd.s32 %s487, %s46
        %s490 = smul.u32 %s489, 128
        %s491 = sshra.s32 %s484, 7
        %s492 = sand.u32 %s484, 127
        %s493 = sadd.s32 %s490, %s492
        %s494 = sld [smem:[#allocation10 + %s493]]
        %s495 = scalar_lea.smem [#allocation3], 0
        %496 = sst [smem:[%s495]] %s494
        %s497 = scalar_lea.vmem %s389, %s484 [#allocation11]
        %v498 = vld [vmem:[%s497] sm:$0x1]
        %v499 = vmin.f32 %v498, 1e+08
        %vm500 = vcmask 122880
        %v501 = vsel %vm500, %v499, -inf
        %502 = vmax.xlane.f32.xlu0 %v501
        %v503 = vpop.xlane.xlu0 %502
        %vm504 = vcmp.ge.f32.partialorder %v499, %v503
        %v505 = vsel %vm504, %v483, 16
        %v506 = vsel %vm500, %v505, 2147483647
        %v507 = vand.u32 %v506, 65535
        %v508 = vshra.s32 %v506, 16
        %v509 = vcvt.s32.f32 %v507
        %v510 = vcvt.s32.f32 %v508
        %511 = vmin.xlane.f32.xlu0 %v510
        %v512 = vpop.xlane.xlu0 %511
        %vm513 = vcmp.eq.f32.partialorder %v510, %v512
        %v514 = vsel %vm513, %v509, inf
        %515 = vmin.xlane.f32.xlu0 %v514
        %v516 = vpop.xlane.xlu0 %515
        %v517 = vcvt.f32.s32 %v516
        %v518 = vcvt.f32.s32 %v512
        %v519 = vshll.u32 %v518, 16
        %v520 = vadd.s32 %v519, %v517
        %v521 = vrot.slane %v520, 4
        %vm522 = vcmp.lt.s32.totalorder %v520, %v521
        %v523 = vsel %vm522, %v520, %v521
        %v524 = vrot.slane %v523, 2
        %vm525 = vcmp.lt.s32.totalorder %v523, %v524
        %v526 = vsel %vm525, %v523, %v524
        %v527 = vrot.slane %v526, 1
        %vm528 = vcmp.lt.s32.totalorder %v526, %v527
        %v529 = vsel %vm528, %v526, %v527
        %s530 = vtos %v529
        %s531 = scalar_lea.smem [#allocation2], 1
        %532 = sst [smem:[%s531]] %s530
        %s533 = sshra.s32 %s530, 7
        %s534 = sand.u32 %s530, 127
        %s535 = sadd.s32 %s533, %s46
        %s536 = smul.u32 %s535, 128
        %s537 = sshra.s32 %s530, 7
        %s538 = sand.u32 %s530, 127
        %s539 = sadd.s32 %s536, %s538
        %s540 = sld [smem:[#allocation10 + %s539]]
        %s541 = scalar_lea.smem [#allocation3], 1
        %542 = sst [smem:[%s541]] %s540
        %s543 = scalar_lea.vmem %s389, %s530 [#allocation11]
        %v544 = vld [vmem:[%s543] sm:$0x1]
        %v545 = vmin.f32 %v499, %v544
        %v546 = vsel %vm500, %v545, -inf
        %547 = vmax.xlane.f32.xlu0 %v546
        %v548 = vpop.xlane.xlu0 %547
        %vm549 = vcmp.ge.f32.partialorder %v545, %v548
        %v550 = vsel %vm549, %v483, 16
        %v551 = vsel %vm500, %v550, 2147483647
        %v552 = vand.u32 %v551, 65535
        %v553 = vshra.s32 %v551, 16
        %v554 = vcvt.s32.f32 %v552
        %v555 = vcvt.s32.f32 %v553
        %556 = vmin.xlane.f32.xlu0 %v555
        %v557 = vpop.xlane.xlu0 %556
        %vm558 = vcmp.eq.f32.partialorder %v555, %v557
        %v559 = vsel %vm558, %v554, inf
        %560 = vmin.xlane.f32.xlu0 %v559
        %v561 = vpop.xlane.xlu0 %560
        %v562 = vcvt.f32.s32 %v561
        %v563 = vcvt.f32.s32 %v557
        %v564 = vshll.u32 %v563, 16
        %v565 = vadd.s32 %v564, %v562
        %v566 = vrot.slane %v565, 4
        %vm567 = vcmp.lt.s32.totalorder %v565, %v566
        %v568 = vsel %vm567, %v565, %v566
        %v569 = vrot.slane %v568, 2
        %vm570 = vcmp.lt.s32.totalorder %v568, %v569
        %v571 = vsel %vm570, %v568, %v569
        %v572 = vrot.slane %v571, 1
        %vm573 = vcmp.lt.s32.totalorder %v571, %v572
        %v574 = vsel %vm573, %v571, %v572
        %s575 = vtos %v574
        %s576 = scalar_lea.smem [#allocation2], 2
        %577 = sst [smem:[%s576]] %s575
        %s578 = sshra.s32 %s575, 7
        %s579 = sand.u32 %s575, 127
        %s580 = sadd.s32 %s578, %s46
        %s581 = smul.u32 %s580, 128
        %s582 = sshra.s32 %s575, 7
        %s583 = sand.u32 %s575, 127
        %s584 = sadd.s32 %s581, %s583
        %s585 = sld [smem:[#allocation10 + %s584]]
        %s586 = scalar_lea.smem [#allocation3], 2
        %587 = sst [smem:[%s586]] %s585
        %s588 = scalar_lea.vmem %s389, %s575 [#allocation11]
        %v589 = vld [vmem:[%s588] sm:$0x1]
        %v590 = vmin.f32 %v545, %v589
        %v591 = vsel %vm500, %v590, -inf
        %592 = vmax.xlane.f32.xlu0 %v591
        %v593 = vpop.xlane.xlu0 %592
        %vm594 = vcmp.ge.f32.partialorder %v590, %v593
        %v595 = vsel %vm594, %v483, 16
        %v596 = vsel %vm500, %v595, 2147483647
        %v597 = vand.u32 %v596, 65535
        %v598 = vshra.s32 %v596, 16
        %v599 = vcvt.s32.f32 %v597
        %v600 = vcvt.s32.f32 %v598
        %601 = vmin.xlane.f32.xlu0 %v600
        %v602 = vpop.xlane.xlu0 %601
        %vm603 = vcmp.eq.f32.partialorder %v600, %v602
        %v604 = vsel %vm603, %v599, inf
        %605 = vmin.xlane.f32.xlu0 %v604
        %v606 = vpop.xlane.xlu0 %605
        %v607 = vcvt.f32.s32 %v606
        %v608 = vcvt.f32.s32 %v602
        %v609 = vshll.u32 %v608, 16
        %v610 = vadd.s32 %v609, %v607
        %v611 = vrot.slane %v610, 4
        %vm612 = vcmp.lt.s32.totalorder %v610, %v611
        %v613 = vsel %vm612, %v610, %v611
        %v614 = vrot.slane %v613, 2
        %vm615 = vcmp.lt.s32.totalorder %v613, %v614
        %v616 = vsel %vm615, %v613, %v614
        %v617 = vrot.slane %v616, 1
        %vm618 = vcmp.lt.s32.totalorder %v616, %v617
        %v619 = vsel %vm618, %v616, %v617
        %s620 = vtos %v619
        %s621 = scalar_lea.smem [#allocation2], 3
        %622 = sst [smem:[%s621]] %s620
        %s623 = sshra.s32 %s620, 7
        %s624 = sand.u32 %s620, 127
        %s625 = sadd.s32 %s623, %s46
        %s626 = smul.u32 %s625, 128
        %s627 = sshra.s32 %s620, 7
        %s628 = sand.u32 %s620, 127
        %s629 = sadd.s32 %s626, %s628
        %s630 = sld [smem:[#allocation10 + %s629]]
        %s631 = scalar_lea.smem [#allocation3], 3
        %632 = sst [smem:[%s631]] %s630
        %s633 = scalar_lea.vmem %s389, %s620 [#allocation11]
        %v634 = vld [vmem:[%s633] sm:$0x1]
        %v635 = vmin.f32 %v590, %v634
        %v636 = vsel %vm500, %v635, -inf
        %637 = vmax.xlane.f32.xlu0 %v636
        %v638 = vpop.xlane.xlu0 %637
        %vm639 = vcmp.ge.f32.partialorder %v635, %v638
        %v640 = vsel %vm639, %v483, 16
        %v641 = vsel %vm500, %v640, 2147483647
        %v642 = vand.u32 %v641, 65535
        %v643 = vshra.s32 %v641, 16
        %v644 = vcvt.s32.f32 %v642
        %v645 = vcvt.s32.f32 %v643
        %646 = vmin.xlane.f32.xlu0 %v645
        %v647 = vpop.xlane.xlu0 %646
        %vm648 = vcmp.eq.f32.partialorder %v645, %v647
        %v649 = vsel %vm648, %v644, inf
        %650 = vmin.xlane.f32.xlu0 %v649
        %v651 = vpop.xlane.xlu0 %650
        %v652 = vcvt.f32.s32 %v651
        %v653 = vcvt.f32.s32 %v647
        %v654 = vshll.u32 %v653, 16
        %v655 = vadd.s32 %v654, %v652
        %v656 = vrot.slane %v655, 4
        %vm657 = vcmp.lt.s32.totalorder %v655, %v656
        %v658 = vsel %vm657, %v655, %v656
        %v659 = vrot.slane %v658, 2
        %vm660 = vcmp.lt.s32.totalorder %v658, %v659
        %v661 = vsel %vm660, %v658, %v659
        %v662 = vrot.slane %v661, 1
        %vm663 = vcmp.lt.s32.totalorder %v661, %v662
        %v664 = vsel %vm663, %v661, %v662
        %s665 = vtos %v664
        %s666 = scalar_lea.smem [#allocation2], 4
        %667 = sst [smem:[%s666]] %s665
        %s668 = sshra.s32 %s665, 7
        %s669 = sand.u32 %s665, 127
        %s670 = sadd.s32 %s668, %s46
        %s671 = smul.u32 %s670, 128
        %s672 = sshra.s32 %s665, 7
        %s673 = sand.u32 %s665, 127
        %s674 = sadd.s32 %s671, %s673
        %s675 = sld [smem:[#allocation10 + %s674]]
        %s676 = scalar_lea.smem [#allocation3], 4
        %677 = sst [smem:[%s676]] %s675
        %s678 = scalar_lea.vmem %s389, %s665 [#allocation11]
        %v679 = vld [vmem:[%s678] sm:$0x1]
        %v680 = vmin.f32 %v635, %v679
        %v681 = vsel %vm500, %v680, -inf
        %682 = vmax.xlane.f32.xlu0 %v681
        %v683 = vpop.xlane.xlu0 %682
        %vm684 = vcmp.ge.f32.partialorder %v680, %v683
        %v685 = vsel %vm684, %v483, 16
        %v686 = vsel %vm500, %v685, 2147483647
        %v687 = vand.u32 %v686, 65535
        %v688 = vshra.s32 %v686, 16
        %v689 = vcvt.s32.f32 %v687
        %v690 = vcvt.s32.f32 %v688
        %691 = vmin.xlane.f32.xlu0 %v690
        %v692 = vpop.xlane.xlu0 %691
        %vm693 = vcmp.eq.f32.partialorder %v690, %v692
        %v694 = vsel %vm693, %v689, inf
        %695 = vmin.xlane.f32.xlu0 %v694
        %v696 = vpop.xlane.xlu0 %695
        %v697 = vcvt.f32.s32 %v696
        %v698 = vcvt.f32.s32 %v692
        %v699 = vshll.u32 %v698, 16
        %v700 = vadd.s32 %v699, %v697
        %v701 = vrot.slane %v700, 4
        %vm702 = vcmp.lt.s32.totalorder %v700, %v701
        %v703 = vsel %vm702, %v700, %v701
        %v704 = vrot.slane %v703, 2
        %vm705 = vcmp.lt.s32.totalorder %v703, %v704
        %v706 = vsel %vm705, %v703, %v704
        %v707 = vrot.slane %v706, 1
        %vm708 = vcmp.lt.s32.totalorder %v706, %v707
        %v709 = vsel %vm708, %v706, %v707
        %s710 = vtos %v709
        %s711 = scalar_lea.smem [#allocation2], 5
        %712 = sst [smem:[%s711]] %s710
        %s713 = sshra.s32 %s710, 7
        %s714 = sand.u32 %s710, 127
        %s715 = sadd.s32 %s713, %s46
        %s716 = smul.u32 %s715, 128
        %s717 = sshra.s32 %s710, 7
        %s718 = sand.u32 %s710, 127
        %s719 = sadd.s32 %s716, %s718
        %s720 = sld [smem:[#allocation10 + %s719]]
        %s721 = scalar_lea.smem [#allocation3], 5
        %722 = sst [smem:[%s721]] %s720
        %s723 = scalar_lea.vmem %s389, %s710 [#allocation11]
        %v724 = vld [vmem:[%s723] sm:$0x1]
        %v725 = vmin.f32 %v680, %v724
        %v726 = vsel %vm500, %v725, -inf
        %727 = vmax.xlane.f32.xlu0 %v726
        %v728 = vpop.xlane.xlu0 %727
        %vm729 = vcmp.ge.f32.partialorder %v725, %v728
        %v730 = vsel %vm729, %v483, 16
        %v731 = vsel %vm500, %v730, 2147483647
        %v732 = vand.u32 %v731, 65535
        %v733 = vshra.s32 %v731, 16
        %v734 = vcvt.s32.f32 %v732
        %v735 = vcvt.s32.f32 %v733
        %736 = vmin.xlane.f32.xlu0 %v735
        %v737 = vpop.xlane.xlu0 %736
        %vm738 = vcmp.eq.f32.partialorder %v735, %v737
        %v739 = vsel %vm738, %v734, inf
        %740 = vmin.xlane.f32.xlu0 %v739
        %v741 = vpop.xlane.xlu0 %740
        %v742 = vcvt.f32.s32 %v741
        %v743 = vcvt.f32.s32 %v737
        %v744 = vshll.u32 %v743, 16
        %v745 = vadd.s32 %v744, %v742
        %v746 = vrot.slane %v745, 4
        %vm747 = vcmp.lt.s32.totalorder %v745, %v746
        %v748 = vsel %vm747, %v745, %v746
        %v749 = vrot.slane %v748, 2
        %vm750 = vcmp.lt.s32.totalorder %v748, %v749
        %v751 = vsel %vm750, %v748, %v749
        %v752 = vrot.slane %v751, 1
        %vm753 = vcmp.lt.s32.totalorder %v751, %v752
        %v754 = vsel %vm753, %v751, %v752
        %s755 = vtos %v754
        %s756 = scalar_lea.smem [#allocation2], 6
        %757 = sst [smem:[%s756]] %s755
        %s758 = sshra.s32 %s755, 7
        %s759 = sand.u32 %s755, 127
        %s760 = sadd.s32 %s758, %s46
        %s761 = smul.u32 %s760, 128
        %s762 = sshra.s32 %s755, 7
        %s763 = sand.u32 %s755, 127
        %s764 = sadd.s32 %s761, %s763
        %s765 = sld [smem:[#allocation10 + %s764]]
        %s766 = scalar_lea.smem [#allocation3], 6
        %767 = sst [smem:[%s766]] %s765
        %s768 = scalar_lea.vmem %s389, %s755 [#allocation11]
        %v769 = vld [vmem:[%s768] sm:$0x1]
        %v770 = vmin.f32 %v725, %v769
        %v771 = vsel %vm500, %v770, -inf
        %772 = vmax.xlane.f32.xlu0 %v771
        %v773 = vpop.xlane.xlu0 %772
        %vm774 = vcmp.ge.f32.partialorder %v770, %v773
        %v775 = vsel %vm774, %v483, 16
        %v776 = vsel %vm500, %v775, 2147483647
        %v777 = vand.u32 %v776, 65535
        %v778 = vshra.s32 %v776, 16
        %v779 = vcvt.s32.f32 %v777
        %v780 = vcvt.s32.f32 %v778
        %781 = vmin.xlane.f32.xlu0 %v780
        %v782 = vpop.xlane.xlu0 %781
        %vm783 = vcmp.eq.f32.partialorder %v780, %v782
        %v784 = vsel %vm783, %v779, inf
        %785 = vmin.xlane.f32.xlu0 %v784
        %v786 = vpop.xlane.xlu0 %785
        %v787 = vcvt.f32.s32 %v786
        %v788 = vcvt.f32.s32 %v782
        %v789 = vshll.u32 %v788, 16
        %v790 = vadd.s32 %v789, %v787
        %v791 = vrot.slane %v790, 4
        %vm792 = vcmp.lt.s32.totalorder %v790, %v791
        %v793 = vsel %vm792, %v790, %v791
        %v794 = vrot.slane %v793, 2
        %vm795 = vcmp.lt.s32.totalorder %v793, %v794
        %v796 = vsel %vm795, %v793, %v794
        %v797 = vrot.slane %v796, 1
        %vm798 = vcmp.lt.s32.totalorder %v796, %v797
        %v799 = vsel %vm798, %v796, %v797
        %s800 = vtos %v799
        %s801 = scalar_lea.smem [#allocation2], 7
        %802 = sst [smem:[%s801]] %s800
        %s803 = sshra.s32 %s800, 7
        %s804 = sand.u32 %s800, 127
        %s805 = sadd.s32 %s803, %s46
        %s806 = smul.u32 %s805, 128
        %s807 = sshra.s32 %s800, 7
        %s808 = sand.u32 %s800, 127
        %s809 = sadd.s32 %s806, %s808
        %s810 = sld [smem:[#allocation10 + %s809]]
        %s811 = scalar_lea.smem [#allocation3], 7
        %812 = sst [smem:[%s811]] %s810
        %s813 = sld [smem:[#allocation2]]
        %vm814 = vcmp.eq.s32.totalorder %v483, 0
        %v815 = vstv %s813
        %v816 = vsel %vm814, %v815, 0
        %s817 = sld [smem:[#allocation3]]
        %v818 = vstv %s817
        %v819 = vsel %vm814, %v818, 0
        %s820 = scalar_lea.vmem %s407, %s813 [#allocation16]
        %v821 = vld [vmem:[%s820] sm:$0x1]
        %vm822 = vcmask 57344
        %823 = vst.msk [vmem:[%s462] sm:$0x1] %vm822, %v821
        %s824 = scalar_lea.vmem %s398, %s813 [#allocation14]
        %v825 = vld [vmem:[%s824] sm:$0x1]
        %v826 = vld [vmem:[%s824 + $0x10] sm:$0x1]
        %v827 = vld [vmem:[%s824 + $0x20] sm:$0x1]
        %v828 = vld [vmem:[%s824 + $0x30] sm:$0x1]
        %v829 = vld [vmem:[%s824 + $0x40] sm:$0x1]
        %v830 = vld [vmem:[%s824 + $0x50] sm:$0x1]
        %831 = vst.msk [vmem:[#allocation4] sm:$0x1] %vm500, %v825
        %832 = vst.msk [vmem:[#allocation4 + $0x8] sm:$0x1] %vm500, %v826
        %833 = vst.msk [vmem:[#allocation4 + $0x10] sm:$0x1] %vm500, %v827
        %834 = vst.msk [vmem:[#allocation4 + $0x18] sm:$0x1] %vm500, %v828
        %835 = vst.msk [vmem:[#allocation4 + $0x20] sm:$0x1] %vm500, %v829
        %836 = vst.msk [vmem:[#allocation4 + $0x28] sm:$0x1] %vm500, %v830
        %s837 = scalar_lea.vmem %s416, %s813 [#allocation17]
        %v838 = vld [vmem:[%s837] sm:$0x1]
        %v839 = vld [vmem:[%s837 + $0x10] sm:$0x1]
        %v840 = vld [vmem:[%s837 + $0x20] sm:$0x1]
        %v841 = vld [vmem:[%s837 + $0x30] sm:$0x1]
        %842 = vst.msk [vmem:[#allocation6] sm:$0x1] %vm500, %v838
        %843 = vst.msk [vmem:[#allocation6 + $0x8] sm:$0x1] %vm500, %v839
        %844 = vst.msk [vmem:[#allocation6 + $0x10] sm:$0x1] %vm500, %v840
        %845 = vst.msk [vmem:[#allocation6 + $0x18] sm:$0x1] %vm500, %v841
        %s846 = sld [smem:[#allocation2 + $0x1]]
        %vm847 = vcmp.eq.s32.totalorder %v483, 1
        %v848 = vstv %s846
        %v849 = vsel %vm847, %v848, %v816
        %s850 = sld [smem:[#allocation3 + $0x1]]
        %v851 = vstv %s850
        %v852 = vsel %vm847, %v851, %v819
        %s853 = scalar_lea.vmem %s407, %s846 [#allocation16]
        %v854 = vld [vmem:[%s853] sm:$0x1]
        %855 = vst.msk [vmem:[%s462 + $0x1] sm:$0x1] %vm822, %v854
        %s856 = scalar_lea.vmem %s398, %s846 [#allocation14]
        %v857 = vld [vmem:[%s856] sm:$0x1]
        %v858 = vld [vmem:[%s856 + $0x10] sm:$0x1]
        %v859 = vld [vmem:[%s856 + $0x20] sm:$0x1]
        %v860 = vld [vmem:[%s856 + $0x30] sm:$0x1]
        %v861 = vld [vmem:[%s856 + $0x40] sm:$0x1]
        %v862 = vld [vmem:[%s856 + $0x50] sm:$0x1]
        %863 = vst.msk [vmem:[#allocation4 + $0x1] sm:$0x1] %vm500, %v857
        %864 = vst.msk [vmem:[#allocation4 + $0x9] sm:$0x1] %vm500, %v858
        %865 = vst.msk [vmem:[#allocation4 + $0x11] sm:$0x1] %vm500, %v859
        %866 = vst.msk [vmem:[#allocation4 + $0x19] sm:$0x1] %vm500, %v860
        %867 = vst.msk [vmem:[#allocation4 + $0x21] sm:$0x1] %vm500, %v861
        %868 = vst.msk [vmem:[#allocation4 + $0x29] sm:$0x1] %vm500, %v862
        %s869 = scalar_lea.vmem %s416, %s846 [#allocation17]
        %v870 = vld [vmem:[%s869] sm:$0x1]
        %v871 = vld [vmem:[%s869 + $0x10] sm:$0x1]
        %v872 = vld [vmem:[%s869 + $0x20] sm:$0x1]
        %v873 = vld [vmem:[%s869 + $0x30] sm:$0x1]
        %874 = vst.msk [vmem:[#allocation6 + $0x1] sm:$0x1] %vm500, %v870
        %875 = vst.msk [vmem:[#allocation6 + $0x9] sm:$0x1] %vm500, %v871
        %876 = vst.msk [vmem:[#allocation6 + $0x11] sm:$0x1] %vm500, %v872
        %877 = vst.msk [vmem:[#allocation6 + $0x19] sm:$0x1] %vm500, %v873
        %s878 = sld [smem:[#allocation2 + $0x2]]
        %vm879 = vcmp.eq.s32.totalorder %v483, 2
        %v880 = vstv %s878
        %v881 = vsel %vm879, %v880, %v849
        %s882 = sld [smem:[#allocation3 + $0x2]]
        %v883 = vstv %s882
        %v884 = vsel %vm879, %v883, %v852
        %s885 = scalar_lea.vmem %s407, %s878 [#allocation16]
        %v886 = vld [vmem:[%s885] sm:$0x1]
        %887 = vst.msk [vmem:[%s462 + $0x2] sm:$0x1] %vm822, %v886
        %s888 = scalar_lea.vmem %s398, %s878 [#allocation14]
        %v889 = vld [vmem:[%s888] sm:$0x1]
        %v890 = vld [vmem:[%s888 + $0x10] sm:$0x1]
        %v891 = vld [vmem:[%s888 + $0x20] sm:$0x1]
        %v892 = vld [vmem:[%s888 + $0x30] sm:$0x1]
        %v893 = vld [vmem:[%s888 + $0x40] sm:$0x1]
        %v894 = vld [vmem:[%s888 + $0x50] sm:$0x1]
        %895 = vst.msk [vmem:[#allocation4 + $0x2] sm:$0x1] %vm500, %v889
        %896 = vst.msk [vmem:[#allocation4 + $0xa] sm:$0x1] %vm500, %v890
        %897 = vst.msk [vmem:[#allocation4 + $0x12] sm:$0x1] %vm500, %v891
        %898 = vst.msk [vmem:[#allocation4 + $0x1a] sm:$0x1] %vm500, %v892
        %899 = vst.msk [vmem:[#allocation4 + $0x22] sm:$0x1] %vm500, %v893
        %900 = vst.msk [vmem:[#allocation4 + $0x2a] sm:$0x1] %vm500, %v894
        %s901 = scalar_lea.vmem %s416, %s878 [#allocation17]
        %v902 = vld [vmem:[%s901] sm:$0x1]
        %v903 = vld [vmem:[%s901 + $0x10] sm:$0x1]
        %v904 = vld [vmem:[%s901 + $0x20] sm:$0x1]
        %v905 = vld [vmem:[%s901 + $0x30] sm:$0x1]
        %906 = vst.msk [vmem:[#allocation6 + $0x2] sm:$0x1] %vm500, %v902
        %907 = vst.msk [vmem:[#allocation6 + $0xa] sm:$0x1] %vm500, %v903
        %908 = vst.msk [vmem:[#allocation6 + $0x12] sm:$0x1] %vm500, %v904
        %909 = vst.msk [vmem:[#allocation6 + $0x1a] sm:$0x1] %vm500, %v905
        %s910 = sld [smem:[#allocation2 + $0x3]]
        %vm911 = vcmp.eq.s32.totalorder %v483, 3
        %v912 = vstv %s910
        %v913 = vsel %vm911, %v912, %v881
        %s914 = sld [smem:[#allocation3 + $0x3]]
        %v915 = vstv %s914
        %v916 = vsel %vm911, %v915, %v884
        %s917 = scalar_lea.vmem %s407, %s910 [#allocation16]
        %v918 = vld [vmem:[%s917] sm:$0x1]
        %919 = vst.msk [vmem:[%s462 + $0x3] sm:$0x1] %vm822, %v918
        %s920 = scalar_lea.vmem %s398, %s910 [#allocation14]
        %v921 = vld [vmem:[%s920] sm:$0x1]
        %v922 = vld [vmem:[%s920 + $0x10] sm:$0x1]
        %v923 = vld [vmem:[%s920 + $0x20] sm:$0x1]
        %v924 = vld [vmem:[%s920 + $0x30] sm:$0x1]
        %v925 = vld [vmem:[%s920 + $0x40] sm:$0x1]
        %v926 = vld [vmem:[%s920 + $0x50] sm:$0x1]
        %927 = vst.msk [vmem:[#allocation4 + $0x3] sm:$0x1] %vm500, %v921
        %928 = vst.msk [vmem:[#allocation4 + $0xb] sm:$0x1] %vm500, %v922
        %929 = vst.msk [vmem:[#allocation4 + $0x13] sm:$0x1] %vm500, %v923
        %930 = vst.msk [vmem:[#allocation4 + $0x1b] sm:$0x1] %vm500, %v924
        %931 = vst.msk [vmem:[#allocation4 + $0x23] sm:$0x1] %vm500, %v925
        %932 = vst.msk [vmem:[#allocation4 + $0x2b] sm:$0x1] %vm500, %v926
        %s933 = scalar_lea.vmem %s416, %s910 [#allocation17]
        %v934 = vld [vmem:[%s933] sm:$0x1]
        %v935 = vld [vmem:[%s933 + $0x10] sm:$0x1]
        %v936 = vld [vmem:[%s933 + $0x20] sm:$0x1]
        %v937 = vld [vmem:[%s933 + $0x30] sm:$0x1]
        %938 = vst.msk [vmem:[#allocation6 + $0x3] sm:$0x1] %vm500, %v934
        %939 = vst.msk [vmem:[#allocation6 + $0xb] sm:$0x1] %vm500, %v935
        %940 = vst.msk [vmem:[#allocation6 + $0x13] sm:$0x1] %vm500, %v936
        %941 = vst.msk [vmem:[#allocation6 + $0x1b] sm:$0x1] %vm500, %v937
        %s942 = sld [smem:[#allocation2 + $0x4]]
        %vm943 = vcmp.eq.s32.totalorder %v483, 4
        %v944 = vstv %s942
        %v945 = vsel %vm943, %v944, %v913
        %s946 = sld [smem:[#allocation3 + $0x4]]
        %v947 = vstv %s946
        %v948 = vsel %vm943, %v947, %v916
        %s949 = scalar_lea.vmem %s407, %s942 [#allocation16]
        %v950 = vld [vmem:[%s949] sm:$0x1]
        %951 = vst.msk [vmem:[%s462 + $0x4] sm:$0x1] %vm822, %v950
        %s952 = scalar_lea.vmem %s398, %s942 [#allocation14]
        %v953 = vld [vmem:[%s952] sm:$0x1]
        %v954 = vld [vmem:[%s952 + $0x10] sm:$0x1]
        %v955 = vld [vmem:[%s952 + $0x20] sm:$0x1]
        %v956 = vld [vmem:[%s952 + $0x30] sm:$0x1]
        %v957 = vld [vmem:[%s952 + $0x40] sm:$0x1]
        %v958 = vld [vmem:[%s952 + $0x50] sm:$0x1]
        %959 = vst.msk [vmem:[#allocation4 + $0x4] sm:$0x1] %vm500, %v953
        %960 = vst.msk [vmem:[#allocation4 + $0xc] sm:$0x1] %vm500, %v954
        %961 = vst.msk [vmem:[#allocation4 + $0x14] sm:$0x1] %vm500, %v955
        %962 = vst.msk [vmem:[#allocation4 + $0x1c] sm:$0x1] %vm500, %v956
        %963 = vst.msk [vmem:[#allocation4 + $0x24] sm:$0x1] %vm500, %v957
        %964 = vst.msk [vmem:[#allocation4 + $0x2c] sm:$0x1] %vm500, %v958
        %s965 = scalar_lea.vmem %s416, %s942 [#allocation17]
        %v966 = vld [vmem:[%s965] sm:$0x1]
        %v967 = vld [vmem:[%s965 + $0x10] sm:$0x1]
        %v968 = vld [vmem:[%s965 + $0x20] sm:$0x1]
        %v969 = vld [vmem:[%s965 + $0x30] sm:$0x1]
        %970 = vst.msk [vmem:[#allocation6 + $0x4] sm:$0x1] %vm500, %v966
        %971 = vst.msk [vmem:[#allocation6 + $0xc] sm:$0x1] %vm500, %v967
        %972 = vst.msk [vmem:[#allocation6 + $0x14] sm:$0x1] %vm500, %v968
        %973 = vst.msk [vmem:[#allocation6 + $0x1c] sm:$0x1] %vm500, %v969
        %s974 = sld [smem:[#allocation2 + $0x5]]
        %vm975 = vcmp.eq.s32.totalorder %v483, 5
        %v976 = vstv %s974
        %v977 = vsel %vm975, %v976, %v945
        %s978 = sld [smem:[#allocation3 + $0x5]]
        %v979 = vstv %s978
        %v980 = vsel %vm975, %v979, %v948
        %s981 = scalar_lea.vmem %s407, %s974 [#allocation16]
        %v982 = vld [vmem:[%s981] sm:$0x1]
        %983 = vst.msk [vmem:[%s462 + $0x5] sm:$0x1] %vm822, %v982
        %s984 = scalar_lea.vmem %s398, %s974 [#allocation14]
        %v985 = vld [vmem:[%s984] sm:$0x1]
        %v986 = vld [vmem:[%s984 + $0x10] sm:$0x1]
        %v987 = vld [vmem:[%s984 + $0x20] sm:$0x1]
        %v988 = vld [vmem:[%s984 + $0x30] sm:$0x1]
        %v989 = vld [vmem:[%s984 + $0x40] sm:$0x1]
        %v990 = vld [vmem:[%s984 + $0x50] sm:$0x1]
        %991 = vst.msk [vmem:[#allocation4 + $0x5] sm:$0x1] %vm500, %v985
        %992 = vst.msk [vmem:[#allocation4 + $0xd] sm:$0x1] %vm500, %v986
        %993 = vst.msk [vmem:[#allocation4 + $0x15] sm:$0x1] %vm500, %v987
        %994 = vst.msk [vmem:[#allocation4 + $0x1d] sm:$0x1] %vm500, %v988
        %995 = vst.msk [vmem:[#allocation4 + $0x25] sm:$0x1] %vm500, %v989
        %996 = vst.msk [vmem:[#allocation4 + $0x2d] sm:$0x1] %vm500, %v990
        %s997 = scalar_lea.vmem %s416, %s974 [#allocation17]
        %v998 = vld [vmem:[%s997] sm:$0x1]
        %v999 = vld [vmem:[%s997 + $0x10] sm:$0x1]
        %v1000 = vld [vmem:[%s997 + $0x20] sm:$0x1]
        %v1001 = vld [vmem:[%s997 + $0x30] sm:$0x1]
        %1002 = vst.msk [vmem:[#allocation6 + $0x5] sm:$0x1] %vm500, %v998
        %1003 = vst.msk [vmem:[#allocation6 + $0xd] sm:$0x1] %vm500, %v999
        %1004 = vst.msk [vmem:[#allocation6 + $0x15] sm:$0x1] %vm500, %v1000
        %1005 = vst.msk [vmem:[#allocation6 + $0x1d] sm:$0x1] %vm500, %v1001
        %s1006 = sld [smem:[#allocation2 + $0x6]]
        %vm1007 = vcmp.eq.s32.totalorder %v483, 6
        %v1008 = vstv %s1006
        %v1009 = vsel %vm1007, %v1008, %v977
        %s1010 = sld [smem:[#allocation3 + $0x6]]
        %v1011 = vstv %s1010
        %v1012 = vsel %vm1007, %v1011, %v980
        %s1013 = scalar_lea.vmem %s407, %s1006 [#allocation16]
        %v1014 = vld [vmem:[%s1013] sm:$0x1]
        %1015 = vst.msk [vmem:[%s462 + $0x6] sm:$0x1] %vm822, %v1014
        %s1016 = scalar_lea.vmem %s398, %s1006 [#allocation14]
        %v1017 = vld [vmem:[%s1016] sm:$0x1]
        %v1018 = vld [vmem:[%s1016 + $0x10] sm:$0x1]
        %v1019 = vld [vmem:[%s1016 + $0x20] sm:$0x1]
        %v1020 = vld [vmem:[%s1016 + $0x30] sm:$0x1]
        %v1021 = vld [vmem:[%s1016 + $0x40] sm:$0x1]
        %v1022 = vld [vmem:[%s1016 + $0x50] sm:$0x1]
        %1023 = vst.msk [vmem:[#allocation4 + $0x6] sm:$0x1] %vm500, %v1017
        %1024 = vst.msk [vmem:[#allocation4 + $0xe] sm:$0x1] %vm500, %v1018
        %1025 = vst.msk [vmem:[#allocation4 + $0x16] sm:$0x1] %vm500, %v1019
        %1026 = vst.msk [vmem:[#allocation4 + $0x1e] sm:$0x1] %vm500, %v1020
        %1027 = vst.msk [vmem:[#allocation4 + $0x26] sm:$0x1] %vm500, %v1021
        %1028 = vst.msk [vmem:[#allocation4 + $0x2e] sm:$0x1] %vm500, %v1022
        %s1029 = scalar_lea.vmem %s416, %s1006 [#allocation17]
        %v1030 = vld [vmem:[%s1029] sm:$0x1]
        %v1031 = vld [vmem:[%s1029 + $0x10] sm:$0x1]
        %v1032 = vld [vmem:[%s1029 + $0x20] sm:$0x1]
        %v1033 = vld [vmem:[%s1029 + $0x30] sm:$0x1]
        %1034 = vst.msk [vmem:[#allocation6 + $0x6] sm:$0x1] %vm500, %v1030
        %1035 = vst.msk [vmem:[#allocation6 + $0xe] sm:$0x1] %vm500, %v1031
        %1036 = vst.msk [vmem:[#allocation6 + $0x16] sm:$0x1] %vm500, %v1032
        %1037 = vst.msk [vmem:[#allocation6 + $0x1e] sm:$0x1] %vm500, %v1033
        %s1038 = sld [smem:[#allocation2 + $0x7]]
        %vm1039 = vcmp.eq.s32.totalorder %v483, 7
        %v1040 = vstv %s1038
        %v1041 = vsel %vm1039, %v1040, %v1009
        %s1042 = sld [smem:[#allocation3 + $0x7]]
        %v1043 = vstv %s1042
        %v1044 = vsel %vm1039, %v1043, %v1012
        %s1045 = scalar_lea.vmem %s407, %s1038 [#allocation16]
        %v1046 = vld [vmem:[%s1045] sm:$0x1]
        %1047 = vst.msk [vmem:[%s462 + $0x7] sm:$0x1] %vm822, %v1046
        %s1048 = scalar_lea.vmem %s398, %s1038 [#allocation14]
        %v1049 = vld [vmem:[%s1048] sm:$0x1]
        %v1050 = vld [vmem:[%s1048 + $0x10] sm:$0x1]
        %v1051 = vld [vmem:[%s1048 + $0x20] sm:$0x1]
        %v1052 = vld [vmem:[%s1048 + $0x30] sm:$0x1]
        %v1053 = vld [vmem:[%s1048 + $0x40] sm:$0x1]
        %v1054 = vld [vmem:[%s1048 + $0x50] sm:$0x1]
        %1055 = vst.msk [vmem:[#allocation4 + $0x7] sm:$0x1] %vm500, %v1049
        %1056 = vst.msk [vmem:[#allocation4 + $0xf] sm:$0x1] %vm500, %v1050
        %1057 = vst.msk [vmem:[#allocation4 + $0x17] sm:$0x1] %vm500, %v1051
        %1058 = vst.msk [vmem:[#allocation4 + $0x1f] sm:$0x1] %vm500, %v1052
        %1059 = vst.msk [vmem:[#allocation4 + $0x27] sm:$0x1] %vm500, %v1053
        %1060 = vst.msk [vmem:[#allocation4 + $0x2f] sm:$0x1] %vm500, %v1054
        %s1061 = scalar_lea.vmem %s416, %s1038 [#allocation17]
        %v1062 = vld [vmem:[%s1061] sm:$0x1]
        %v1063 = vld [vmem:[%s1061 + $0x10] sm:$0x1]
        %v1064 = vld [vmem:[%s1061 + $0x20] sm:$0x1]
        %v1065 = vld [vmem:[%s1061 + $0x30] sm:$0x1]
        %1066 = vst.msk [vmem:[#allocation6 + $0x7] sm:$0x1] %vm500, %v1062
        %1067 = vst.msk [vmem:[#allocation6 + $0xf] sm:$0x1] %vm500, %v1063
        %1068 = vst.msk [vmem:[#allocation6 + $0x17] sm:$0x1] %vm500, %v1064
        %1069 = vst.msk [vmem:[#allocation6 + $0x1f] sm:$0x1] %vm500, %v1065
        %1070 = vst.msk [vmem:[%s474] sm:$0x1] %vm822, %v1041
        %1071 = vst.msk [vmem:[%s468] sm:$0x1] %vm822, %v1044
        %v1072 = vld [vmem:[#allocation4] sm:$0xff]
        %1073 = vxpose.xlu0.b32.start [1/16] %v1072, 128
        %1074 = vxpose.xlu0.b32.cont [2/16] 0.0, 128
        %1075 = vxpose.xlu0.b32.cont [3/16] 0.0, 128
        %1076 = vxpose.xlu0.b32.cont [4/16] 0.0, 128
        %1077 = vxpose.xlu0.b32.cont [5/16] 0.0, 128
        %1078 = vxpose.xlu0.b32.cont [6/16] 0.0, 128
        %1079 = vxpose.xlu0.b32.cont [7/16] 0.0, 128
        %1080 = vxpose.xlu0.b32.cont [8/16] 0.0, 128
        %1081 = vxpose.xlu0.b32.cont [9/16] 0.0, 128
        %1082 = vxpose.xlu0.b32.cont [10/16] 0.0, 128
        %1083 = vxpose.xlu0.b32.cont [11/16] 0.0, 128
        %1084 = vxpose.xlu0.b32.cont [12/16] 0.0, 128
        %1085 = vxpose.xlu0.b32.cont [13/16] 0.0, 128
        %1086 = vxpose.xlu0.b32.cont [14/16] 0.0, 128
        %1087 = vxpose.xlu0.b32.cont [15/16] 0.0, 128
        %1088 = vxpose.xlu0.b32.end [16/16] 0.0, 128
        %v1089 = vpop.trf.xlu0
        %v1090 = vpop.trf.xlu0
        %v1091 = vpop.trf.xlu0
        %v1092 = vpop.trf.xlu0
        %v1093 = vpop.trf.xlu0
        %v1094 = vpop.trf.xlu0
        %v1095 = vpop.trf.xlu0
        %v1096 = vpop.trf.xlu0
        %v1097 = vpop.trf.xlu0
        %v1098 = vpop.trf.xlu0
        %v1099 = vpop.trf.xlu0
        %v1100 = vpop.trf.xlu0
        %v1101 = vpop.trf.xlu0
        %v1102 = vpop.trf.xlu0
        %v1103 = vpop.trf.xlu0
        %v1104 = vpop.trf.xlu0
        %vm1105 = vcmask 64512
        %1106 = vst.msk [vmem:[#allocation5] sm:$0xff] %vm1105, %v1089
        %1107 = vst.msk [vmem:[#allocation5 + $0x8] sm:$0xff] %vm1105, %v1090
        %s1108 = scalar_lea.vmem [#allocation4], 8
        %v1109 = vld [vmem:[%s1108] sm:$0xff]
        %1110 = vxpose.xlu0.b32.start [1/16] %v1109, 128
        %1111 = vxpose.xlu0.b32.cont [2/16] 0.0, 128
        %1112 = vxpose.xlu0.b32.cont [3/16] 0.0, 128
        %1113 = vxpose.xlu0.b32.cont [4/16] 0.0, 128
        %1114 = vxpose.xlu0.b32.cont [5/16] 0.0, 128
        %1115 = vxpose.xlu0.b32.cont [6/16] 0.0, 128
        %1116 = vxpose.xlu0.b32.cont [7/16] 0.0, 128
        %1117 = vxpose.xlu0.b32.cont [8/16] 0.0, 128
        %1118 = vxpose.xlu0.b32.cont [9/16] 0.0, 128
        %1119 = vxpose.xlu0.b32.cont [10/16] 0.0, 128
        %1120 = vxpose.xlu0.b32.cont [11/16] 0.0, 128
        %1121 = vxpose.xlu0.b32.cont [12/16] 0.0, 128
        %1122 = vxpose.xlu0.b32.cont [13/16] 0.0, 128
        %1123 = vxpose.xlu0.b32.cont [14/16] 0.0, 128
        %1124 = vxpose.xlu0.b32.cont [15/16] 0.0, 128
        %1125 = vxpose.xlu0.b32.end [16/16] 0.0, 128
        %v1126 = vpop.trf.xlu0
        %v1127 = vpop.trf.xlu0
        %v1128 = vpop.trf.xlu0
        %v1129 = vpop.trf.xlu0
        %v1130 = vpop.trf.xlu0
        %v1131 = vpop.trf.xlu0
        %v1132 = vpop.trf.xlu0
        %v1133 = vpop.trf.xlu0
        %v1134 = vpop.trf.xlu0
        %v1135 = vpop.trf.xlu0
        %v1136 = vpop.trf.xlu0
        %v1137 = vpop.trf.xlu0
        %v1138 = vpop.trf.xlu0
        %v1139 = vpop.trf.xlu0
        %v1140 = vpop.trf.xlu0
        %v1141 = vpop.trf.xlu0
        %s1142 = scalar_lea.vmem [#allocation5], 16
        %1143 = vst.msk [vmem:[%s1142] sm:$0xff] %vm1105, %v1126
        %1144 = vst.msk [vmem:[%s1142 + $0x8] sm:$0xff] %vm1105, %v1127
        %s1145 = scalar_lea.vmem [#allocation4], 16
        %v1146 = vld [vmem:[%s1145] sm:$0xff]
        %1147 = vxpose.xlu0.b32.start [1/16] %v1146, 128
        %1148 = vxpose.xlu0.b32.cont [2/16] 0.0, 128
        %1149 = vxpose.xlu0.b32.cont [3/16] 0.0, 128
        %1150 = vxpose.xlu0.b32.cont [4/16] 0.0, 128
        %1151 = vxpose.xlu0.b32.cont [5/16] 0.0, 128
        %1152 = vxpose.xlu0.b32.cont [6/16] 0.0, 128
        %1153 = vxpose.xlu0.b32.cont [7/16] 0.0, 128
        %1154 = vxpose.xlu0.b32.cont [8/16] 0.0, 128
        %1155 = vxpose.xlu0.b32.cont [9/16] 0.0, 128
        %1156 = vxpose.xlu0.b32.cont [10/16] 0.0, 128
        %1157 = vxpose.xlu0.b32.cont [11/16] 0.0, 128
        %1158 = vxpose.xlu0.b32.cont [12/16] 0.0, 128
        %1159 = vxpose.xlu0.b32.cont [13/16] 0.0, 128
        %1160 = vxpose.xlu0.b32.cont [14/16] 0.0, 128
        %1161 = vxpose.xlu0.b32.cont [15/16] 0.0, 128
        %1162 = vxpose.xlu0.b32.end [16/16] 0.0, 128
        %v1163 = vpop.trf.xlu0
        %v1164 = vpop.trf.xlu0
        %v1165 = vpop.trf.xlu0
        %v1166 = vpop.trf.xlu0
        %v1167 = vpop.trf.xlu0
        %v1168 = vpop.trf.xlu0
        %v1169 = vpop.trf.xlu0
        %v1170 = vpop.trf.xlu0
        %v1171 = vpop.trf.xlu0
        %v1172 = vpop.trf.xlu0
        %v1173 = vpop.trf.xlu0
        %v1174 = vpop.trf.xlu0
        %v1175 = vpop.trf.xlu0
        %v1176 = vpop.trf.xlu0
        %v1177 = vpop.trf.xlu0
        %v1178 = vpop.trf.xlu0
        %s1179 = scalar_lea.vmem [#allocation5], 32
        %1180 = vst.msk [vmem:[%s1179] sm:$0xff] %vm1105, %v1163
        %1181 = vst.msk [vmem:[%s1179 + $0x8] sm:$0xff] %vm1105, %v1164
        %s1182 = scalar_lea.vmem [#allocation4], 24
        %v1183 = vld [vmem:[%s1182] sm:$0xff]
        %1184 = vxpose.xlu0.b32.start [1/16] %v1183, 128
        %1185 = vxpose.xlu0.b32.cont [2/16] 0.0, 128
        %1186 = vxpose.xlu0.b32.cont [3/16] 0.0, 128
        %1187 = vxpose.xlu0.b32.cont [4/16] 0.0, 128
        %1188 = vxpose.xlu0.b32.cont [5/16] 0.0, 128
        %1189 = vxpose.xlu0.b32.cont [6/16] 0.0, 128
        %1190 = vxpose.xlu0.b32.cont [7/16] 0.0, 128
        %1191 = vxpose.xlu0.b32.cont [8/16] 0.0, 128
        %1192 = vxpose.xlu0.b32.cont [9/16] 0.0, 128
        %1193 = vxpose.xlu0.b32.cont [10/16] 0.0, 128
        %1194 = vxpose.xlu0.b32.cont [11/16] 0.0, 128
        %1195 = vxpose.xlu0.b32.cont [12/16] 0.0, 128
        %1196 = vxpose.xlu0.b32.cont [13/16] 0.0, 128
        %1197 = vxpose.xlu0.b32.cont [14/16] 0.0, 128
        %1198 = vxpose.xlu0.b32.cont [15/16] 0.0, 128
        %1199 = vxpose.xlu0.b32.end [16/16] 0.0, 128
        %v1200 = vpop.trf.xlu0
        %v1201 = vpop.trf.xlu0
        %v1202 = vpop.trf.xlu0
        %v1203 = vpop.trf.xlu0
        %v1204 = vpop.trf.xlu0
        %v1205 = vpop.trf.xlu0
        %v1206 = vpop.trf.xlu0
        %v1207 = vpop.trf.xlu0
        %v1208 = vpop.trf.xlu0
        %v1209 = vpop.trf.xlu0
        %v1210 = vpop.trf.xlu0
        %v1211 = vpop.trf.xlu0
        %v1212 = vpop.trf.xlu0
        %v1213 = vpop.trf.xlu0
        %v1214 = vpop.trf.xlu0
        %v1215 = vpop.trf.xlu0
        %s1216 = scalar_lea.vmem [#allocation5], 48
        %1217 = vst.msk [vmem:[%s1216] sm:$0xff] %vm1105, %v1200
        %1218 = vst.msk [vmem:[%s1216 + $0x8] sm:$0xff] %vm1105, %v1201
        %s1219 = scalar_lea.vmem [#allocation4], 32
        %v1220 = vld [vmem:[%s1219] sm:$0xff]
        %1221 = vxpose.xlu0.b32.start [1/16] %v1220, 128
        %1222 = vxpose.xlu0.b32.cont [2/16] 0.0, 128
        %1223 = vxpose.xlu0.b32.cont [3/16] 0.0, 128
        %1224 = vxpose.xlu0.b32.cont [4/16] 0.0, 128
        %1225 = vxpose.xlu0.b32.cont [5/16] 0.0, 128
        %1226 = vxpose.xlu0.b32.cont [6/16] 0.0, 128
        %1227 = vxpose.xlu0.b32.cont [7/16] 0.0, 128
        %1228 = vxpose.xlu0.b32.cont [8/16] 0.0, 128
        %1229 = vxpose.xlu0.b32.cont [9/16] 0.0, 128
        %1230 = vxpose.xlu0.b32.cont [10/16] 0.0, 128
        %1231 = vxpose.xlu0.b32.cont [11/16] 0.0, 128
        %1232 = vxpose.xlu0.b32.cont [12/16] 0.0, 128
        %1233 = vxpose.xlu0.b32.cont [13/16] 0.0, 128
        %1234 = vxpose.xlu0.b32.cont [14/16] 0.0, 128
        %1235 = vxpose.xlu0.b32.cont [15/16] 0.0, 128
        %1236 = vxpose.xlu0.b32.end [16/16] 0.0, 128
        %v1237 = vpop.trf.xlu0
        %v1238 = vpop.trf.xlu0
        %v1239 = vpop.trf.xlu0
        %v1240 = vpop.trf.xlu0
        %v1241 = vpop.trf.xlu0
        %v1242 = vpop.trf.xlu0
        %v1243 = vpop.trf.xlu0
        %v1244 = vpop.trf.xlu0
        %v1245 = vpop.trf.xlu0
        %v1246 = vpop.trf.xlu0
        %v1247 = vpop.trf.xlu0
        %v1248 = vpop.trf.xlu0
        %v1249 = vpop.trf.xlu0
        %v1250 = vpop.trf.xlu0
        %v1251 = vpop.trf.xlu0
        %v1252 = vpop.trf.xlu0
        %s1253 = scalar_lea.vmem [#allocation5], 64
        %1254 = vst.msk [vmem:[%s1253] sm:$0xff] %vm1105, %v1237
        %1255 = vst.msk [vmem:[%s1253 + $0x8] sm:$0xff] %vm1105, %v1238
        %s1256 = scalar_lea.vmem [#allocation4], 40
        %v1257 = vld [vmem:[%s1256] sm:$0xff]
        %1258 = vxpose.xlu0.b32.start [1/16] %v1257, 128
        %1259 = vxpose.xlu0.b32.cont [2/16] 0.0, 128
        %1260 = vxpose.xlu0.b32.cont [3/16] 0.0, 128
        %1261 = vxpose.xlu0.b32.cont [4/16] 0.0, 128
        %1262 = vxpose.xlu0.b32.cont [5/16] 0.0, 128
        %1263 = vxpose.xlu0.b32.cont [6/16] 0.0, 128
        %1264 = vxpose.xlu0.b32.cont [7/16] 0.0, 128
        %1265 = vxpose.xlu0.b32.cont [8/16] 0.0, 128
        %1266 = vxpose.xlu0.b32.cont [9/16] 0.0, 128
        %1267 = vxpose.xlu0.b32.cont [10/16] 0.0, 128
        %1268 = vxpose.xlu0.b32.cont [11/16] 0.0, 128
        %1269 = vxpose.xlu0.b32.cont [12/16] 0.0, 128
        %1270 = vxpose.xlu0.b32.cont [13/16] 0.0, 128
        %1271 = vxpose.xlu0.b32.cont [14/16] 0.0, 128
        %1272 = vxpose.xlu0.b32.cont [15/16] 0.0, 128
        %1273 = vxpose.xlu0.b32.end [16/16] 0.0, 128
        %v1274 = vpop.trf.xlu0
        %v1275 = vpop.trf.xlu0
        %v1276 = vpop.trf.xlu0
        %v1277 = vpop.trf.xlu0
        %v1278 = vpop.trf.xlu0
        %v1279 = vpop.trf.xlu0
        %v1280 = vpop.trf.xlu0
        %v1281 = vpop.trf.xlu0
        %v1282 = vpop.trf.xlu0
        %v1283 = vpop.trf.xlu0
        %v1284 = vpop.trf.xlu0
        %v1285 = vpop.trf.xlu0
        %v1286 = vpop.trf.xlu0
        %v1287 = vpop.trf.xlu0
        %v1288 = vpop.trf.xlu0
        %v1289 = vpop.trf.xlu0
        %s1290 = scalar_lea.vmem [#allocation5], 80
        %1291 = vst.msk [vmem:[%s1290] sm:$0xff] %vm1105, %v1274
        %1292 = vst.msk [vmem:[%s1290 + $0x8] sm:$0xff] %vm1105, %v1275
        %v1293 = vld [vmem:[#allocation6] sm:$0xff]
        %1294 = vxpose.xlu0.b32.start [1/16] %v1293, 128
        %1295 = vxpose.xlu0.b32.cont [2/16] 0.0, 128
        %1296 = vxpose.xlu0.b32.cont [3/16] 0.0, 128
        %1297 = vxpose.xlu0.b32.cont [4/16] 0.0, 128
        %1298 = vxpose.xlu0.b32.cont [5/16] 0.0, 128
        %1299 = vxpose.xlu0.b32.cont [6/16] 0.0, 128
        %1300 = vxpose.xlu0.b32.cont [7/16] 0.0, 128
        %1301 = vxpose.xlu0.b32.cont [8/16] 0.0, 128
        %1302 = vxpose.xlu0.b32.cont [9/16] 0.0, 128
        %1303 = vxpose.xlu0.b32.cont [10/16] 0.0, 128
        %1304 = vxpose.xlu0.b32.cont [11/16] 0.0, 128
        %1305 = vxpose.xlu0.b32.cont [12/16] 0.0, 128
        %1306 = vxpose.xlu0.b32.cont [13/16] 0.0, 128
        %1307 = vxpose.xlu0.b32.cont [14/16] 0.0, 128
        %1308 = vxpose.xlu0.b32.cont [15/16] 0.0, 128
        %1309 = vxpose.xlu0.b32.end [16/16] 0.0, 128
        %v1310 = vpop.trf.xlu0
        %v1311 = vpop.trf.xlu0
        %v1312 = vpop.trf.xlu0
        %v1313 = vpop.trf.xlu0
        %v1314 = vpop.trf.xlu0
        %v1315 = vpop.trf.xlu0
        %v1316 = vpop.trf.xlu0
        %v1317 = vpop.trf.xlu0
        %v1318 = vpop.trf.xlu0
        %v1319 = vpop.trf.xlu0
        %v1320 = vpop.trf.xlu0
        %v1321 = vpop.trf.xlu0
        %v1322 = vpop.trf.xlu0
        %v1323 = vpop.trf.xlu0
        %v1324 = vpop.trf.xlu0
        %v1325 = vpop.trf.xlu0
        %1326 = vst.msk [vmem:[#allocation7] sm:$0xff] %vm1105, %v1310
        %1327 = vst.msk [vmem:[#allocation7 + $0x8] sm:$0xff] %vm1105, %v1311
        %s1328 = scalar_lea.vmem [#allocation6], 8
        %v1329 = vld [vmem:[%s1328] sm:$0xff]
        %1330 = vxpose.xlu0.b32.start [1/16] %v1329, 128
        %1331 = vxpose.xlu0.b32.cont [2/16] 0.0, 128
        %1332 = vxpose.xlu0.b32.cont [3/16] 0.0, 128
        %1333 = vxpose.xlu0.b32.cont [4/16] 0.0, 128
        %1334 = vxpose.xlu0.b32.cont [5/16] 0.0, 128
        %1335 = vxpose.xlu0.b32.cont [6/16] 0.0, 128
        %1336 = vxpose.xlu0.b32.cont [7/16] 0.0, 128
        %1337 = vxpose.xlu0.b32.cont [8/16] 0.0, 128
        %1338 = vxpose.xlu0.b32.cont [9/16] 0.0, 128
        %1339 = vxpose.xlu0.b32.cont [10/16] 0.0, 128
        %1340 = vxpose.xlu0.b32.cont [11/16] 0.0, 128
        %1341 = vxpose.xlu0.b32.cont [12/16] 0.0, 128
        %1342 = vxpose.xlu0.b32.cont [13/16] 0.0, 128
        %1343 = vxpose.xlu0.b32.cont [14/16] 0.0, 128
        %1344 = vxpose.xlu0.b32.cont [15/16] 0.0, 128
        %1345 = vxpose.xlu0.b32.end [16/16] 0.0, 128
        %v1346 = vpop.trf.xlu0
        %v1347 = vpop.trf.xlu0
        %v1348 = vpop.trf.xlu0
        %v1349 = vpop.trf.xlu0
        %v1350 = vpop.trf.xlu0
        %v1351 = vpop.trf.xlu0
        %v1352 = vpop.trf.xlu0
        %v1353 = vpop.trf.xlu0
        %v1354 = vpop.trf.xlu0
        %v1355 = vpop.trf.xlu0
        %v1356 = vpop.trf.xlu0
        %v1357 = vpop.trf.xlu0
        %v1358 = vpop.trf.xlu0
        %v1359 = vpop.trf.xlu0
        %v1360 = vpop.trf.xlu0
        %v1361 = vpop.trf.xlu0
        %s1362 = scalar_lea.vmem [#allocation7], 16
        %1363 = vst.msk [vmem:[%s1362] sm:$0xff] %vm1105, %v1346
        %1364 = vst.msk [vmem:[%s1362 + $0x8] sm:$0xff] %vm1105, %v1347
        %s1365 = scalar_lea.vmem [#allocation6], 16
        %v1366 = vld [vmem:[%s1365] sm:$0xff]
        %1367 = vxpose.xlu0.b32.start [1/16] %v1366, 128
        %1368 = vxpose.xlu0.b32.cont [2/16] 0.0, 128
        %1369 = vxpose.xlu0.b32.cont [3/16] 0.0, 128
        %1370 = vxpose.xlu0.b32.cont [4/16] 0.0, 128
        %1371 = vxpose.xlu0.b32.cont [5/16] 0.0, 128
        %1372 = vxpose.xlu0.b32.cont [6/16] 0.0, 128
        %1373 = vxpose.xlu0.b32.cont [7/16] 0.0, 128
        %1374 = vxpose.xlu0.b32.cont [8/16] 0.0, 128
        %1375 = vxpose.xlu0.b32.cont [9/16] 0.0, 128
        %1376 = vxpose.xlu0.b32.cont [10/16] 0.0, 128
        %1377 = vxpose.xlu0.b32.cont [11/16] 0.0, 128
        %1378 = vxpose.xlu0.b32.cont [12/16] 0.0, 128
        %1379 = vxpose.xlu0.b32.cont [13/16] 0.0, 128
        %1380 = vxpose.xlu0.b32.cont [14/16] 0.0, 128
        %1381 = vxpose.xlu0.b32.cont [15/16] 0.0, 128
        %1382 = vxpose.xlu0.b32.end [16/16] 0.0, 128
        %v1383 = vpop.trf.xlu0
        %v1384 = vpop.trf.xlu0
        %v1385 = vpop.trf.xlu0
        %v1386 = vpop.trf.xlu0
        %v1387 = vpop.trf.xlu0
        %v1388 = vpop.trf.xlu0
        %v1389 = vpop.trf.xlu0
        %v1390 = vpop.trf.xlu0
        %v1391 = vpop.trf.xlu0
        %v1392 = vpop.trf.xlu0
        %v1393 = vpop.trf.xlu0
        %v1394 = vpop.trf.xlu0
        %v1395 = vpop.trf.xlu0
        %v1396 = vpop.trf.xlu0
        %v1397 = vpop.trf.xlu0
        %v1398 = vpop.trf.xlu0
        %s1399 = scalar_lea.vmem [#allocation7], 32
        %1400 = vst.msk [vmem:[%s1399] sm:$0xff] %vm1105, %v1383
        %1401 = vst.msk [vmem:[%s1399 + $0x8] sm:$0xff] %vm1105, %v1384
        %s1402 = scalar_lea.vmem [#allocation6], 24
        %v1403 = vld [vmem:[%s1402] sm:$0xff]
        %1404 = vxpose.xlu0.b32.start [1/16] %v1403, 128
        %1405 = vxpose.xlu0.b32.cont [2/16] 0.0, 128
        %1406 = vxpose.xlu0.b32.cont [3/16] 0.0, 128
        %1407 = vxpose.xlu0.b32.cont [4/16] 0.0, 128
        %1408 = vxpose.xlu0.b32.cont [5/16] 0.0, 128
        %1409 = vxpose.xlu0.b32.cont [6/16] 0.0, 128
        %1410 = vxpose.xlu0.b32.cont [7/16] 0.0, 128
        %1411 = vxpose.xlu0.b32.cont [8/16] 0.0, 128
        %1412 = vxpose.xlu0.b32.cont [9/16] 0.0, 128
        %1413 = vxpose.xlu0.b32.cont [10/16] 0.0, 128
        %1414 = vxpose.xlu0.b32.cont [11/16] 0.0, 128
        %1415 = vxpose.xlu0.b32.cont [12/16] 0.0, 128
        %1416 = vxpose.xlu0.b32.cont [13/16] 0.0, 128
        %1417 = vxpose.xlu0.b32.cont [14/16] 0.0, 128
        %1418 = vxpose.xlu0.b32.cont [15/16] 0.0, 128
        %1419 = vxpose.xlu0.b32.end [16/16] 0.0, 128
        %v1420 = vpop.trf.xlu0
        %v1421 = vpop.trf.xlu0
        %v1422 = vpop.trf.xlu0
        %v1423 = vpop.trf.xlu0
        %v1424 = vpop.trf.xlu0
        %v1425 = vpop.trf.xlu0
        %v1426 = vpop.trf.xlu0
        %v1427 = vpop.trf.xlu0
        %v1428 = vpop.trf.xlu0
        %v1429 = vpop.trf.xlu0
        %v1430 = vpop.trf.xlu0
        %v1431 = vpop.trf.xlu0
        %v1432 = vpop.trf.xlu0
        %v1433 = vpop.trf.xlu0
        %v1434 = vpop.trf.xlu0
        %v1435 = vpop.trf.xlu0
        %s1436 = scalar_lea.vmem [#allocation7], 48
        %1437 = vst.msk [vmem:[%s1436] sm:$0xff] %vm1105, %v1420
        %1438 = vst.msk [vmem:[%s1436 + $0x8] sm:$0xff] %vm1105, %v1421
        %s1439 = sld [smem:[#allocation2]]
        %s1440 = scalar_lea.vmem [#allocation5], %s1439
        %v1441 = vld [vmem:[%s1440] sm:$0x1]
        %v1442 = vld [vmem:[%s1440 + $0x10] sm:$0x1]
        %v1443 = vld [vmem:[%s1440 + $0x20] sm:$0x1]
        %v1444 = vld [vmem:[%s1440 + $0x30] sm:$0x1]
        %v1445 = vld [vmem:[%s1440 + $0x40] sm:$0x1]
        %v1446 = vld [vmem:[%s1440 + $0x50] sm:$0x1]
        %1447 = vst.msk [vmem:[%s455] sm:$0x1] %vm822, %v1441
        %1448 = vst.msk [vmem:[%s455 + $0x8] sm:$0x1] %vm822, %v1442
        %1449 = vst.msk [vmem:[%s455 + $0x10] sm:$0x1] %vm822, %v1443
        %1450 = vst.msk [vmem:[%s455 + $0x18] sm:$0x1] %vm822, %v1444
        %1451 = vst.msk [vmem:[%s455 + $0x20] sm:$0x1] %vm822, %v1445
        %1452 = vst.msk [vmem:[%s455 + $0x28] sm:$0x1] %vm822, %v1446
        %s1453 = scalar_lea.vmem [#allocation7], %s1439
        %v1454 = vld [vmem:[%s1453] sm:$0x1]
        %v1455 = vld [vmem:[%s1453 + $0x10] sm:$0x1]
        %v1456 = vld [vmem:[%s1453 + $0x20] sm:$0x1]
        %v1457 = vld [vmem:[%s1453 + $0x30] sm:$0x1]
        %1458 = vst.msk [vmem:[%s481] sm:$0x1] %vm822, %v1454
        %1459 = vst.msk [vmem:[%s481 + $0x8] sm:$0x1] %vm822, %v1455
        %1460 = vst.msk [vmem:[%s481 + $0x10] sm:$0x1] %vm822, %v1456
        %1461 = vst.msk [vmem:[%s481 + $0x18] sm:$0x1] %vm822, %v1457
        %s1462 = sld [smem:[#allocation2 + $0x1]]
        %s1463 = scalar_lea.vmem [#allocation5], %s1462
        %v1464 = vld [vmem:[%s1463] sm:$0x1]
        %v1465 = vld [vmem:[%s1463 + $0x10] sm:$0x1]
        %v1466 = vld [vmem:[%s1463 + $0x20] sm:$0x1]
        %v1467 = vld [vmem:[%s1463 + $0x30] sm:$0x1]
        %v1468 = vld [vmem:[%s1463 + $0x40] sm:$0x1]
        %v1469 = vld [vmem:[%s1463 + $0x50] sm:$0x1]
        %1470 = vst.msk [vmem:[%s455 + $0x1] sm:$0x1] %vm822, %v1464
        %1471 = vst.msk [vmem:[%s455 + $0x9] sm:$0x1] %vm822, %v1465
        %1472 = vst.msk [vmem:[%s455 + $0x11] sm:$0x1] %vm822, %v1466
        %1473 = vst.msk [vmem:[%s455 + $0x19] sm:$0x1] %vm822, %v1467
        %1474 = vst.msk [vmem:[%s455 + $0x21] sm:$0x1] %vm822, %v1468
        %1475 = vst.msk [vmem:[%s455 + $0x29] sm:$0x1] %vm822, %v1469
        %s1476 = scalar_lea.vmem [#allocation7], %s1462
        %v1477 = vld [vmem:[%s1476] sm:$0x1]
        %v1478 = vld [vmem:[%s1476 + $0x10] sm:$0x1]
        %v1479 = vld [vmem:[%s1476 + $0x20] sm:$0x1]
        %v1480 = vld [vmem:[%s1476 + $0x30] sm:$0x1]
        %1481 = vst.msk [vmem:[%s481 + $0x1] sm:$0x1] %vm822, %v1477
        %1482 = vst.msk [vmem:[%s481 + $0x9] sm:$0x1] %vm822, %v1478
        %1483 = vst.msk [vmem:[%s481 + $0x11] sm:$0x1] %vm822, %v1479
        %1484 = vst.msk [vmem:[%s481 + $0x19] sm:$0x1] %vm822, %v1480
        %s1485 = sld [smem:[#allocation2 + $0x2]]
        %s1486 = scalar_lea.vmem [#allocation5], %s1485
        %v1487 = vld [vmem:[%s1486] sm:$0x1]
        %v1488 = vld [vmem:[%s1486 + $0x10] sm:$0x1]
        %v1489 = vld [vmem:[%s1486 + $0x20] sm:$0x1]
        %v1490 = vld [vmem:[%s1486 + $0x30] sm:$0x1]
        %v1491 = vld [vmem:[%s1486 + $0x40] sm:$0x1]
        %v1492 = vld [vmem:[%s1486 + $0x50] sm:$0x1]
        %1493 = vst.msk [vmem:[%s455 + $0x2] sm:$0x1] %vm822, %v1487
        %1494 = vst.msk [vmem:[%s455 + $0xa] sm:$0x1] %vm822, %v1488
        %1495 = vst.msk [vmem:[%s455 + $0x12] sm:$0x1] %vm822, %v1489
        %1496 = vst.msk [vmem:[%s455 + $0x1a] sm:$0x1] %vm822, %v1490
        %1497 = vst.msk [vmem:[%s455 + $0x22] sm:$0x1] %vm822, %v1491
        %1498 = vst.msk [vmem:[%s455 + $0x2a] sm:$0x1] %vm822, %v1492
        %s1499 = scalar_lea.vmem [#allocation7], %s1485
        %v1500 = vld [vmem:[%s1499] sm:$0x1]
        %v1501 = vld [vmem:[%s1499 + $0x10] sm:$0x1]
        %v1502 = vld [vmem:[%s1499 + $0x20] sm:$0x1]
        %v1503 = vld [vmem:[%s1499 + $0x30] sm:$0x1]
        %1504 = vst.msk [vmem:[%s481 + $0x2] sm:$0x1] %vm822, %v1500
        %1505 = vst.msk [vmem:[%s481 + $0xa] sm:$0x1] %vm822, %v1501
        %1506 = vst.msk [vmem:[%s481 + $0x12] sm:$0x1] %vm822, %v1502
        %1507 = vst.msk [vmem:[%s481 + $0x1a] sm:$0x1] %vm822, %v1503
        %s1508 = sld [smem:[#allocation2 + $0x3]]
        %s1509 = scalar_lea.vmem [#allocation5], %s1508
        %v1510 = vld [vmem:[%s1509] sm:$0x1]
        %v1511 = vld [vmem:[%s1509 + $0x10] sm:$0x1]
        %v1512 = vld [vmem:[%s1509 + $0x20] sm:$0x1]
        %v1513 = vld [vmem:[%s1509 + $0x30] sm:$0x1]
        %v1514 = vld [vmem:[%s1509 + $0x40] sm:$0x1]
        %v1515 = vld [vmem:[%s1509 + $0x50] sm:$0x1]
        %1516 = vst.msk [vmem:[%s455 + $0x3] sm:$0x1] %vm822, %v1510
        %1517 = vst.msk [vmem:[%s455 + $0xb] sm:$0x1] %vm822, %v1511
        %1518 = vst.msk [vmem:[%s455 + $0x13] sm:$0x1] %vm822, %v1512
        %1519 = vst.msk [vmem:[%s455 + $0x1b] sm:$0x1] %vm822, %v1513
        %1520 = vst.msk [vmem:[%s455 + $0x23] sm:$0x1] %vm822, %v1514
        %1521 = vst.msk [vmem:[%s455 + $0x2b] sm:$0x1] %vm822, %v1515
        %s1522 = scalar_lea.vmem [#allocation7], %s1508
        %v1523 = vld [vmem:[%s1522] sm:$0x1]
        %v1524 = vld [vmem:[%s1522 + $0x10] sm:$0x1]
        %v1525 = vld [vmem:[%s1522 + $0x20] sm:$0x1]
        %v1526 = vld [vmem:[%s1522 + $0x30] sm:$0x1]
        %1527 = vst.msk [vmem:[%s481 + $0x3] sm:$0x1] %vm822, %v1523
        %1528 = vst.msk [vmem:[%s481 + $0xb] sm:$0x1] %vm822, %v1524
        %1529 = vst.msk [vmem:[%s481 + $0x13] sm:$0x1] %vm822, %v1525
        %1530 = vst.msk [vmem:[%s481 + $0x1b] sm:$0x1] %vm822, %v1526
        %s1531 = sld [smem:[#allocation2 + $0x4]]
        %s1532 = scalar_lea.vmem [#allocation5], %s1531
        %v1533 = vld [vmem:[%s1532] sm:$0x1]
        %v1534 = vld [vmem:[%s1532 + $0x10] sm:$0x1]
        %v1535 = vld [vmem:[%s1532 + $0x20] sm:$0x1]
        %v1536 = vld [vmem:[%s1532 + $0x30] sm:$0x1]
        %v1537 = vld [vmem:[%s1532 + $0x40] sm:$0x1]
        %v1538 = vld [vmem:[%s1532 + $0x50] sm:$0x1]
        %1539 = vst.msk [vmem:[%s455 + $0x4] sm:$0x1] %vm822, %v1533
        %1540 = vst.msk [vmem:[%s455 + $0xc] sm:$0x1] %vm822, %v1534
        %1541 = vst.msk [vmem:[%s455 + $0x14] sm:$0x1] %vm822, %v1535
        %1542 = vst.msk [vmem:[%s455 + $0x1c] sm:$0x1] %vm822, %v1536
        %1543 = vst.msk [vmem:[%s455 + $0x24] sm:$0x1] %vm822, %v1537
        %1544 = vst.msk [vmem:[%s455 + $0x2c] sm:$0x1] %vm822, %v1538
        %s1545 = scalar_lea.vmem [#allocation7], %s1531
        %v1546 = vld [vmem:[%s1545] sm:$0x1]
        %v1547 = vld [vmem:[%s1545 + $0x10] sm:$0x1]
        %v1548 = vld [vmem:[%s1545 + $0x20] sm:$0x1]
        %v1549 = vld [vmem:[%s1545 + $0x30] sm:$0x1]
        %1550 = vst.msk [vmem:[%s481 + $0x4] sm:$0x1] %vm822, %v1546
        %1551 = vst.msk [vmem:[%s481 + $0xc] sm:$0x1] %vm822, %v1547
        %1552 = vst.msk [vmem:[%s481 + $0x14] sm:$0x1] %vm822, %v1548
        %1553 = vst.msk [vmem:[%s481 + $0x1c] sm:$0x1] %vm822, %v1549
        %s1554 = sld [smem:[#allocation2 + $0x5]]
        %s1555 = scalar_lea.vmem [#allocation5], %s1554
        %v1556 = vld [vmem:[%s1555] sm:$0x1]
        %v1557 = vld [vmem:[%s1555 + $0x10] sm:$0x1]
        %v1558 = vld [vmem:[%s1555 + $0x20] sm:$0x1]
        %v1559 = vld [vmem:[%s1555 + $0x30] sm:$0x1]
        %v1560 = vld [vmem:[%s1555 + $0x40] sm:$0x1]
        %v1561 = vld [vmem:[%s1555 + $0x50] sm:$0x1]
        %1562 = vst.msk [vmem:[%s455 + $0x5] sm:$0x1] %vm822, %v1556
        %1563 = vst.msk [vmem:[%s455 + $0xd] sm:$0x1] %vm822, %v1557
        %1564 = vst.msk [vmem:[%s455 + $0x15] sm:$0x1] %vm822, %v1558
        %1565 = vst.msk [vmem:[%s455 + $0x1d] sm:$0x1] %vm822, %v1559
        %1566 = vst.msk [vmem:[%s455 + $0x25] sm:$0x1] %vm822, %v1560
        %1567 = vst.msk [vmem:[%s455 + $0x2d] sm:$0x1] %vm822, %v1561
        %s1568 = scalar_lea.vmem [#allocation7], %s1554
        %v1569 = vld [vmem:[%s1568] sm:$0x1]
        %v1570 = vld [vmem:[%s1568 + $0x10] sm:$0x1]
        %v1571 = vld [vmem:[%s1568 + $0x20] sm:$0x1]
        %v1572 = vld [vmem:[%s1568 + $0x30] sm:$0x1]
        %1573 = vst.msk [vmem:[%s481 + $0x5] sm:$0x1] %vm822, %v1569
        %1574 = vst.msk [vmem:[%s481 + $0xd] sm:$0x1] %vm822, %v1570
        %1575 = vst.msk [vmem:[%s481 + $0x15] sm:$0x1] %vm822, %v1571
        %1576 = vst.msk [vmem:[%s481 + $0x1d] sm:$0x1] %vm822, %v1572
        %s1577 = sld [smem:[#allocation2 + $0x6]]
        %s1578 = scalar_lea.vmem [#allocation5], %s1577
        %v1579 = vld [vmem:[%s1578] sm:$0x1]
        %v1580 = vld [vmem:[%s1578 + $0x10] sm:$0x1]
        %v1581 = vld [vmem:[%s1578 + $0x20] sm:$0x1]
        %v1582 = vld [vmem:[%s1578 + $0x30] sm:$0x1]
        %v1583 = vld [vmem:[%s1578 + $0x40] sm:$0x1]
        %v1584 = vld [vmem:[%s1578 + $0x50] sm:$0x1]
        %1585 = vst.msk [vmem:[%s455 + $0x6] sm:$0x1] %vm822, %v1579
        %1586 = vst.msk [vmem:[%s455 + $0xe] sm:$0x1] %vm822, %v1580
        %1587 = vst.msk [vmem:[%s455 + $0x16] sm:$0x1] %vm822, %v1581
        %1588 = vst.msk [vmem:[%s455 + $0x1e] sm:$0x1] %vm822, %v1582
        %1589 = vst.msk [vmem:[%s455 + $0x26] sm:$0x1] %vm822, %v1583
        %1590 = vst.msk [vmem:[%s455 + $0x2e] sm:$0x1] %vm822, %v1584
        %s1591 = scalar_lea.vmem [#allocation7], %s1577
        %v1592 = vld [vmem:[%s1591] sm:$0x1]
        %v1593 = vld [vmem:[%s1591 + $0x10] sm:$0x1]
        %v1594 = vld [vmem:[%s1591 + $0x20] sm:$0x1]
        %v1595 = vld [vmem:[%s1591 + $0x30] sm:$0x1]
        %1596 = vst.msk [vmem:[%s481 + $0x6] sm:$0x1] %vm822, %v1592
        %1597 = vst.msk [vmem:[%s481 + $0xe] sm:$0x1] %vm822, %v1593
        %1598 = vst.msk [vmem:[%s481 + $0x16] sm:$0x1] %vm822, %v1594
        %1599 = vst.msk [vmem:[%s481 + $0x1e] sm:$0x1] %vm822, %v1595
        %s1600 = sld [smem:[#allocation2 + $0x7]]
        %s1601 = scalar_lea.vmem [#allocation5], %s1600
        %v1602 = vld [vmem:[%s1601] sm:$0x1]
        %v1603 = vld [vmem:[%s1601 + $0x10] sm:$0x1]
        %v1604 = vld [vmem:[%s1601 + $0x20] sm:$0x1]
        %v1605 = vld [vmem:[%s1601 + $0x30] sm:$0x1]
        %v1606 = vld [vmem:[%s1601 + $0x40] sm:$0x1]
        %v1607 = vld [vmem:[%s1601 + $0x50] sm:$0x1]
        %1608 = vst.msk [vmem:[%s455 + $0x7] sm:$0x1] %vm822, %v1602
        %1609 = vst.msk [vmem:[%s455 + $0xf] sm:$0x1] %vm822, %v1603
        %1610 = vst.msk [vmem:[%s455 + $0x17] sm:$0x1] %vm822, %v1604
        %1611 = vst.msk [vmem:[%s455 + $0x1f] sm:$0x1] %vm822, %v1605
        %1612 = vst.msk [vmem:[%s455 + $0x27] sm:$0x1] %vm822, %v1606
        %1613 = vst.msk [vmem:[%s455 + $0x2f] sm:$0x1] %vm822, %v1607
        %s1614 = scalar_lea.vmem [#allocation7], %s1600
        %v1615 = vld [vmem:[%s1614] sm:$0x1]
        %v1616 = vld [vmem:[%s1614 + $0x10] sm:$0x1]
        %v1617 = vld [vmem:[%s1614 + $0x20] sm:$0x1]
        %v1618 = vld [vmem:[%s1614 + $0x30] sm:$0x1]
        %1619 = vst.msk [vmem:[%s481 + $0x7] sm:$0x1] %vm822, %v1615
        %1620 = vst.msk [vmem:[%s481 + $0xf] sm:$0x1] %vm822, %v1616
        %1621 = vst.msk [vmem:[%s481 + $0x17] sm:$0x1] %vm822, %v1617
        %1622 = vst.msk [vmem:[%s481 + $0x1f] sm:$0x1] %vm822, %v1618
        %s1623 = sand.u32 %s158, 1
        %s1624 = scalar_lea.sflag [#allocation13], %s1623
        %s1625 = sand.u32 %s158, 1
        %s1626 = smul.addr %s1625, 48
        %s1627 = scalar_lea.vmem [#allocation19], %s1626
        %s1628 = sand.u32 %s46, 1
        %s1629 = scalar_lea.sflag [#allocation21], %s1628
        %s1630 = sand.u32 %s184, 1
        %s1631 = smul.addr %s1630, 8
        %s1632 = scalar_lea.vmem [#allocation20], %s1631
        %s1633 = sand.u32 %s46, 1
        %s1634 = scalar_lea.sflag [#allocation21], %s1633
        %s1635 = sand.u32 %s210, 1
        %s1636 = scalar_lea.vmem [#allocation22], %s1635
        %s1637 = sand.u32 %s46, 1
        %s1638 = scalar_lea.sflag [#allocation24], %s1637
        %s1639 = sand.u32 %s236, 1
        %s1640 = scalar_lea.vmem [#allocation23], %s1639
        %s1641 = sand.u32 %s46, 1
        %s1642 = scalar_lea.sflag [#allocation24], %s1641
        %s1643 = sand.u32 %s262, 1
        %s1644 = smul.addr %s1643, 32
        %s1645 = scalar_lea.vmem [#allocation25], %s1644
        // Predicated region
        $region53: #{tpu_custom_call.1} parent=35 // pred_check
          %p1646 = pneg %p168
        $region54: #{tpu_custom_call.1} parent=35 // pred_check_branch
          %1648 = sbr.rel (%p1646) target = $region56
        $region55: #{tpu_custom_call.1} parent=35 // pred_region
          %s1650 = ssub.s32 768, 768
          %1651 = vsyncadd %s1624, %s1650
          %s1652 = smul.addr %s46, 6
          %s1653 = smul.addr %s1652, 128
          %s1654 = scalar_lea.hbm %s6, %s1653
          %s1655 = sshll.u32 %s1627, 4
          %s1656 = int_to_ptr.vmem [resolvable:$true] %s1655
          %1661 = dma.vmem_to_hbm [thread:$0]  %s1656, 768, %s1654, %s1624, 128, 128, 8
        $region56: #{tpu_custom_call.1} parent=35 // pred_fallthru
          _
        // Predicated region
        $region57: #{tpu_custom_call.1} parent=35 // pred_check
          %p1662 = pneg %p194
        $region58: #{tpu_custom_call.1} parent=35 // pred_check_branch
          %1664 = sbr.rel (%p1662) target = $region60
        $region59: #{tpu_custom_call.1} parent=35 // pred_region
          %s1666 = ssub.s32 128, 128
          %1667 = vsyncadd %s1629, %s1666
          %s1668 = smul.addr %s46, 128
          %s1669 = scalar_lea.hbm %s7, %s1668
          %s1671 = sshll.u32 %s1632, 4
          %s1672 = int_to_ptr.vmem [resolvable:$true] %s1671
          %1674 = dma.vmem_to_hbm [thread:$0]  %s1672, 128, %s1669, %s1629
        $region60: #{tpu_custom_call.1} parent=35 // pred_fallthru
          _
        // Predicated region
        $region61: #{tpu_custom_call.1} parent=35 // pred_check
          %p1675 = pneg %p220
        $region62: #{tpu_custom_call.1} parent=35 // pred_check_branch
          %1677 = sbr.rel (%p1675) target = $region64
        $region63: #{tpu_custom_call.1} parent=35 // pred_region
          %s1679 = ssub.s32 16, 16
          %1680 = vsyncadd %s1634, %s1679
          %s1681 = smul.addr %s46, 16
          %s1682 = scalar_lea.hbm %s8, %s1681
          %s1684 = sshll.u32 %s1636, 4
          %s1685 = int_to_ptr.vmem [resolvable:$true] %s1684
          %1687 = dma.vmem_to_hbm [thread:$0]  %s1685, 16, %s1682, %s1634
        $region64: #{tpu_custom_call.1} parent=35 // pred_fallthru
          _
        // Predicated region
        $region65: #{tpu_custom_call.1} parent=35 // pred_check
          %p1688 = pneg %p246
        $region66: #{tpu_custom_call.1} parent=35 // pred_check_branch
          %1690 = sbr.rel (%p1688) target = $region68
        $region67: #{tpu_custom_call.1} parent=35 // pred_region
          %s1692 = ssub.s32 16, 16
          %1693 = vsyncadd %s1638, %s1692
          %s1694 = smul.addr %s46, 16
          %s1695 = scalar_lea.hbm %s9, %s1694
          %s1697 = sshll.u32 %s1640, 4
          %s1698 = int_to_ptr.vmem [resolvable:$true] %s1697
          %1700 = dma.vmem_to_hbm [thread:$0]  %s1698, 16, %s1695, %s1638
        $region68: #{tpu_custom_call.1} parent=35 // pred_fallthru
          _
        // Predicated region
        $region69: #{tpu_custom_call.1} parent=35 // pred_check
          %p1701 = pneg %p272
        $region70: #{tpu_custom_call.1} parent=35 // pred_check_branch
          %1703 = sbr.rel (%p1701) target = $region72
        $region71: #{tpu_custom_call.1} parent=35 // pred_region
          %s1705 = ssub.s32 512, 512
          %1706 = vsyncadd %s1642, %s1705
          %s1707 = smul.addr %s46, 4
          %s1708 = smul.addr %s1707, 128
          %s1709 = scalar_lea.hbm %s10, %s1708
          %s1710 = sshll.u32 %s1645, 4
          %s1711 = int_to_ptr.vmem [resolvable:$true] %s1710
          %1716 = dma.vmem_to_hbm [thread:$0]  %s1711, 512, %s1709, %s1642, 128, 128, 8
        $region72: #{tpu_custom_call.1} parent=35 // pred_fallthru
          _
      $region36: #{tpu_custom_call.1} parent=5 // pred_fallthru
        _
      %p1717 = scmp.le.s32.totalorder 2, %s41
      // Predicated region
      $region73: #{tpu_custom_call.1} parent=5 // pred_check
        %p1718 = pneg %p1717
      $region74: #{tpu_custom_call.1} parent=5 // pred_check_branch
        %1720 = sbr.rel (%p1718) target = $region76
      $region75: #{tpu_custom_call.1} parent=5 // pred_region
        %s1721 = ssub.s32 %s41, 2
        // Predicated region
        $region77: #{tpu_custom_call.1} parent=75 // pred_check
          %p1722 = pneg %p174
        $region78: #{tpu_custom_call.1} parent=75 // pred_check_branch
          %1724 = sbr.rel (%p1722) target = $region80
        $region79: #{tpu_custom_call.1} parent=75 // pred_region
          %s1725 = sand.u32 %s159, 1
          %s1726 = scalar_lea.sflag [#allocation13], %s1725
          %s1727 = sand.u32 %s159, 1
          %s1728 = smul.addr %s1727, 48
          %s1729 = scalar_lea.vmem [#allocation19], %s1728
          %1730 = dma.done %s1726, 768
        $region80: #{tpu_custom_call.1} parent=75 // pred_fallthru
          _
        // Predicated region
        $region81: #{tpu_custom_call.1} parent=75 // pred_check
          %p1731 = pneg %p200
        $region82: #{tpu_custom_call.1} parent=75 // pred_check_branch
          %1733 = sbr.rel (%p1731) target = $region84
        $region83: #{tpu_custom_call.1} parent=75 // pred_region
          %s1734 = sand.u32 %s47, 1
          %s1735 = scalar_lea.sflag [#allocation21], %s1734
          %s1736 = sand.u32 %s185, 1
          %s1737 = smul.addr %s1736, 8
          %s1738 = scalar_lea.vmem [#allocation20], %s1737
          %1739 = dma.done %s1735, 128
        $region84: #{tpu_custom_call.1} parent=75 // pred_fallthru
          _
        // Predicated region
        $region85: #{tpu_custom_call.1} parent=75 // pred_check
          %p1740 = pneg %p226
        $region86: #{tpu_custom_call.1} parent=75 // pred_check_branch
          %1742 = sbr.rel (%p1740) target = $region88
        $region87: #{tpu_custom_call.1} parent=75 // pred_region
          %s1743 = sand.u32 %s47, 1
          %s1744 = scalar_lea.sflag [#allocation21], %s1743
          %s1745 = sand.u32 %s211, 1
          %s1746 = scalar_lea.vmem [#allocation22], %s1745
          %1747 = dma.done %s1744, 16
        $region88: #{tpu_custom_call.1} parent=75 // pred_fallthru
          _
        // Predicated region
        $region89: #{tpu_custom_call.1} parent=75 // pred_check
          %p1748 = pneg %p252
        $region90: #{tpu_custom_call.1} parent=75 // pred_check_branch
          %1750 = sbr.rel (%p1748) target = $region92
        $region91: #{tpu_custom_call.1} parent=75 // pred_region
          %s1751 = sand.u32 %s47, 1
          %s1752 = scalar_lea.sflag [#allocation24], %s1751
          %s1753 = sand.u32 %s237, 1
          %s1754 = scalar_lea.vmem [#allocation23], %s1753
          %1755 = dma.done %s1752, 16
        $region92: #{tpu_custom_call.1} parent=75 // pred_fallthru
          _
        // Predicated region
        $region93: #{tpu_custom_call.1} parent=75 // pred_check
          %p1756 = pneg %p278
        $region94: #{tpu_custom_call.1} parent=75 // pred_check_branch
          %1758 = sbr.rel (%p1756) target = $region96
        $region95: #{tpu_custom_call.1} parent=75 // pred_region
          %s1759 = sand.u32 %s47, 1
          %s1760 = scalar_lea.sflag [#allocation24], %s1759
          %s1761 = sand.u32 %s263, 1
          %s1762 = smul.addr %s1761, 32
          %s1763 = scalar_lea.vmem [#allocation25], %s1762
          %1764 = dma.done %s1760, 512
        $region96: #{tpu_custom_call.1} parent=75 // pred_fallthru
          _
      $region76: #{tpu_custom_call.1} parent=5 // pred_fallthru
        _
    $region6: #{tpu_custom_call.1} parent=1 // loop_footer
      %s45 = sadd.s32 1, %s41
    $region7: #{tpu_custom_call.1} parent=1 // loop_footer_branch
      %40 = sbr.rel target = $region3
    $region8: #{tpu_custom_call.1} parent=1 // loop_exit
      _
    %1765 = vsyncpa [#allocation12], 1
    %s1766 = scalar_lea.sflag [#allocation12], 1
    %1767 = vsyncpa %s1766, 1
    %1768 = vsyncpa [#allocation15], 1
    %s1769 = scalar_lea.sflag [#allocation15], 1
    %1770 = vsyncpa %s1769, 1
    %1771 = vsyncpa [#allocation18], 1
    %s1772 = scalar_lea.sflag [#allocation18], 1
    %1773 = vsyncpa %s1772, 1
    %1774 = vsyncpa [#allocation13], 1
    %s1775 = scalar_lea.sflag [#allocation13], 1
    %1776 = vsyncpa %s1775, 1
    %1777 = vsyncpa [#allocation21], 1
    %s1778 = scalar_lea.sflag [#allocation21], 1
    %1779 = vsyncpa %s1778, 1
    %1780 = vsyncpa [#allocation24], 1
    %s1781 = scalar_lea.sflag [#allocation24], 1
    %1782 = vsyncpa %s1781, 1

</llo_original>
